<compile_context>
chip_gen: v6e
topology: v6e:2x2x1
jax: 0.10.0
libtpu: 0.0.40
codegen_flags: <defaults>
</compile_context>

<pallas_src>
import math
import jax
import jax.numpy as jnp
from jax.experimental import pallas as pl
from jax.experimental.pallas import tpu as pltpu

# ----- config (mirrors cfg in the PyTorch module) -----
B = 2             # batch
SEQ_LEN = 8       # cfg.seq_len
CONT = 4          # len(cfg.cont_cols)
HIDDEN = 32       # cfg.hidden_size
NHEADS = 4        # cfg.nheads
HEAD_DIM = HIDDEN // NHEADS
NLAYERS = 2       # cfg.nlayers
TARGET = 2        # cfg.target_size
MODEL_TYPE = "seq2seq"   # cfg.model_type

TOKENS = B * SEQ_LEN
OUT_PAD = 128            # lane-dense output slab width; sliced to TARGET in wrapper

EPS_TORCH_LN = 1e-5      # nn.LayerNorm default
EPS_BERT_LN = 1e-12      # BERT LayerNorm default
NEG_BIG = -1e9           # batch-isolation additive mask (exp underflows to exactly 0)

# slab index helpers (static Python ints)
N_VECS = 3 + 7 * NLAYERS + 6          # 23
N_SQ = 1 + 3 * NLAYERS + 2            # 9


def _layernorm(x, gamma, beta, eps):
    mu = jnp.mean(x, axis=-1, keepdims=True)
    var = jnp.mean((x - mu) * (x - mu), axis=-1, keepdims=True)
    return (x - mu) * jax.lax.rsqrt(var + eps) * gamma + beta


def _gelu(x):
    # TODO(synk): HF BERT "gelu" is erf-based; tanh approximation used here (erf has
    # no guaranteed Mosaic lowering) — tiny numerical drift vs the PyTorch reference.
    c = math.sqrt(2.0 / math.pi)
    return 0.5 * x * (1.0 + jnp.tanh(c * (x + 0.044715 * x * x * x)))


# ---------------- fused forward kernel ----------------

def fused_forward_kernel(x_ref, bias_ref, wqkv_ref, bqkv_ref, wsq_ref, vecs_ref,
                         rw3_ref, rb3_ref, o_ref):
    def vec(i):
        return vecs_ref[i:i + 1, :]                     # (1, HIDDEN) row of the bias/LN slab

    # ----- cont_emb: Linear(CONT, H) + LayerNorm -----
    cont_w = wsq_ref[0][:CONT, :]                       # (CONT, H) slice of zero-padded plane
    h = jnp.dot(x_ref[...], cont_w, preferred_element_type=jnp.float32) + vec(0)
    h = _layernorm(h, vec(1), vec(2), EPS_TORCH_LN)     # (TOKENS, H)

    # Combined additive attention bias (key mask + batch isolation), hoisted once.
    bias = bias_ref[...]                                # (TOKENS, TOKENS)
    scale = 1.0 / math.sqrt(HEAD_DIM)
    dn = (((1,), (1,)), ((), ()))                       # contract dim 1 of both: q @ k^T, no .T

    # ----- NLAYERS BERT layers, statically unrolled, all weights VMEM-resident -----
    for l in range(NLAYERS):
        # fused QKV projection (head-contiguous columns [Q0|K0|V0|Q1|K1|V1|...])
        qkv = jnp.dot(h, wqkv_ref[l], preferred_element_type=jnp.float32) \
            + bqkv_ref[l:l + 1, :]                      # (T, 3H)

        wo = wsq_ref[1 + 3 * l]                         # (H, H)
        vb = 3 + 7 * l                                  # vecs base: [bo, g1, b1, bi, b2, g2, be2]

        # per-head attention; both batch elements share one (T, T) score matrix via
        # the batch-isolation bias; per-head output is projected through its W_o row
        # block and accumulated in registers (no scratch, no concat).
        attn = jnp.zeros((TOKENS, HIDDEN), jnp.float32)
        for hd in range(NHEADS):
            c0 = hd * 3 * HEAD_DIM                      # contiguous 24-lane block per head
            qh = qkv[:, c0:c0 + HEAD_DIM]               # (T, D)
            kh = qkv[:, c0 + HEAD_DIM:c0 + 2 * HEAD_DIM]
            vh = qkv[:, c0 + 2 * HEAD_DIM:c0 + 3 * HEAD_DIM]
            s = jax.lax.dot_general(qh, kh, dn,
                                    preferred_element_type=jnp.float32) * scale + bias
            # no max-subtraction: LayerNorm'd inputs * 1/sqrt(D) and non-positive mask
            # terms => exp cannot overflow; masked entries underflow to exactly 0.
            p = jnp.exp(s)
            p = p * pl.reciprocal(jnp.sum(p, axis=-1, keepdims=True), approx=True)
            ctx_h = jnp.dot(p, vh, preferred_element_type=jnp.float32)          # (T, D)
            attn = attn + jnp.dot(ctx_h, wo[hd * HEAD_DIM:(hd + 1) * HEAD_DIM, :],
                                  preferred_element_type=jnp.float32)

        attn_out = attn + vec(vb)                                                # + b_o
        h1 = _layernorm(attn_out + h, vec(vb + 1), vec(vb + 2), EPS_BERT_LN)

        inter = _gelu(jnp.dot(h1, wsq_ref[2 + 3 * l],
                              preferred_element_type=jnp.float32) + vec(vb + 3))
        ff = jnp.dot(inter, wsq_ref[3 + 3 * l],
                     preferred_element_type=jnp.float32) + vec(vb + 4)
        h = _layernorm(ff + h1, vec(vb + 5), vec(vb + 6), EPS_BERT_LN)

    # ----- regression head: Linear->LN->ReLU->Linear->LN->ReLU->Linear (padded) -----
    vr = 3 + 7 * NLAYERS
    r = jnp.dot(h, wsq_ref[1 + 3 * NLAYERS], preferred_element_type=jnp.float32) + vec(vr)
    r = _layernorm(r, vec(vr + 1), vec(vr + 2), EPS_TORCH_LN)
    r = jnp.maximum(r, 0.0)
    r = jnp.dot(r, wsq_ref[2 + 3 * NLAYERS], preferred_element_type=jnp.float32) + vec(vr + 3)
    r = _layernorm(r, vec(vr + 4), vec(vr + 5), EPS_TORCH_LN)
    r = jnp.maximum(r, 0.0)
    # final projection into a lane-dense (T, OUT_PAD) slab (zero-padded weights)
    o_ref[...] = jnp.dot(r, rw3_ref[...], preferred_element_type=jnp.float32) + rb3_ref[...]


# ---------------- wrapper ----------------

def _vmem_spec():
    return pl.BlockSpec(memory_space=pltpu.MemorySpace.VMEM)


def _attn_bias(mask):
    # (1 - mask) * -10000 key mask (exactly as the PyTorch module), plus a -1e9
    # batch-isolation block so both batch elements share one (TOKENS, TOKENS)
    # attention matrix without mixing (exp of the masked scores is exactly 0).
    tok = jnp.arange(TOKENS)
    b_id = tok // SEQ_LEN
    same_batch = b_id[:, None] == b_id[None, :]
    iso = jnp.where(same_batch, 0.0, NEG_BIG).astype(jnp.float32)
    key_add = ((1.0 - mask.astype(jnp.float32)) * -10000.0).reshape(TOKENS)
    return iso + key_add[None, :]


def pack_params(p):
    """One-time host-side packing: slab layout + head-contiguous QKV + padded head."""
    # head-contiguous fused QKV: columns [Q0|K0|V0 | Q1|K1|V1 | ...]
    def hc(w):   # (L, H, H) -> (L, H, NHEADS, D)
        return w.reshape(NLAYERS, HIDDEN, NHEADS, HEAD_DIM)

    def hcb(b):  # (L, 1, H) -> (L, NHEADS, D)
        return b.reshape(NLAYERS, NHEADS, HEAD_DIM)

    wqkv = jnp.concatenate([hc(p["wq"]), hc(p["wk"]), hc(p["wv"])], axis=-1)
    wqkv = wqkv.reshape(NLAYERS, HIDDEN, 3 * HIDDEN)
    bqkv = jnp.concatenate([hcb(p["bq"]), hcb(p["bk"]), hcb(p["bv"])], axis=-1)
    bqkv = bqkv.reshape(NLAYERS, 3 * HIDDEN)

    # square-matrix slab: [cont_w(pad), (wo, wi, w2) per layer, r_w1, r_w2]
    cont_w_pad = jnp.zeros((HIDDEN, HIDDEN), jnp.float32).at[:CONT, :].set(p["cont_w"])
    planes = [cont_w_pad]
    for l in range(NLAYERS):
        planes += [p["wo"][l], p["wi"][l], p["w2"][l]]
    planes += [p["r_w1"], p["r_w2"]]
    wsq = jnp.stack(planes, axis=0)                      # (N_SQ, H, H)

    # vector slab: every (1, H) bias / LN gamma / beta row
    rows = [p["cont_b"], p["cont_g"], p["cont_beta"]]
    for l in range(NLAYERS):
        rows += [p["bo"][l], p["g1"][l], p["beta1"][l],
                 p["bi"][l], p["b2"][l], p["g2"][l], p["beta2"][l]]
    rows += [p["r_b1"], p["r_g1"], p["r_beta1"], p["r_b2"], p["r_g2"], p["r_beta2"]]
    vecs = jnp.concatenate(rows, axis=0)                 # (N_VECS, H)

    # zero-padded final projection (done once, not per forward call)
    rw3 = jnp.zeros((HIDDEN, OUT_PAD), jnp.float32).at[:, :TARGET].set(p["r_w3"])
    rb3 = jnp.zeros((1, OUT_PAD), jnp.float32).at[:, :TARGET].set(p["r_b3"])

    return {"wqkv": wqkv, "bqkv": bqkv, "wsq": wsq, "vecs": vecs, "rw3": rw3, "rb3": rb3}


@jax.jit
def forward(packed, cont_x, mask):
    x2d = cont_x.reshape(TOKENS, CONT)
    bias = _attn_bias(mask)

    args = [x2d, bias, packed["wqkv"], packed["bqkv"], packed["wsq"],
            packed["vecs"], packed["rw3"], packed["rb3"]]

    out_pad = pl.pallas_call(
        fused_forward_kernel,
        out_shape=jax.ShapeDtypeStruct((TOKENS, OUT_PAD), jnp.float32),
        in_specs=[_vmem_spec() for _ in args],
        out_specs=_vmem_spec(),
    )(*args)

    y = out_pad[:, :TARGET]
    if MODEL_TYPE == "seq2seq":
        return y.reshape(B, SEQ_LEN, TARGET)
    else:
        # reg head on the middle token (same numbers as applying to all then slicing)
        return y.reshape(B, SEQ_LEN, TARGET)[:, SEQ_LEN // 2]


# ---------------- deterministic parameter init ----------------

def init_params(key):
    keys = jax.random.split(key, 64)
    it = iter(keys)

    def nk():
        return next(it)

    def linear(din, dout):
        w = 0.02 * jax.random.normal(nk(), (din, dout), jnp.float32)
        b = 0.02 * jax.random.normal(nk(), (1, dout), jnp.float32)
        return w, b

    def stacked_linear(din, dout):
        w = 0.02 * jax.random.normal(nk(), (NLAYERS, din, dout), jnp.float32)
        b = 0.02 * jax.random.normal(nk(), (NLAYERS, 1, dout), jnp.float32)
        return w, b

    def ln(shape=(1, HIDDEN)):
        return jnp.ones(shape, jnp.float32), jnp.zeros(shape, jnp.float32)

    p = {}
    p["cont_w"], p["cont_b"] = linear(CONT, HIDDEN)
    p["cont_g"], p["cont_beta"] = ln()

    p["wq"], p["bq"] = stacked_linear(HIDDEN, HIDDEN)
    p["wk"], p["bk"] = stacked_linear(HIDDEN, HIDDEN)
    p["wv"], p["bv"] = stacked_linear(HIDDEN, HIDDEN)
    p["wo"], p["bo"] = stacked_linear(HIDDEN, HIDDEN)
    p["g1"], p["beta1"] = ln((NLAYERS, 1, HIDDEN))
    p["wi"], p["bi"] = stacked_linear(HIDDEN, HIDDEN)   # intermediate_size == hidden_size
    p["w2"], p["b2"] = stacked_linear(HIDDEN, HIDDEN)
    p["g2"], p["beta2"] = ln((NLAYERS, 1, HIDDEN))

    p["r_w1"], p["r_b1"] = linear(HIDDEN, HIDDEN)
    p["r_g1"], p["r_beta1"] = ln()
    p["r_w2"], p["r_b2"] = linear(HIDDEN, HIDDEN)
    p["r_g2"], p["r_beta2"] = ln()
    p["r_w3"], p["r_b3"] = linear(HIDDEN, TARGET)
    return p


if __name__ == "__main__":
    key = jax.random.PRNGKey(0)
    pkey, xkey = jax.random.split(key)
    params = init_params(pkey)
    packed = pack_params(params)        # one-time packing / padding / head reorder

    cont_x = jax.random.normal(xkey, (B, SEQ_LEN, CONT), jnp.float32)
    mask = jnp.array([[1, 1, 1, 1, 1, 1, 1, 1],
                      [1, 1, 1, 1, 1, 1, 0, 0]], jnp.float32)

    out = forward(packed, cont_x, mask)
    jax.block_until_ready(out)
    assert out.shape == (B, SEQ_LEN, TARGET)
    print("KERNEL_OK")
</pallas_src>

<mosaic_0001>
module attributes {stable_mosaic.version = 11 : i64} {
  func.func @fused_forward_kernel(%arg0: memref<16x4xf32, #tpu.memory_space<vmem>>, %arg1: memref<16x16xf32, #tpu.memory_space<vmem>>, %arg2: memref<2x32x96xf32, #tpu.memory_space<vmem>>, %arg3: memref<2x96xf32, #tpu.memory_space<vmem>>, %arg4: memref<9x32x32xf32, #tpu.memory_space<vmem>>, %arg5: memref<23x32xf32, #tpu.memory_space<vmem>>, %arg6: memref<32x128xf32, #tpu.memory_space<vmem>>, %arg7: memref<1x128xf32, #tpu.memory_space<vmem>>, %arg8: memref<16x128xf32, #tpu.memory_space<vmem>>) attributes {dimension_semantics = [], scalar_prefetch = 0 : i64, scratch_operands = 0 : i64, tpu.core_type = #tpu.core_type<tc>} {
    %c0 = arith.constant 0 : index
    %c0_0 = arith.constant 0 : index
    %c0_1 = arith.constant 0 : index
    %0 = vector.load %arg4[%c0, %c0_0, %c0_1] : memref<9x32x32xf32, #tpu.memory_space<vmem>>, vector<1x32x32xf32>
    %1 = vector.shape_cast %0 : vector<1x32x32xf32> to vector<32x32xf32>
    %2 = vector.extract_strided_slice %1 {offsets = [0, 0], sizes = [4, 32], strides = [1, 1]} : vector<32x32xf32> to vector<4x32xf32>
    %c0_2 = arith.constant 0 : index
    %c0_3 = arith.constant 0 : index
    %3 = vector.load %arg0[%c0_2, %c0_3] : memref<16x4xf32, #tpu.memory_space<vmem>>, vector<16x4xf32>
    %cst = arith.constant dense<0.000000e+00> : vector<16x32xf32>
    %4 = tpu.matmul %3, %2, %cst {dimension_numbers = #tpu.dot_dimension_numbers<[1], [0], [0], [1], [0, 0, 1, 1], [], []>} : vector<16x4xf32>, vector<4x32xf32>, vector<16x32xf32> -> vector<16x32xf32>
    %c0_4 = arith.constant 0 : index
    %c0_5 = arith.constant 0 : index
    %5 = vector.load %arg5[%c0_4, %c0_5] : memref<23x32xf32, #tpu.memory_space<vmem>>, vector<1x32xf32>
    %6 = vector.broadcast %5 : vector<1x32xf32> to vector<16x32xf32>
    %7 = arith.addf %4, %6 : vector<16x32xf32>
    %c1 = arith.constant 1 : index
    %c0_6 = arith.constant 0 : index
    %8 = vector.load %arg5[%c1, %c0_6] : memref<23x32xf32, #tpu.memory_space<vmem>>, vector<1x32xf32>
    %c2 = arith.constant 2 : index
    %c0_7 = arith.constant 0 : index
    %9 = vector.load %arg5[%c2, %c0_7] : memref<23x32xf32, #tpu.memory_space<vmem>>, vector<1x32xf32>
    %cst_8 = arith.constant dense<0.000000e+00> : vector<16xf32>
    %10 = vector.multi_reduction <add>, %7, %cst_8 [1] : vector<16x32xf32> to vector<16xf32>
    %11 = vector.shape_cast %10 : vector<16xf32> to vector<16x1xf32>
    %cst_9 = arith.constant 3.200000e+01 : f32
    %12 = vector.broadcast %cst_9 : f32 to vector<16x1xf32>
    %13 = arith.divf %11, %12 : vector<16x1xf32>
    %14 = vector.broadcast %13 : vector<16x1xf32> to vector<16x32xf32>
    %15 = arith.subf %7, %14 : vector<16x32xf32>
    %16 = vector.broadcast %13 : vector<16x1xf32> to vector<16x32xf32>
    %17 = arith.subf %7, %16 : vector<16x32xf32>
    %18 = arith.mulf %15, %17 : vector<16x32xf32>
    %cst_10 = arith.constant dense<0.000000e+00> : vector<16xf32>
    %19 = vector.multi_reduction <add>, %18, %cst_10 [1] : vector<16x32xf32> to vector<16xf32>
    %20 = vector.shape_cast %19 : vector<16xf32> to vector<16x1xf32>
    %cst_11 = arith.constant 3.200000e+01 : f32
    %21 = vector.broadcast %cst_11 : f32 to vector<16x1xf32>
    %22 = arith.divf %20, %21 : vector<16x1xf32>
    %23 = vector.broadcast %13 : vector<16x1xf32> to vector<16x32xf32>
    %24 = arith.subf %7, %23 : vector<16x32xf32>
    %cst_12 = arith.constant 9.99999974E-6 : f32
    %25 = vector.broadcast %cst_12 : f32 to vector<16x1xf32>
    %26 = arith.addf %22, %25 : vector<16x1xf32>
    %27 = math.rsqrt %26 : vector<16x1xf32>
    %28 = vector.broadcast %27 : vector<16x1xf32> to vector<16x32xf32>
    %29 = arith.mulf %24, %28 : vector<16x32xf32>
    %30 = vector.broadcast %8 : vector<1x32xf32> to vector<16x32xf32>
    %31 = arith.mulf %29, %30 : vector<16x32xf32>
    %32 = vector.broadcast %9 : vector<1x32xf32> to vector<16x32xf32>
    %33 = arith.addf %31, %32 : vector<16x32xf32>
    %c0_13 = arith.constant 0 : index
    %c0_14 = arith.constant 0 : index
    %34 = vector.load %arg1[%c0_13, %c0_14] : memref<16x16xf32, #tpu.memory_space<vmem>>, vector<16x16xf32>
    %c0_15 = arith.constant 0 : index
    %c0_16 = arith.constant 0 : index
    %c0_17 = arith.constant 0 : index
    %35 = vector.load %arg2[%c0_15, %c0_16, %c0_17] : memref<2x32x96xf32, #tpu.memory_space<vmem>>, vector<1x32x96xf32>
    %36 = vector.shape_cast %35 : vector<1x32x96xf32> to vector<32x96xf32>
    %cst_18 = arith.constant dense<0.000000e+00> : vector<16x96xf32>
    %37 = tpu.matmul %33, %36, %cst_18 {dimension_numbers = #tpu.dot_dimension_numbers<[1], [0], [0], [1], [0, 0, 1, 1], [], []>} : vector<16x32xf32>, vector<32x96xf32>, vector<16x96xf32> -> vector<16x96xf32>
    %c0_19 = arith.constant 0 : index
    %c0_20 = arith.constant 0 : index
    %38 = vector.load %arg3[%c0_19, %c0_20] : memref<2x96xf32, #tpu.memory_space<vmem>>, vector<1x96xf32>
    %39 = vector.broadcast %38 : vector<1x96xf32> to vector<16x96xf32>
    %40 = arith.addf %37, %39 : vector<16x96xf32>
    %c1_21 = arith.constant 1 : index
    %c0_22 = arith.constant 0 : index
    %c0_23 = arith.constant 0 : index
    %41 = vector.load %arg4[%c1_21, %c0_22, %c0_23] : memref<9x32x32xf32, #tpu.memory_space<vmem>>, vector<1x32x32xf32>
    %42 = vector.shape_cast %41 : vector<1x32x32xf32> to vector<32x32xf32>
    %cst_24 = arith.constant 0.000000e+00 : f32
    %43 = vector.broadcast %cst_24 : f32 to vector<16x32xf32>
    %44 = vector.extract_strided_slice %40 {offsets = [0, 0], sizes = [16, 8], strides = [1, 1]} : vector<16x96xf32> to vector<16x8xf32>
    %45 = vector.extract_strided_slice %40 {offsets = [0, 8], sizes = [16, 8], strides = [1, 1]} : vector<16x96xf32> to vector<16x8xf32>
    %46 = vector.extract_strided_slice %40 {offsets = [0, 16], sizes = [16, 8], strides = [1, 1]} : vector<16x96xf32> to vector<16x8xf32>
    %cst_25 = arith.constant dense<0.000000e+00> : vector<16x16xf32>
    %47 = tpu.matmul %44, %45, %cst_25 {dimension_numbers = #tpu.dot_dimension_numbers<[1], [1], [0], [0], [0, 0, 1, 0], [], []>} : vector<16x8xf32>, vector<16x8xf32>, vector<16x16xf32> -> vector<16x16xf32>
    %cst_26 = arith.constant 0.353553385 : f32
    %48 = vector.broadcast %cst_26 : f32 to vector<16x16xf32>
    %49 = arith.mulf %47, %48 : vector<16x16xf32>
    %50 = arith.addf %49, %34 : vector<16x16xf32>
    %51 = math.exp %50 : vector<16x16xf32>
    %cst_27 = arith.constant dense<0.000000e+00> : vector<16xf32>
    %52 = vector.multi_reduction <add>, %51, %cst_27 [1] : vector<16x16xf32> to vector<16xf32>
    %53 = vector.shape_cast %52 : vector<16xf32> to vector<16x1xf32>
    %54 = tpu.reciprocal %53 {approx = true} : vector<16x1xf32> -> vector<16x1xf32>
    %55 = vector.broadcast %54 : vector<16x1xf32> to vector<16x16xf32>
    %56 = arith.mulf %51, %55 : vector<16x16xf32>
    %cst_28 = arith.constant dense<0.000000e+00> : vector<16x8xf32>
    %57 = tpu.matmul %56, %46, %cst_28 {dimension_numbers = #tpu.dot_dimension_numbers<[1], [0], [0], [1], [0, 0, 1, 1], [], []>} : vector<16x16xf32>, vector<16x8xf32>, vector<16x8xf32> -> vector<16x8xf32>
    %58 = vector.extract_strided_slice %42 {offsets = [0, 0], sizes = [8, 32], strides = [1, 1]} : vector<32x32xf32> to vector<8x32xf32>
    %cst_29 = arith.constant dense<0.000000e+00> : vector<16x32xf32>
    %59 = tpu.matmul %57, %58, %cst_29 {dimension_numbers = #tpu.dot_dimension_numbers<[1], [0], [0], [1], [0, 0, 1, 1], [], []>} : vector<16x8xf32>, vector<8x32xf32>, vector<16x32xf32> -> vector<16x32xf32>
    %60 = arith.addf %43, %59 : vector<16x32xf32>
    %61 = vector.extract_strided_slice %40 {offsets = [0, 24], sizes = [16, 8], strides = [1, 1]} : vector<16x96xf32> to vector<16x8xf32>
    %62 = vector.extract_strided_slice %40 {offsets = [0, 32], sizes = [16, 8], strides = [1, 1]} : vector<16x96xf32> to vector<16x8xf32>
    %63 = vector.extract_strided_slice %40 {offsets = [0, 40], sizes = [16, 8], strides = [1, 1]} : vector<16x96xf32> to vector<16x8xf32>
    %cst_30 = arith.constant dense<0.000000e+00> : vector<16x16xf32>
    %64 = tpu.matmul %61, %62, %cst_30 {dimension_numbers = #tpu.dot_dimension_numbers<[1], [1], [0], [0], [0, 0, 1, 0], [], []>} : vector<16x8xf32>, vector<16x8xf32>, vector<16x16xf32> -> vector<16x16xf32>
    %cst_31 = arith.constant 0.353553385 : f32
    %65 = vector.broadcast %cst_31 : f32 to vector<16x16xf32>
    %66 = arith.mulf %64, %65 : vector<16x16xf32>
    %67 = arith.addf %66, %34 : vector<16x16xf32>
    %68 = math.exp %67 : vector<16x16xf32>
    %cst_32 = arith.constant dense<0.000000e+00> : vector<16xf32>
    %69 = vector.multi_reduction <add>, %68, %cst_32 [1] : vector<16x16xf32> to vector<16xf32>
    %70 = vector.shape_cast %69 : vector<16xf32> to vector<16x1xf32>
    %71 = tpu.reciprocal %70 {approx = true} : vector<16x1xf32> -> vector<16x1xf32>
    %72 = vector.broadcast %71 : vector<16x1xf32> to vector<16x16xf32>
    %73 = arith.mulf %68, %72 : vector<16x16xf32>
    %cst_33 = arith.constant dense<0.000000e+00> : vector<16x8xf32>
    %74 = tpu.matmul %73, %63, %cst_33 {dimension_numbers = #tpu.dot_dimension_numbers<[1], [0], [0], [1], [0, 0, 1, 1], [], []>} : vector<16x16xf32>, vector<16x8xf32>, vector<16x8xf32> -> vector<16x8xf32>
    %75 = vector.extract_strided_slice %42 {offsets = [8, 0], sizes = [8, 32], strides = [1, 1]} : vector<32x32xf32> to vector<8x32xf32>
    %cst_34 = arith.constant dense<0.000000e+00> : vector<16x32xf32>
    %76 = tpu.matmul %74, %75, %cst_34 {dimension_numbers = #tpu.dot_dimension_numbers<[1], [0], [0], [1], [0, 0, 1, 1], [], []>} : vector<16x8xf32>, vector<8x32xf32>, vector<16x32xf32> -> vector<16x32xf32>
    %77 = arith.addf %60, %76 : vector<16x32xf32>
    %78 = vector.extract_strided_slice %40 {offsets = [0, 48], sizes = [16, 8], strides = [1, 1]} : vector<16x96xf32> to vector<16x8xf32>
    %79 = vector.extract_strided_slice %40 {offsets = [0, 56], sizes = [16, 8], strides = [1, 1]} : vector<16x96xf32> to vector<16x8xf32>
    %80 = vector.extract_strided_slice %40 {offsets = [0, 64], sizes = [16, 8], strides = [1, 1]} : vector<16x96xf32> to vector<16x8xf32>
    %cst_35 = arith.constant dense<0.000000e+00> : vector<16x16xf32>
    %81 = tpu.matmul %78, %79, %cst_35 {dimension_numbers = #tpu.dot_dimension_numbers<[1], [1], [0], [0], [0, 0, 1, 0], [], []>} : vector<16x8xf32>, vector<16x8xf32>, vector<16x16xf32> -> vector<16x16xf32>
    %cst_36 = arith.constant 0.353553385 : f32
    %82 = vector.broadcast %cst_36 : f32 to vector<16x16xf32>
    %83 = arith.mulf %81, %82 : vector<16x16xf32>
    %84 = arith.addf %83, %34 : vector<16x16xf32>
    %85 = math.exp %84 : vector<16x16xf32>
    %cst_37 = arith.constant dense<0.000000e+00> : vector<16xf32>
    %86 = vector.multi_reduction <add>, %85, %cst_37 [1] : vector<16x16xf32> to vector<16xf32>
    %87 = vector.shape_cast %86 : vector<16xf32> to vector<16x1xf32>
    %88 = tpu.reciprocal %87 {approx = true} : vector<16x1xf32> -> vector<16x1xf32>
    %89 = vector.broadcast %88 : vector<16x1xf32> to vector<16x16xf32>
    %90 = arith.mulf %85, %89 : vector<16x16xf32>
    %cst_38 = arith.constant dense<0.000000e+00> : vector<16x8xf32>
    %91 = tpu.matmul %90, %80, %cst_38 {dimension_numbers = #tpu.dot_dimension_numbers<[1], [0], [0], [1], [0, 0, 1, 1], [], []>} : vector<16x16xf32>, vector<16x8xf32>, vector<16x8xf32> -> vector<16x8xf32>
    %92 = vector.extract_strided_slice %42 {offsets = [16, 0], sizes = [8, 32], strides = [1, 1]} : vector<32x32xf32> to vector<8x32xf32>
    %cst_39 = arith.constant dense<0.000000e+00> : vector<16x32xf32>
    %93 = tpu.matmul %91, %92, %cst_39 {dimension_numbers = #tpu.dot_dimension_numbers<[1], [0], [0], [1], [0, 0, 1, 1], [], []>} : vector<16x8xf32>, vector<8x32xf32>, vector<16x32xf32> -> vector<16x32xf32>
    %94 = arith.addf %77, %93 : vector<16x32xf32>
    %95 = vector.extract_strided_slice %40 {offsets = [0, 72], sizes = [16, 8], strides = [1, 1]} : vector<16x96xf32> to vector<16x8xf32>
    %96 = vector.extract_strided_slice %40 {offsets = [0, 80], sizes = [16, 8], strides = [1, 1]} : vector<16x96xf32> to vector<16x8xf32>
    %97 = vector.extract_strided_slice %40 {offsets = [0, 88], sizes = [16, 8], strides = [1, 1]} : vector<16x96xf32> to vector<16x8xf32>
    %cst_40 = arith.constant dense<0.000000e+00> : vector<16x16xf32>
    %98 = tpu.matmul %95, %96, %cst_40 {dimension_numbers = #tpu.dot_dimension_numbers<[1], [1], [0], [0], [0, 0, 1, 0], [], []>} : vector<16x8xf32>, vector<16x8xf32>, vector<16x16xf32> -> vector<16x16xf32>
    %cst_41 = arith.constant 0.353553385 : f32
    %99 = vector.broadcast %cst_41 : f32 to vector<16x16xf32>
    %100 = arith.mulf %98, %99 : vector<16x16xf32>
    %101 = arith.addf %100, %34 : vector<16x16xf32>
    %102 = math.exp %101 : vector<16x16xf32>
    %cst_42 = arith.constant dense<0.000000e+00> : vector<16xf32>
    %103 = vector.multi_reduction <add>, %102, %cst_42 [1] : vector<16x16xf32> to vector<16xf32>
    %104 = vector.shape_cast %103 : vector<16xf32> to vector<16x1xf32>
    %105 = tpu.reciprocal %104 {approx = true} : vector<16x1xf32> -> vector<16x1xf32>
    %106 = vector.broadcast %105 : vector<16x1xf32> to vector<16x16xf32>
    %107 = arith.mulf %102, %106 : vector<16x16xf32>
    %cst_43 = arith.constant dense<0.000000e+00> : vector<16x8xf32>
    %108 = tpu.matmul %107, %97, %cst_43 {dimension_numbers = #tpu.dot_dimension_numbers<[1], [0], [0], [1], [0, 0, 1, 1], [], []>} : vector<16x16xf32>, vector<16x8xf32>, vector<16x8xf32> -> vector<16x8xf32>
    %109 = vector.extract_strided_slice %42 {offsets = [24, 0], sizes = [8, 32], strides = [1, 1]} : vector<32x32xf32> to vector<8x32xf32>
    %cst_44 = arith.constant dense<0.000000e+00> : vector<16x32xf32>
    %110 = tpu.matmul %108, %109, %cst_44 {dimension_numbers = #tpu.dot_dimension_numbers<[1], [0], [0], [1], [0, 0, 1, 1], [], []>} : vector<16x8xf32>, vector<8x32xf32>, vector<16x32xf32> -> vector<16x32xf32>
    %111 = arith.addf %94, %110 : vector<16x32xf32>
    %c3 = arith.constant 3 : index
    %c0_45 = arith.constant 0 : index
    %112 = vector.load %arg5[%c3, %c0_45] : memref<23x32xf32, #tpu.memory_space<vmem>>, vector<1x32xf32>
    %113 = vector.broadcast %112 : vector<1x32xf32> to vector<16x32xf32>
    %114 = arith.addf %111, %113 : vector<16x32xf32>
    %115 = arith.addf %114, %33 : vector<16x32xf32>
    %c4 = arith.constant 4 : index
    %c0_46 = arith.constant 0 : index
    %116 = vector.load %arg5[%c4, %c0_46] : memref<23x32xf32, #tpu.memory_space<vmem>>, vector<1x32xf32>
    %c5 = arith.constant 5 : index
    %c0_47 = arith.constant 0 : index
    %117 = vector.load %arg5[%c5, %c0_47] : memref<23x32xf32, #tpu.memory_space<vmem>>, vector<1x32xf32>
    %cst_48 = arith.constant dense<0.000000e+00> : vector<16xf32>
    %118 = vector.multi_reduction <add>, %115, %cst_48 [1] : vector<16x32xf32> to vector<16xf32>
    %119 = vector.shape_cast %118 : vector<16xf32> to vector<16x1xf32>
    %cst_49 = arith.constant 3.200000e+01 : f32
    %120 = vector.broadcast %cst_49 : f32 to vector<16x1xf32>
    %121 = arith.divf %119, %120 : vector<16x1xf32>
    %122 = vector.broadcast %121 : vector<16x1xf32> to vector<16x32xf32>
    %123 = arith.subf %115, %122 : vector<16x32xf32>
    %124 = vector.broadcast %121 : vector<16x1xf32> to vector<16x32xf32>
    %125 = arith.subf %115, %124 : vector<16x32xf32>
    %126 = arith.mulf %123, %125 : vector<16x32xf32>
    %cst_50 = arith.constant dense<0.000000e+00> : vector<16xf32>
    %127 = vector.multi_reduction <add>, %126, %cst_50 [1] : vector<16x32xf32> to vector<16xf32>
    %128 = vector.shape_cast %127 : vector<16xf32> to vector<16x1xf32>
    %cst_51 = arith.constant 3.200000e+01 : f32
    %129 = vector.broadcast %cst_51 : f32 to vector<16x1xf32>
    %130 = arith.divf %128, %129 : vector<16x1xf32>
    %131 = vector.broadcast %121 : vector<16x1xf32> to vector<16x32xf32>
    %132 = arith.subf %115, %131 : vector<16x32xf32>
    %cst_52 = arith.constant 9.99999996E-13 : f32
    %133 = vector.broadcast %cst_52 : f32 to vector<16x1xf32>
    %134 = arith.addf %130, %133 : vector<16x1xf32>
    %135 = math.rsqrt %134 : vector<16x1xf32>
    %136 = vector.broadcast %135 : vector<16x1xf32> to vector<16x32xf32>
    %137 = arith.mulf %132, %136 : vector<16x32xf32>
    %138 = vector.broadcast %116 : vector<1x32xf32> to vector<16x32xf32>
    %139 = arith.mulf %137, %138 : vector<16x32xf32>
    %140 = vector.broadcast %117 : vector<1x32xf32> to vector<16x32xf32>
    %141 = arith.addf %139, %140 : vector<16x32xf32>
    %c2_53 = arith.constant 2 : index
    %c0_54 = arith.constant 0 : index
    %c0_55 = arith.constant 0 : index
    %142 = vector.load %arg4[%c2_53, %c0_54, %c0_55] : memref<9x32x32xf32, #tpu.memory_space<vmem>>, vector<1x32x32xf32>
    %143 = vector.shape_cast %142 : vector<1x32x32xf32> to vector<32x32xf32>
    %cst_56 = arith.constant dense<0.000000e+00> : vector<16x32xf32>
    %144 = tpu.matmul %141, %143, %cst_56 {dimension_numbers = #tpu.dot_dimension_numbers<[1], [0], [0], [1], [0, 0, 1, 1], [], []>} : vector<16x32xf32>, vector<32x32xf32>, vector<16x32xf32> -> vector<16x32xf32>
    %c6 = arith.constant 6 : index
    %c0_57 = arith.constant 0 : index
    %145 = vector.load %arg5[%c6, %c0_57] : memref<23x32xf32, #tpu.memory_space<vmem>>, vector<1x32xf32>
    %146 = vector.broadcast %145 : vector<1x32xf32> to vector<16x32xf32>
    %147 = arith.addf %144, %146 : vector<16x32xf32>
    %cst_58 = arith.constant 5.000000e-01 : f32
    %148 = vector.broadcast %cst_58 : f32 to vector<16x32xf32>
    %149 = arith.mulf %148, %147 : vector<16x32xf32>
    %cst_59 = arith.constant 4.471500e-02 : f32
    %150 = vector.broadcast %cst_59 : f32 to vector<16x32xf32>
    %151 = arith.mulf %150, %147 : vector<16x32xf32>
    %152 = arith.mulf %151, %147 : vector<16x32xf32>
    %153 = arith.mulf %152, %147 : vector<16x32xf32>
    %154 = arith.addf %147, %153 : vector<16x32xf32>
    %cst_60 = arith.constant 0.797884583 : f32
    %155 = vector.broadcast %cst_60 : f32 to vector<16x32xf32>
    %156 = arith.mulf %155, %154 : vector<16x32xf32>
    %157 = math.tanh %156 : vector<16x32xf32>
    %cst_61 = arith.constant 1.000000e+00 : f32
    %158 = vector.broadcast %cst_61 : f32 to vector<16x32xf32>
    %159 = arith.addf %158, %157 : vector<16x32xf32>
    %160 = arith.mulf %149, %159 : vector<16x32xf32>
    %c3_62 = arith.constant 3 : index
    %c0_63 = arith.constant 0 : index
    %c0_64 = arith.constant 0 : index
    %161 = vector.load %arg4[%c3_62, %c0_63, %c0_64] : memref<9x32x32xf32, #tpu.memory_space<vmem>>, vector<1x32x32xf32>
    %162 = vector.shape_cast %161 : vector<1x32x32xf32> to vector<32x32xf32>
    %cst_65 = arith.constant dense<0.000000e+00> : vector<16x32xf32>
    %163 = tpu.matmul %160, %162, %cst_65 {dimension_numbers = #tpu.dot_dimension_numbers<[1], [0], [0], [1], [0, 0, 1, 1], [], []>} : vector<16x32xf32>, vector<32x32xf32>, vector<16x32xf32> -> vector<16x32xf32>
    %c7 = arith.constant 7 : index
    %c0_66 = arith.constant 0 : index
    %164 = vector.load %arg5[%c7, %c0_66] : memref<23x32xf32, #tpu.memory_space<vmem>>, vector<1x32xf32>
    %165 = vector.broadcast %164 : vector<1x32xf32> to vector<16x32xf32>
    %166 = arith.addf %163, %165 : vector<16x32xf32>
    %167 = arith.addf %166, %141 : vector<16x32xf32>
    %c8 = arith.constant 8 : index
    %c0_67 = arith.constant 0 : index
    %168 = vector.load %arg5[%c8, %c0_67] : memref<23x32xf32, #tpu.memory_space<vmem>>, vector<1x32xf32>
    %c9 = arith.constant 9 : index
    %c0_68 = arith.constant 0 : index
    %169 = vector.load %arg5[%c9, %c0_68] : memref<23x32xf32, #tpu.memory_space<vmem>>, vector<1x32xf32>
    %cst_69 = arith.constant dense<0.000000e+00> : vector<16xf32>
    %170 = vector.multi_reduction <add>, %167, %cst_69 [1] : vector<16x32xf32> to vector<16xf32>
    %171 = vector.shape_cast %170 : vector<16xf32> to vector<16x1xf32>
    %cst_70 = arith.constant 3.200000e+01 : f32
    %172 = vector.broadcast %cst_70 : f32 to vector<16x1xf32>
    %173 = arith.divf %171, %172 : vector<16x1xf32>
    %174 = vector.broadcast %173 : vector<16x1xf32> to vector<16x32xf32>
    %175 = arith.subf %167, %174 : vector<16x32xf32>
    %176 = vector.broadcast %173 : vector<16x1xf32> to vector<16x32xf32>
    %177 = arith.subf %167, %176 : vector<16x32xf32>
    %178 = arith.mulf %175, %177 : vector<16x32xf32>
    %cst_71 = arith.constant dense<0.000000e+00> : vector<16xf32>
    %179 = vector.multi_reduction <add>, %178, %cst_71 [1] : vector<16x32xf32> to vector<16xf32>
    %180 = vector.shape_cast %179 : vector<16xf32> to vector<16x1xf32>
    %cst_72 = arith.constant 3.200000e+01 : f32
    %181 = vector.broadcast %cst_72 : f32 to vector<16x1xf32>
    %182 = arith.divf %180, %181 : vector<16x1xf32>
    %183 = vector.broadcast %173 : vector<16x1xf32> to vector<16x32xf32>
    %184 = arith.subf %167, %183 : vector<16x32xf32>
    %cst_73 = arith.constant 9.99999996E-13 : f32
    %185 = vector.broadcast %cst_73 : f32 to vector<16x1xf32>
    %186 = arith.addf %182, %185 : vector<16x1xf32>
    %187 = math.rsqrt %186 : vector<16x1xf32>
    %188 = vector.broadcast %187 : vector<16x1xf32> to vector<16x32xf32>
    %189 = arith.mulf %184, %188 : vector<16x32xf32>
    %190 = vector.broadcast %168 : vector<1x32xf32> to vector<16x32xf32>
    %191 = arith.mulf %189, %190 : vector<16x32xf32>
    %192 = vector.broadcast %169 : vector<1x32xf32> to vector<16x32xf32>
    %193 = arith.addf %191, %192 : vector<16x32xf32>
    %c1_74 = arith.constant 1 : index
    %c0_75 = arith.constant 0 : index
    %c0_76 = arith.constant 0 : index
    %194 = vector.load %arg2[%c1_74, %c0_75, %c0_76] : memref<2x32x96xf32, #tpu.memory_space<vmem>>, vector<1x32x96xf32>
    %195 = vector.shape_cast %194 : vector<1x32x96xf32> to vector<32x96xf32>
    %cst_77 = arith.constant dense<0.000000e+00> : vector<16x96xf32>
    %196 = tpu.matmul %193, %195, %cst_77 {dimension_numbers = #tpu.dot_dimension_numbers<[1], [0], [0], [1], [0, 0, 1, 1], [], []>} : vector<16x32xf32>, vector<32x96xf32>, vector<16x96xf32> -> vector<16x96xf32>
    %c1_78 = arith.constant 1 : index
    %c0_79 = arith.constant 0 : index
    %197 = vector.load %arg3[%c1_78, %c0_79] : memref<2x96xf32, #tpu.memory_space<vmem>>, vector<1x96xf32>
    %198 = vector.broadcast %197 : vector<1x96xf32> to vector<16x96xf32>
    %199 = arith.addf %196, %198 : vector<16x96xf32>
    %c4_80 = arith.constant 4 : index
    %c0_81 = arith.constant 0 : index
    %c0_82 = arith.constant 0 : index
    %200 = vector.load %arg4[%c4_80, %c0_81, %c0_82] : memref<9x32x32xf32, #tpu.memory_space<vmem>>, vector<1x32x32xf32>
    %201 = vector.shape_cast %200 : vector<1x32x32xf32> to vector<32x32xf32>
    %cst_83 = arith.constant 0.000000e+00 : f32
    %202 = vector.broadcast %cst_83 : f32 to vector<16x32xf32>
    %203 = vector.extract_strided_slice %199 {offsets = [0, 0], sizes = [16, 8], strides = [1, 1]} : vector<16x96xf32> to vector<16x8xf32>
    %204 = vector.extract_strided_slice %199 {offsets = [0, 8], sizes = [16, 8], strides = [1, 1]} : vector<16x96xf32> to vector<16x8xf32>
    %205 = vector.extract_strided_slice %199 {offsets = [0, 16], sizes = [16, 8], strides = [1, 1]} : vector<16x96xf32> to vector<16x8xf32>
    %cst_84 = arith.constant dense<0.000000e+00> : vector<16x16xf32>
    %206 = tpu.matmul %203, %204, %cst_84 {dimension_numbers = #tpu.dot_dimension_numbers<[1], [1], [0], [0], [0, 0, 1, 0], [], []>} : vector<16x8xf32>, vector<16x8xf32>, vector<16x16xf32> -> vector<16x16xf32>
    %cst_85 = arith.constant 0.353553385 : f32
    %207 = vector.broadcast %cst_85 : f32 to vector<16x16xf32>
    %208 = arith.mulf %206, %207 : vector<16x16xf32>
    %209 = arith.addf %208, %34 : vector<16x16xf32>
    %210 = math.exp %209 : vector<16x16xf32>
    %cst_86 = arith.constant dense<0.000000e+00> : vector<16xf32>
    %211 = vector.multi_reduction <add>, %210, %cst_86 [1] : vector<16x16xf32> to vector<16xf32>
    %212 = vector.shape_cast %211 : vector<16xf32> to vector<16x1xf32>
    %213 = tpu.reciprocal %212 {approx = true} : vector<16x1xf32> -> vector<16x1xf32>
    %214 = vector.broadcast %213 : vector<16x1xf32> to vector<16x16xf32>
    %215 = arith.mulf %210, %214 : vector<16x16xf32>
    %cst_87 = arith.constant dense<0.000000e+00> : vector<16x8xf32>
    %216 = tpu.matmul %215, %205, %cst_87 {dimension_numbers = #tpu.dot_dimension_numbers<[1], [0], [0], [1], [0, 0, 1, 1], [], []>} : vector<16x16xf32>, vector<16x8xf32>, vector<16x8xf32> -> vector<16x8xf32>
    %217 = vector.extract_strided_slice %201 {offsets = [0, 0], sizes = [8, 32], strides = [1, 1]} : vector<32x32xf32> to vector<8x32xf32>
    %cst_88 = arith.constant dense<0.000000e+00> : vector<16x32xf32>
    %218 = tpu.matmul %216, %217, %cst_88 {dimension_numbers = #tpu.dot_dimension_numbers<[1], [0], [0], [1], [0, 0, 1, 1], [], []>} : vector<16x8xf32>, vector<8x32xf32>, vector<16x32xf32> -> vector<16x32xf32>
    %219 = arith.addf %202, %218 : vector<16x32xf32>
    %220 = vector.extract_strided_slice %199 {offsets = [0, 24], sizes = [16, 8], strides = [1, 1]} : vector<16x96xf32> to vector<16x8xf32>
    %221 = vector.extract_strided_slice %199 {offsets = [0, 32], sizes = [16, 8], strides = [1, 1]} : vector<16x96xf32> to vector<16x8xf32>
    %222 = vector.extract_strided_slice %199 {offsets = [0, 40], sizes = [16, 8], strides = [1, 1]} : vector<16x96xf32> to vector<16x8xf32>
    %cst_89 = arith.constant dense<0.000000e+00> : vector<16x16xf32>
    %223 = tpu.matmul %220, %221, %cst_89 {dimension_numbers = #tpu.dot_dimension_numbers<[1], [1], [0], [0], [0, 0, 1, 0], [], []>} : vector<16x8xf32>, vector<16x8xf32>, vector<16x16xf32> -> vector<16x16xf32>
    %cst_90 = arith.constant 0.353553385 : f32
    %224 = vector.broadcast %cst_90 : f32 to vector<16x16xf32>
    %225 = arith.mulf %223, %224 : vector<16x16xf32>
    %226 = arith.addf %225, %34 : vector<16x16xf32>
    %227 = math.exp %226 : vector<16x16xf32>
    %cst_91 = arith.constant dense<0.000000e+00> : vector<16xf32>
    %228 = vector.multi_reduction <add>, %227, %cst_91 [1] : vector<16x16xf32> to vector<16xf32>
    %229 = vector.shape_cast %228 : vector<16xf32> to vector<16x1xf32>
    %230 = tpu.reciprocal %229 {approx = true} : vector<16x1xf32> -> vector<16x1xf32>
    %231 = vector.broadcast %230 : vector<16x1xf32> to vector<16x16xf32>
    %232 = arith.mulf %227, %231 : vector<16x16xf32>
    %cst_92 = arith.constant dense<0.000000e+00> : vector<16x8xf32>
    %233 = tpu.matmul %232, %222, %cst_92 {dimension_numbers = #tpu.dot_dimension_numbers<[1], [0], [0], [1], [0, 0, 1, 1], [], []>} : vector<16x16xf32>, vector<16x8xf32>, vector<16x8xf32> -> vector<16x8xf32>
    %234 = vector.extract_strided_slice %201 {offsets = [8, 0], sizes = [8, 32], strides = [1, 1]} : vector<32x32xf32> to vector<8x32xf32>
    %cst_93 = arith.constant dense<0.000000e+00> : vector<16x32xf32>
    %235 = tpu.matmul %233, %234, %cst_93 {dimension_numbers = #tpu.dot_dimension_numbers<[1], [0], [0], [1], [0, 0, 1, 1], [], []>} : vector<16x8xf32>, vector<8x32xf32>, vector<16x32xf32> -> vector<16x32xf32>
    %236 = arith.addf %219, %235 : vector<16x32xf32>
    %237 = vector.extract_strided_slice %199 {offsets = [0, 48], sizes = [16, 8], strides = [1, 1]} : vector<16x96xf32> to vector<16x8xf32>
    %238 = vector.extract_strided_slice %199 {offsets = [0, 56], sizes = [16, 8], strides = [1, 1]} : vector<16x96xf32> to vector<16x8xf32>
    %239 = vector.extract_strided_slice %199 {offsets = [0, 64], sizes = [16, 8], strides = [1, 1]} : vector<16x96xf32> to vector<16x8xf32>
    %cst_94 = arith.constant dense<0.000000e+00> : vector<16x16xf32>
    %240 = tpu.matmul %237, %238, %cst_94 {dimension_numbers = #tpu.dot_dimension_numbers<[1], [1], [0], [0], [0, 0, 1, 0], [], []>} : vector<16x8xf32>, vector<16x8xf32>, vector<16x16xf32> -> vector<16x16xf32>
    %cst_95 = arith.constant 0.353553385 : f32
    %241 = vector.broadcast %cst_95 : f32 to vector<16x16xf32>
    %242 = arith.mulf %240, %241 : vector<16x16xf32>
    %243 = arith.addf %242, %34 : vector<16x16xf32>
    %244 = math.exp %243 : vector<16x16xf32>
    %cst_96 = arith.constant dense<0.000000e+00> : vector<16xf32>
    %245 = vector.multi_reduction <add>, %244, %cst_96 [1] : vector<16x16xf32> to vector<16xf32>
    %246 = vector.shape_cast %245 : vector<16xf32> to vector<16x1xf32>
    %247 = tpu.reciprocal %246 {approx = true} : vector<16x1xf32> -> vector<16x1xf32>
    %248 = vector.broadcast %247 : vector<16x1xf32> to vector<16x16xf32>
    %249 = arith.mulf %244, %248 : vector<16x16xf32>
    %cst_97 = arith.constant dense<0.000000e+00> : vector<16x8xf32>
    %250 = tpu.matmul %249, %239, %cst_97 {dimension_numbers = #tpu.dot_dimension_numbers<[1], [0], [0], [1], [0, 0, 1, 1], [], []>} : vector<16x16xf32>, vector<16x8xf32>, vector<16x8xf32> -> vector<16x8xf32>
    %251 = vector.extract_strided_slice %201 {offsets = [16, 0], sizes = [8, 32], strides = [1, 1]} : vector<32x32xf32> to vector<8x32xf32>
    %cst_98 = arith.constant dense<0.000000e+00> : vector<16x32xf32>
    %252 = tpu.matmul %250, %251, %cst_98 {dimension_numbers = #tpu.dot_dimension_numbers<[1], [0], [0], [1], [0, 0, 1, 1], [], []>} : vector<16x8xf32>, vector<8x32xf32>, vector<16x32xf32> -> vector<16x32xf32>
    %253 = arith.addf %236, %252 : vector<16x32xf32>
    %254 = vector.extract_strided_slice %199 {offsets = [0, 72], sizes = [16, 8], strides = [1, 1]} : vector<16x96xf32> to vector<16x8xf32>
    %255 = vector.extract_strided_slice %199 {offsets = [0, 80], sizes = [16, 8], strides = [1, 1]} : vector<16x96xf32> to vector<16x8xf32>
    %256 = vector.extract_strided_slice %199 {offsets = [0, 88], sizes = [16, 8], strides = [1, 1]} : vector<16x96xf32> to vector<16x8xf32>
    %cst_99 = arith.constant dense<0.000000e+00> : vector<16x16xf32>
    %257 = tpu.matmul %254, %255, %cst_99 {dimension_numbers = #tpu.dot_dimension_numbers<[1], [1], [0], [0], [0, 0, 1, 0], [], []>} : vector<16x8xf32>, vector<16x8xf32>, vector<16x16xf32> -> vector<16x16xf32>
    %cst_100 = arith.constant 0.353553385 : f32
    %258 = vector.broadcast %cst_100 : f32 to vector<16x16xf32>
    %259 = arith.mulf %257, %258 : vector<16x16xf32>
    %260 = arith.addf %259, %34 : vector<16x16xf32>
    %261 = math.exp %260 : vector<16x16xf32>
    %cst_101 = arith.constant dense<0.000000e+00> : vector<16xf32>
    %262 = vector.multi_reduction <add>, %261, %cst_101 [1] : vector<16x16xf32> to vector<16xf32>
    %263 = vector.shape_cast %262 : vector<16xf32> to vector<16x1xf32>
    %264 = tpu.reciprocal %263 {approx = true} : vector<16x1xf32> -> vector<16x1xf32>
    %265 = vector.broadcast %264 : vector<16x1xf32> to vector<16x16xf32>
    %266 = arith.mulf %261, %265 : vector<16x16xf32>
    %cst_102 = arith.constant dense<0.000000e+00> : vector<16x8xf32>
    %267 = tpu.matmul %266, %256, %cst_102 {dimension_numbers = #tpu.dot_dimension_numbers<[1], [0], [0], [1], [0, 0, 1, 1], [], []>} : vector<16x16xf32>, vector<16x8xf32>, vector<16x8xf32> -> vector<16x8xf32>
    %268 = vector.extract_strided_slice %201 {offsets = [24, 0], sizes = [8, 32], strides = [1, 1]} : vector<32x32xf32> to vector<8x32xf32>
    %cst_103 = arith.constant dense<0.000000e+00> : vector<16x32xf32>
    %269 = tpu.matmul %267, %268, %cst_103 {dimension_numbers = #tpu.dot_dimension_numbers<[1], [0], [0], [1], [0, 0, 1, 1], [], []>} : vector<16x8xf32>, vector<8x32xf32>, vector<16x32xf32> -> vector<16x32xf32>
    %270 = arith.addf %253, %269 : vector<16x32xf32>
    %c10 = arith.constant 10 : index
    %c0_104 = arith.constant 0 : index
    %271 = vector.load %arg5[%c10, %c0_104] : memref<23x32xf32, #tpu.memory_space<vmem>>, vector<1x32xf32>
    %272 = vector.broadcast %271 : vector<1x32xf32> to vector<16x32xf32>
    %273 = arith.addf %270, %272 : vector<16x32xf32>
    %274 = arith.addf %273, %193 : vector<16x32xf32>
    %c11 = arith.constant 11 : index
    %c0_105 = arith.constant 0 : index
    %275 = vector.load %arg5[%c11, %c0_105] : memref<23x32xf32, #tpu.memory_space<vmem>>, vector<1x32xf32>
    %c12 = arith.constant 12 : index
    %c0_106 = arith.constant 0 : index
    %276 = vector.load %arg5[%c12, %c0_106] : memref<23x32xf32, #tpu.memory_space<vmem>>, vector<1x32xf32>
    %cst_107 = arith.constant dense<0.000000e+00> : vector<16xf32>
    %277 = vector.multi_reduction <add>, %274, %cst_107 [1] : vector<16x32xf32> to vector<16xf32>
    %278 = vector.shape_cast %277 : vector<16xf32> to vector<16x1xf32>
    %cst_108 = arith.constant 3.200000e+01 : f32
    %279 = vector.broadcast %cst_108 : f32 to vector<16x1xf32>
    %280 = arith.divf %278, %279 : vector<16x1xf32>
    %281 = vector.broadcast %280 : vector<16x1xf32> to vector<16x32xf32>
    %282 = arith.subf %274, %281 : vector<16x32xf32>
    %283 = vector.broadcast %280 : vector<16x1xf32> to vector<16x32xf32>
    %284 = arith.subf %274, %283 : vector<16x32xf32>
    %285 = arith.mulf %282, %284 : vector<16x32xf32>
    %cst_109 = arith.constant dense<0.000000e+00> : vector<16xf32>
    %286 = vector.multi_reduction <add>, %285, %cst_109 [1] : vector<16x32xf32> to vector<16xf32>
    %287 = vector.shape_cast %286 : vector<16xf32> to vector<16x1xf32>
    %cst_110 = arith.constant 3.200000e+01 : f32
    %288 = vector.broadcast %cst_110 : f32 to vector<16x1xf32>
    %289 = arith.divf %287, %288 : vector<16x1xf32>
    %290 = vector.broadcast %280 : vector<16x1xf32> to vector<16x32xf32>
    %291 = arith.subf %274, %290 : vector<16x32xf32>
    %cst_111 = arith.constant 9.99999996E-13 : f32
    %292 = vector.broadcast %cst_111 : f32 to vector<16x1xf32>
    %293 = arith.addf %289, %292 : vector<16x1xf32>
    %294 = math.rsqrt %293 : vector<16x1xf32>
    %295 = vector.broadcast %294 : vector<16x1xf32> to vector<16x32xf32>
    %296 = arith.mulf %291, %295 : vector<16x32xf32>
    %297 = vector.broadcast %275 : vector<1x32xf32> to vector<16x32xf32>
    %298 = arith.mulf %296, %297 : vector<16x32xf32>
    %299 = vector.broadcast %276 : vector<1x32xf32> to vector<16x32xf32>
    %300 = arith.addf %298, %299 : vector<16x32xf32>
    %c5_112 = arith.constant 5 : index
    %c0_113 = arith.constant 0 : index
    %c0_114 = arith.constant 0 : index
    %301 = vector.load %arg4[%c5_112, %c0_113, %c0_114] : memref<9x32x32xf32, #tpu.memory_space<vmem>>, vector<1x32x32xf32>
    %302 = vector.shape_cast %301 : vector<1x32x32xf32> to vector<32x32xf32>
    %cst_115 = arith.constant dense<0.000000e+00> : vector<16x32xf32>
    %303 = tpu.matmul %300, %302, %cst_115 {dimension_numbers = #tpu.dot_dimension_numbers<[1], [0], [0], [1], [0, 0, 1, 1], [], []>} : vector<16x32xf32>, vector<32x32xf32>, vector<16x32xf32> -> vector<16x32xf32>
    %c13 = arith.constant 13 : index
    %c0_116 = arith.constant 0 : index
    %304 = vector.load %arg5[%c13, %c0_116] : memref<23x32xf32, #tpu.memory_space<vmem>>, vector<1x32xf32>
    %305 = vector.broadcast %304 : vector<1x32xf32> to vector<16x32xf32>
    %306 = arith.addf %303, %305 : vector<16x32xf32>
    %cst_117 = arith.constant 5.000000e-01 : f32
    %307 = vector.broadcast %cst_117 : f32 to vector<16x32xf32>
    %308 = arith.mulf %307, %306 : vector<16x32xf32>
    %cst_118 = arith.constant 4.471500e-02 : f32
    %309 = vector.broadcast %cst_118 : f32 to vector<16x32xf32>
    %310 = arith.mulf %309, %306 : vector<16x32xf32>
    %311 = arith.mulf %310, %306 : vector<16x32xf32>
    %312 = arith.mulf %311, %306 : vector<16x32xf32>
    %313 = arith.addf %306, %312 : vector<16x32xf32>
    %cst_119 = arith.constant 0.797884583 : f32
    %314 = vector.broadcast %cst_119 : f32 to vector<16x32xf32>
    %315 = arith.mulf %314, %313 : vector<16x32xf32>
    %316 = math.tanh %315 : vector<16x32xf32>
    %cst_120 = arith.constant 1.000000e+00 : f32
    %317 = vector.broadcast %cst_120 : f32 to vector<16x32xf32>
    %318 = arith.addf %317, %316 : vector<16x32xf32>
    %319 = arith.mulf %308, %318 : vector<16x32xf32>
    %c6_121 = arith.constant 6 : index
    %c0_122 = arith.constant 0 : index
    %c0_123 = arith.constant 0 : index
    %320 = vector.load %arg4[%c6_121, %c0_122, %c0_123] : memref<9x32x32xf32, #tpu.memory_space<vmem>>, vector<1x32x32xf32>
    %321 = vector.shape_cast %320 : vector<1x32x32xf32> to vector<32x32xf32>
    %cst_124 = arith.constant dense<0.000000e+00> : vector<16x32xf32>
    %322 = tpu.matmul %319, %321, %cst_124 {dimension_numbers = #tpu.dot_dimension_numbers<[1], [0], [0], [1], [0, 0, 1, 1], [], []>} : vector<16x32xf32>, vector<32x32xf32>, vector<16x32xf32> -> vector<16x32xf32>
    %c14 = arith.constant 14 : index
    %c0_125 = arith.constant 0 : index
    %323 = vector.load %arg5[%c14, %c0_125] : memref<23x32xf32, #tpu.memory_space<vmem>>, vector<1x32xf32>
    %324 = vector.broadcast %323 : vector<1x32xf32> to vector<16x32xf32>
    %325 = arith.addf %322, %324 : vector<16x32xf32>
    %326 = arith.addf %325, %300 : vector<16x32xf32>
    %c15 = arith.constant 15 : index
    %c0_126 = arith.constant 0 : index
    %327 = vector.load %arg5[%c15, %c0_126] : memref<23x32xf32, #tpu.memory_space<vmem>>, vector<1x32xf32>
    %c16 = arith.constant 16 : index
    %c0_127 = arith.constant 0 : index
    %328 = vector.load %arg5[%c16, %c0_127] : memref<23x32xf32, #tpu.memory_space<vmem>>, vector<1x32xf32>
    %cst_128 = arith.constant dense<0.000000e+00> : vector<16xf32>
    %329 = vector.multi_reduction <add>, %326, %cst_128 [1] : vector<16x32xf32> to vector<16xf32>
    %330 = vector.shape_cast %329 : vector<16xf32> to vector<16x1xf32>
    %cst_129 = arith.constant 3.200000e+01 : f32
    %331 = vector.broadcast %cst_129 : f32 to vector<16x1xf32>
    %332 = arith.divf %330, %331 : vector<16x1xf32>
    %333 = vector.broadcast %332 : vector<16x1xf32> to vector<16x32xf32>
    %334 = arith.subf %326, %333 : vector<16x32xf32>
    %335 = vector.broadcast %332 : vector<16x1xf32> to vector<16x32xf32>
    %336 = arith.subf %326, %335 : vector<16x32xf32>
    %337 = arith.mulf %334, %336 : vector<16x32xf32>
    %cst_130 = arith.constant dense<0.000000e+00> : vector<16xf32>
    %338 = vector.multi_reduction <add>, %337, %cst_130 [1] : vector<16x32xf32> to vector<16xf32>
    %339 = vector.shape_cast %338 : vector<16xf32> to vector<16x1xf32>
    %cst_131 = arith.constant 3.200000e+01 : f32
    %340 = vector.broadcast %cst_131 : f32 to vector<16x1xf32>
    %341 = arith.divf %339, %340 : vector<16x1xf32>
    %342 = vector.broadcast %332 : vector<16x1xf32> to vector<16x32xf32>
    %343 = arith.subf %326, %342 : vector<16x32xf32>
    %cst_132 = arith.constant 9.99999996E-13 : f32
    %344 = vector.broadcast %cst_132 : f32 to vector<16x1xf32>
    %345 = arith.addf %341, %344 : vector<16x1xf32>
    %346 = math.rsqrt %345 : vector<16x1xf32>
    %347 = vector.broadcast %346 : vector<16x1xf32> to vector<16x32xf32>
    %348 = arith.mulf %343, %347 : vector<16x32xf32>
    %349 = vector.broadcast %327 : vector<1x32xf32> to vector<16x32xf32>
    %350 = arith.mulf %348, %349 : vector<16x32xf32>
    %351 = vector.broadcast %328 : vector<1x32xf32> to vector<16x32xf32>
    %352 = arith.addf %350, %351 : vector<16x32xf32>
    %c7_133 = arith.constant 7 : index
    %c0_134 = arith.constant 0 : index
    %c0_135 = arith.constant 0 : index
    %353 = vector.load %arg4[%c7_133, %c0_134, %c0_135] : memref<9x32x32xf32, #tpu.memory_space<vmem>>, vector<1x32x32xf32>
    %354 = vector.shape_cast %353 : vector<1x32x32xf32> to vector<32x32xf32>
    %cst_136 = arith.constant dense<0.000000e+00> : vector<16x32xf32>
    %355 = tpu.matmul %352, %354, %cst_136 {dimension_numbers = #tpu.dot_dimension_numbers<[1], [0], [0], [1], [0, 0, 1, 1], [], []>} : vector<16x32xf32>, vector<32x32xf32>, vector<16x32xf32> -> vector<16x32xf32>
    %c17 = arith.constant 17 : index
    %c0_137 = arith.constant 0 : index
    %356 = vector.load %arg5[%c17, %c0_137] : memref<23x32xf32, #tpu.memory_space<vmem>>, vector<1x32xf32>
    %357 = vector.broadcast %356 : vector<1x32xf32> to vector<16x32xf32>
    %358 = arith.addf %355, %357 : vector<16x32xf32>
    %c18 = arith.constant 18 : index
    %c0_138 = arith.constant 0 : index
    %359 = vector.load %arg5[%c18, %c0_138] : memref<23x32xf32, #tpu.memory_space<vmem>>, vector<1x32xf32>
    %c19 = arith.constant 19 : index
    %c0_139 = arith.constant 0 : index
    %360 = vector.load %arg5[%c19, %c0_139] : memref<23x32xf32, #tpu.memory_space<vmem>>, vector<1x32xf32>
    %cst_140 = arith.constant dense<0.000000e+00> : vector<16xf32>
    %361 = vector.multi_reduction <add>, %358, %cst_140 [1] : vector<16x32xf32> to vector<16xf32>
    %362 = vector.shape_cast %361 : vector<16xf32> to vector<16x1xf32>
    %cst_141 = arith.constant 3.200000e+01 : f32
    %363 = vector.broadcast %cst_141 : f32 to vector<16x1xf32>
    %364 = arith.divf %362, %363 : vector<16x1xf32>
    %365 = vector.broadcast %364 : vector<16x1xf32> to vector<16x32xf32>
    %366 = arith.subf %358, %365 : vector<16x32xf32>
    %367 = vector.broadcast %364 : vector<16x1xf32> to vector<16x32xf32>
    %368 = arith.subf %358, %367 : vector<16x32xf32>
    %369 = arith.mulf %366, %368 : vector<16x32xf32>
    %cst_142 = arith.constant dense<0.000000e+00> : vector<16xf32>
    %370 = vector.multi_reduction <add>, %369, %cst_142 [1] : vector<16x32xf32> to vector<16xf32>
    %371 = vector.shape_cast %370 : vector<16xf32> to vector<16x1xf32>
    %cst_143 = arith.constant 3.200000e+01 : f32
    %372 = vector.broadcast %cst_143 : f32 to vector<16x1xf32>
    %373 = arith.divf %371, %372 : vector<16x1xf32>
    %374 = vector.broadcast %364 : vector<16x1xf32> to vector<16x32xf32>
    %375 = arith.subf %358, %374 : vector<16x32xf32>
    %cst_144 = arith.constant 9.99999974E-6 : f32
    %376 = vector.broadcast %cst_144 : f32 to vector<16x1xf32>
    %377 = arith.addf %373, %376 : vector<16x1xf32>
    %378 = math.rsqrt %377 : vector<16x1xf32>
    %379 = vector.broadcast %378 : vector<16x1xf32> to vector<16x32xf32>
    %380 = arith.mulf %375, %379 : vector<16x32xf32>
    %381 = vector.broadcast %359 : vector<1x32xf32> to vector<16x32xf32>
    %382 = arith.mulf %380, %381 : vector<16x32xf32>
    %383 = vector.broadcast %360 : vector<1x32xf32> to vector<16x32xf32>
    %384 = arith.addf %382, %383 : vector<16x32xf32>
    %cst_145 = arith.constant 0.000000e+00 : f32
    %385 = vector.broadcast %cst_145 : f32 to vector<16x32xf32>
    %386 = arith.maximumf %384, %385 : vector<16x32xf32>
    %c8_146 = arith.constant 8 : index
    %c0_147 = arith.constant 0 : index
    %c0_148 = arith.constant 0 : index
    %387 = vector.load %arg4[%c8_146, %c0_147, %c0_148] : memref<9x32x32xf32, #tpu.memory_space<vmem>>, vector<1x32x32xf32>
    %388 = vector.shape_cast %387 : vector<1x32x32xf32> to vector<32x32xf32>
    %cst_149 = arith.constant dense<0.000000e+00> : vector<16x32xf32>
    %389 = tpu.matmul %386, %388, %cst_149 {dimension_numbers = #tpu.dot_dimension_numbers<[1], [0], [0], [1], [0, 0, 1, 1], [], []>} : vector<16x32xf32>, vector<32x32xf32>, vector<16x32xf32> -> vector<16x32xf32>
    %c20 = arith.constant 20 : index
    %c0_150 = arith.constant 0 : index
    %390 = vector.load %arg5[%c20, %c0_150] : memref<23x32xf32, #tpu.memory_space<vmem>>, vector<1x32xf32>
    %391 = vector.broadcast %390 : vector<1x32xf32> to vector<16x32xf32>
    %392 = arith.addf %389, %391 : vector<16x32xf32>
    %c21 = arith.constant 21 : index
    %c0_151 = arith.constant 0 : index
    %393 = vector.load %arg5[%c21, %c0_151] : memref<23x32xf32, #tpu.memory_space<vmem>>, vector<1x32xf32>
    %c22 = arith.constant 22 : index
    %c0_152 = arith.constant 0 : index
    %394 = vector.load %arg5[%c22, %c0_152] : memref<23x32xf32, #tpu.memory_space<vmem>>, vector<1x32xf32>
    %cst_153 = arith.constant dense<0.000000e+00> : vector<16xf32>
    %395 = vector.multi_reduction <add>, %392, %cst_153 [1] : vector<16x32xf32> to vector<16xf32>
    %396 = vector.shape_cast %395 : vector<16xf32> to vector<16x1xf32>
    %cst_154 = arith.constant 3.200000e+01 : f32
    %397 = vector.broadcast %cst_154 : f32 to vector<16x1xf32>
    %398 = arith.divf %396, %397 : vector<16x1xf32>
    %399 = vector.broadcast %398 : vector<16x1xf32> to vector<16x32xf32>
    %400 = arith.subf %392, %399 : vector<16x32xf32>
    %401 = vector.broadcast %398 : vector<16x1xf32> to vector<16x32xf32>
    %402 = arith.subf %392, %401 : vector<16x32xf32>
    %403 = arith.mulf %400, %402 : vector<16x32xf32>
    %cst_155 = arith.constant dense<0.000000e+00> : vector<16xf32>
    %404 = vector.multi_reduction <add>, %403, %cst_155 [1] : vector<16x32xf32> to vector<16xf32>
    %405 = vector.shape_cast %404 : vector<16xf32> to vector<16x1xf32>
    %cst_156 = arith.constant 3.200000e+01 : f32
    %406 = vector.broadcast %cst_156 : f32 to vector<16x1xf32>
    %407 = arith.divf %405, %406 : vector<16x1xf32>
    %408 = vector.broadcast %398 : vector<16x1xf32> to vector<16x32xf32>
    %409 = arith.subf %392, %408 : vector<16x32xf32>
    %cst_157 = arith.constant 9.99999974E-6 : f32
    %410 = vector.broadcast %cst_157 : f32 to vector<16x1xf32>
    %411 = arith.addf %407, %410 : vector<16x1xf32>
    %412 = math.rsqrt %411 : vector<16x1xf32>
    %413 = vector.broadcast %412 : vector<16x1xf32> to vector<16x32xf32>
    %414 = arith.mulf %409, %413 : vector<16x32xf32>
    %415 = vector.broadcast %393 : vector<1x32xf32> to vector<16x32xf32>
    %416 = arith.mulf %414, %415 : vector<16x32xf32>
    %417 = vector.broadcast %394 : vector<1x32xf32> to vector<16x32xf32>
    %418 = arith.addf %416, %417 : vector<16x32xf32>
    %cst_158 = arith.constant 0.000000e+00 : f32
    %419 = vector.broadcast %cst_158 : f32 to vector<16x32xf32>
    %420 = arith.maximumf %418, %419 : vector<16x32xf32>
    %c0_159 = arith.constant 0 : index
    %c0_160 = arith.constant 0 : index
    %421 = vector.load %arg6[%c0_159, %c0_160] : memref<32x128xf32, #tpu.memory_space<vmem>>, vector<32x128xf32>
    %cst_161 = arith.constant dense<0.000000e+00> : vector<16x128xf32>
    %422 = tpu.matmul %420, %421, %cst_161 {dimension_numbers = #tpu.dot_dimension_numbers<[1], [0], [0], [1], [0, 0, 1, 1], [], []>} : vector<16x32xf32>, vector<32x128xf32>, vector<16x128xf32> -> vector<16x128xf32>
    %c0_162 = arith.constant 0 : index
    %c0_163 = arith.constant 0 : index
    %423 = vector.load %arg7[%c0_162, %c0_163] : memref<1x128xf32, #tpu.memory_space<vmem>>, vector<1x128xf32>
    %424 = vector.broadcast %423 : vector<1x128xf32> to vector<16x128xf32>
    %425 = arith.addf %422, %424 : vector<16x128xf32>
    %c0_164 = arith.constant 0 : index
    %c0_165 = arith.constant 0 : index
    %426 = vector.load %arg8[%c0_164, %c0_165] : memref<16x128xf32, #tpu.memory_space<vmem>>, vector<16x128xf32>
    tpu.vector_store %arg8[%c0_164, %c0_165], %425 {strides = array<i32>} : memref<16x128xf32, #tpu.memory_space<vmem>>, vector<16x128xf32>,
    return
  }
}

</mosaic_0001>

<llo_original>
// kernel: forward.1
$region0: #{forward.1}
  #allocation0 [shape = 'u32[]', space=smem, size = 0x4, offset = 0x4, fixed_abs, tag = 'smem constant byte address 0x4 - core index']
  #allocation1 [shape = 'u32[144,128]{1,0:T(1,128)}', space=vmem, size = 0x12000, scoped, tag = 'internal scratch']
  %s0 = inlined_call_operand.vmem [shape: f32[16,4], index: 0, kind: input, shape index: {}]
  %s1 = inlined_call_operand.vmem [shape: f32[16,16], index: 1, kind: input, shape index: {}]
  %s2 = inlined_call_operand.hbm [shape: f32[2,32,96], index: 2, kind: input, shape index: {}]
  %s3 = inlined_call_operand.hbm [shape: f32[2,96], index: 3, kind: input, shape index: {}]
  %s4 = inlined_call_operand.hbm [shape: f32[9,32,32], index: 4, kind: input, shape index: {}]
  %s5 = inlined_call_operand.vmem [shape: f32[23,32], index: 5, kind: input, shape index: {}]
  %s6 = inlined_call_operand.vmem [shape: f32[32,128], index: 6, kind: input, shape index: {}]
  %s7 = inlined_call_operand.hbm [shape: f32[1,128], index: 7, kind: input, shape index: {}]
  %s8 = inlined_call_operand.vmem [shape: f32[16,128], index: 8, kind: output, shape index: {}]
  %s9 = sld [smem:[#allocation0]]
  $region58: #{forward.1} parent=0
    _
  %s11 = ssub.s32 1, %s9
  %s12 = scalar_select 0, %s11, %s9
  $region1: #{forward.1} parent=0
    #allocation2 [shape = 'u8[32768]{0}', space=vmem, size = 0x8000, scoped, tag = 'input window, operand 2, single buffered']
    #allocation3 [shape = 's32[1]{0}', space=sflag, size = 0x4, scoped, tag = 'scoped memory for forward.1']
    #allocation4 [shape = 'u8[1024]{0}', space=vmem, size = 0x400, scoped, tag = 'input window, operand 3, single buffered']
    #allocation5 [shape = 's32[1]{0}', space=sflag, size = 0x4, scoped, tag = 'scoped memory for forward.1']
    #allocation6 [shape = 'u8[147456]{0}', space=vmem, size = 0x24000, scoped, tag = 'input window, operand 4, single buffered']
    #allocation7 [shape = 'u8[512]{0}', space=vmem, size = 0x400, scoped, tag = 'input window, operand 7, single buffered']
    #allocation8 [shape = 's32[1]{0}', space=sflag, size = 0x4, scoped, tag = 'scoped memory for forward.1']
    %13 = vsyncpa [#allocation3], 0
    %14 = vsyncpa [#allocation5], 0
    %15 = vsyncpa [#allocation8], 0
    // Predicated region
    $region2: #{forward.1} parent=1 // pred_check
      _
    $region3: #{forward.1} parent=1 // pred_check_branch
      %17 = sbr.rel (0) target = $region5
    $region4: #{forward.1} parent=1 // pred_region
      _
    $region5: #{forward.1} parent=1 // pred_fallthru
      _
    // Predicated region
    $region6: #{forward.1} parent=1 // pred_check
      _
    $region7: #{forward.1} parent=1 // pred_check_branch
      %19 = sbr.rel (0) target = $region9
    $region8: #{forward.1} parent=1 // pred_region
      _
    $region9: #{forward.1} parent=1 // pred_fallthru
      _
    // Predicated region
    $region10: #{forward.1} parent=1 // pred_check
      _
    $region11: #{forward.1} parent=1 // pred_check_branch
      %21 = sbr.rel (0) target = $region13
    $region12: #{forward.1} parent=1 // pred_region
      %s23 = ssub.s32 1024, 1024
      %24 = vsyncadd [#allocation3], %s23
      %s25 = sshll.u32 [#allocation2], 4
      %s26 = int_to_ptr.vmem [resolvable:$true] %s25
      %31 = dma.hbm_to_vmem [thread:$0]  %s2, 1024, %s26, [#allocation3], 128, 128, 8
    $region13: #{forward.1} parent=1 // pred_fallthru
      _
    // Predicated region
    $region14: #{forward.1} parent=1 // pred_check
      _
    $region15: #{forward.1} parent=1 // pred_check_branch
      %33 = sbr.rel (0) target = $region17
    $region16: #{forward.1} parent=1 // pred_region
      %s35 = ssub.s32 32, 32
      %36 = vsyncadd [#allocation5], %s35
      %s38 = sshll.u32 [#allocation4], 4
      %s39 = int_to_ptr.vmem [resolvable:$true] %s38
      %41 = dma.hbm_to_vmem [thread:$0]  %s3, 32, %s39, [#allocation5]
    $region17: #{forward.1} parent=1 // pred_fallthru
      _
    // Predicated region
    $region18: #{forward.1} parent=1 // pred_check
      _
    $region19: #{forward.1} parent=1 // pred_check_branch
      %43 = sbr.rel (0) target = $region21
    $region20: #{forward.1} parent=1 // pred_region
      %s45 = ssub.s32 4608, 4608
      %46 = vsyncadd [#allocation5], %s45
      %s47 = sshll.u32 [#allocation6], 4
      %s48 = int_to_ptr.vmem [resolvable:$true] %s47
      %53 = dma.hbm_to_vmem [thread:$0]  %s4, 4608, %s48, [#allocation5], 128, 128, 8
    $region21: #{forward.1} parent=1 // pred_fallthru
      _
    // Predicated region
    $region22: #{forward.1} parent=1 // pred_check
      _
    $region23: #{forward.1} parent=1 // pred_check_branch
      %55 = sbr.rel (0) target = $region25
    $region24: #{forward.1} parent=1 // pred_region
      _
    $region25: #{forward.1} parent=1 // pred_fallthru
      _
    // Predicated region
    $region26: #{forward.1} parent=1 // pred_check
      _
    $region27: #{forward.1} parent=1 // pred_check_branch
      %57 = sbr.rel (0) target = $region29
    $region28: #{forward.1} parent=1 // pred_region
      _
    $region29: #{forward.1} parent=1 // pred_fallthru
      _
    // Predicated region
    $region30: #{forward.1} parent=1 // pred_check
      _
    $region31: #{forward.1} parent=1 // pred_check_branch
      %59 = sbr.rel (0) target = $region33
    $region32: #{forward.1} parent=1 // pred_region
      %s61 = ssub.s32 16, 16
      %62 = vsyncadd [#allocation8], %s61
      %s64 = sshll.u32 [#allocation7], 4
      %s65 = int_to_ptr.vmem [resolvable:$true] %s64
      %67 = dma.hbm_to_vmem [thread:$0]  %s7, 16, %s65, [#allocation8]
    $region33: #{forward.1} parent=1 // pred_fallthru
      _
    // Predicated region
    $region34: #{forward.1} parent=1 // pred_check
      _
    $region35: #{forward.1} parent=1 // pred_check_branch
      %69 = sbr.rel (0) target = $region37
    $region36: #{forward.1} parent=1 // pred_region
      %70 = dma.done [#allocation3], 1024
    $region37: #{forward.1} parent=1 // pred_fallthru
      _
    // Predicated region
    $region38: #{forward.1} parent=1 // pred_check
      _
    $region39: #{forward.1} parent=1 // pred_check_branch
      %72 = sbr.rel (0) target = $region41
    $region40: #{forward.1} parent=1 // pred_region
      %73 = dma.done [#allocation5], 32
    $region41: #{forward.1} parent=1 // pred_fallthru
      _
    // Predicated region
    $region42: #{forward.1} parent=1 // pred_check
      _
    $region43: #{forward.1} parent=1 // pred_check_branch
      %75 = sbr.rel (0) target = $region45
    $region44: #{forward.1} parent=1 // pred_region
      %76 = dma.done [#allocation5], 4608
    $region45: #{forward.1} parent=1 // pred_fallthru
      _
    // Predicated region
    $region46: #{forward.1} parent=1 // pred_check
      _
    $region47: #{forward.1} parent=1 // pred_check_branch
      %78 = sbr.rel (0) target = $region49
    $region48: #{forward.1} parent=1 // pred_region
      %79 = dma.done [#allocation8], 16
    $region49: #{forward.1} parent=1 // pred_fallthru
      _
    %v80 = vld [vmem:[#allocation6] sm:$0xff]
    %v81 = vld [vmem:[%s0] sm:$0xff]
    %v82 = vld [vmem:[%s0 + $0x8] sm:$0xff]
    %v83 = vld [vmem:[%s5] sm:$0x1]
    %v84 = vlaneseq
    %v85 = vshrl.u32 %v84, 7
    %v86 = vsub.s32 0, %v85
    %v87 = vrot.slane %v83, %v86
    %vm88 = vcmask 31744
    %v90 = vsel %vm88, %v81, 0
    %v93 = vsel %vm88, %v82, 0
    %vm95 = vcmask 1043456
    %v97 = vsel %vm95, %v80, 0
    %99 = vmatprep.subr.mxu0 0.0
    %100 = vmatpush1.msra.mxu0 0.0
    %101 = vmatprep.subr.mxu0 0.0
    %102 = vmatpush1.msra.mxu0 0.0
    %103 = vmatprep.subr.mxu0 0.0
    %104 = vmatpush1.msra.mxu0 0.0
    %105 = vmatprep.subr.mxu0 0.0
    %106 = vmatpush1.msra.mxu0 0.0
    %107 = vmatprep.subr.mxu0 0.0
    %108 = vmatpush1.msra.mxu0 0.0
    %109 = vmatprep.subr.mxu0 0.0
    %110 = vmatpush1.msra.mxu0 0.0
    %111 = vmatprep.subr.mxu0 0.0
    %112 = vmatpush1.msra.mxu0 0.0
    %113 = vmatprep.subr.mxu0 0.0
    %114 = vmatpush1.msra.mxu0 0.0
    %115 = vmatprep.subr.mxu0 0.0
    %116 = vmatpush1.msra.mxu0 0.0
    %117 = vmatprep.subr.mxu0 0.0
    %118 = vmatpush1.msra.mxu0 0.0
    %119 = vmatprep.subr.mxu0 0.0
    %120 = vmatpush1.msra.mxu0 0.0
    %121 = vmatprep.subr.mxu0 0.0
    %122 = vmatpush1.msra.mxu0 0.0
    %123 = vmatprep.subr.mxu0 0.0
    %124 = vmatpush1.msra.mxu0 0.0
    %125 = vmatprep.subr.mxu0 0.0
    %126 = vmatpush1.msra.mxu0 0.0
    %127 = vmatprep.subr.mxu0 0.0
    %128 = vmatpush1.msra.mxu0 0.0
    %129 = vmatprep.subr.mxu0 0.0
    %130 = vmatpush1.msra.mxu0 %v97
    %131 = vmatprep.subr.mxu0 0.0
    %132 = vmatpush2.msra.mxu0 0.0
    %133 = vmatprep.subr.mxu0 0.0
    %134 = vmatpush2.msra.mxu0 0.0
    %135 = vmatprep.subr.mxu0 0.0
    %136 = vmatpush2.msra.mxu0 0.0
    %137 = vmatprep.subr.mxu0 0.0
    %138 = vmatpush2.msra.mxu0 0.0
    %139 = vmatprep.subr.mxu0 0.0
    %140 = vmatpush2.msra.mxu0 0.0
    %141 = vmatprep.subr.mxu0 0.0
    %142 = vmatpush2.msra.mxu0 0.0
    %143 = vmatprep.subr.mxu0 0.0
    %144 = vmatpush2.msra.mxu0 0.0
    %145 = vmatprep.subr.mxu0 0.0
    %146 = vmatpush2.msra.mxu0 0.0
    %147 = vmatprep.subr.mxu0 0.0
    %148 = vmatpush2.msra.mxu0 0.0
    %149 = vmatprep.subr.mxu0 0.0
    %150 = vmatpush2.msra.mxu0 0.0
    %151 = vmatprep.subr.mxu0 0.0
    %152 = vmatpush2.msra.mxu0 0.0
    %153 = vmatprep.subr.mxu0 0.0
    %154 = vmatpush2.msra.mxu0 0.0
    %155 = vmatprep.subr.mxu0 0.0
    %156 = vmatpush2.msra.mxu0 0.0
    %157 = vmatprep.subr.mxu0 0.0
    %158 = vmatpush2.msra.mxu0 0.0
    %159 = vmatprep.subr.mxu0 0.0
    %160 = vmatpush2.msra.mxu0 0.0
    %161 = vmatprep.subr.mxu0 0.0
    %162 = vmatpush2.msra.mxu0 0.0
    %163 = vmatprep.mubr.f32.mxu0 0.0
    %164 = vmatmul.mubr.f32.gmra.mxu0 %v90
    %v165 = vpop.f32.mrf.mxu0
    %v166 = vadd.f32 %v87, %v165
    %v167 = vpop.f32.mrf.mxu0
    %168 = vmatprep.mubr.f32.mxu0 0.0
    %169 = vmatmul.mubr.f32.gmra.mxu0 %v93
    %v170 = vpop.f32.mrf.mxu0
    %v171 = vadd.f32 %v87, %v170
    %v172 = vpop.f32.mrf.mxu0
    %173 = vdwg.mxu0
    %v174 = vld [vmem:[%s5 + $0x1] sm:$0x1]
    %v175 = vld [vmem:[%s5 + $0x2] sm:$0x1]
    %vm176 = vcmask 261120
    %v177 = vsel %vm176, %v166, 0.0
    %178 = vadd.xlane.f32.xlu0 %v177
    %v179 = vpop.xlane.xlu0 %178
    %v180 = vsel %vm176, %v171, 0.0
    %181 = vadd.xlane.f32.xlu0 %v180
    %v182 = vpop.xlane.xlu0 %181
    %v183 = vrcp.pop 32.0
    %v184 = vmul.f32 %v179, %v183
    %v185 = vmul.f32 %v182, %v183
    %v186 = vsub.f32 %v166, %v184
    %v187 = vsub.f32 %v171, %v185
    %v188 = vmul.f32 %v186, %v186
    %v189 = vmul.f32 %v187, %v187
    %v190 = vsel %vm176, %v188, 0.0
    %191 = vadd.xlane.f32.xlu0 %v190
    %v192 = vpop.xlane.xlu0 %191
    %v193 = vsel %vm176, %v189, 0.0
    %194 = vadd.xlane.f32.xlu0 %v193
    %v195 = vpop.xlane.xlu0 %194
    %v196 = vmul.f32 %v192, %v183
    %v197 = vmul.f32 %v195, %v183
    %v198 = vadd.f32 %v196, 1e-05
    %v199 = vadd.f32 %v197, 1e-05
    %v200 = vrsqrt.pop %v198
    %v201 = vrsqrt.pop %v199
    %v202 = vmul.f32 %v186, %v200
    %v203 = vmul.f32 %v187, %v201
    %v204 = vlaneseq
    %v205 = vshrl.u32 %v204, 7
    %v206 = vsub.s32 0, %v205
    %v207 = vrot.slane %v174, %v206
    %v208 = vmul.f32 %v202, %v207
    %v209 = vmul.f32 %v203, %v207
    %v210 = vlaneseq
    %v211 = vshrl.u32 %v210, 7
    %v212 = vsub.s32 0, %v211
    %v213 = vrot.slane %v175, %v212
    %v214 = vadd.f32 %v208, %v213
    %v215 = vadd.f32 %v209, %v213
    %v216 = vld [vmem:[%s1] sm:$0xff]
    %v217 = vld [vmem:[%s1 + $0x8] sm:$0xff]
    %v218 = vld [vmem:[#allocation2] sm:$0xff]
    %v219 = vld [vmem:[#allocation2 + $0x8] sm:$0xff]
    %v220 = vld [vmem:[#allocation2 + $0x10] sm:$0xff]
    %v221 = vld [vmem:[#allocation2 + $0x18] sm:$0xff]
    %v222 = vld [vmem:[#allocation4] sm:$0x1]
    %v223 = vlaneseq
    %v224 = vshrl.u32 %v223, 7
    %v225 = vsub.s32 0, %v224
    %v226 = vrot.slane %v222, %v225
    %v228 = vsel %vm176, %v214, 0
    %v231 = vsel %vm176, %v215, 0
    %233 = vmatprep.subr.mxu0 0.0
    %234 = vmatpush1.msra.mxu0 0.0
    %235 = vmatprep.subr.mxu0 0.0
    %236 = vmatpush1.msra.mxu0 0.0
    %237 = vmatprep.subr.mxu0 0.0
    %238 = vmatpush1.msra.mxu0 0.0
    %239 = vmatprep.subr.mxu0 0.0
    %240 = vmatpush1.msra.mxu0 0.0
    %241 = vmatprep.subr.mxu0 0.0
    %242 = vmatpush1.msra.mxu0 0.0
    %243 = vmatprep.subr.mxu0 0.0
    %244 = vmatpush1.msra.mxu0 0.0
    %245 = vmatprep.subr.mxu0 0.0
    %246 = vmatpush1.msra.mxu0 0.0
    %247 = vmatprep.subr.mxu0 0.0
    %248 = vmatpush1.msra.mxu0 0.0
    %249 = vmatprep.subr.mxu0 0.0
    %250 = vmatpush1.msra.mxu0 0.0
    %251 = vmatprep.subr.mxu0 0.0
    %252 = vmatpush1.msra.mxu0 0.0
    %253 = vmatprep.subr.mxu0 0.0
    %254 = vmatpush1.msra.mxu0 0.0
    %255 = vmatprep.subr.mxu0 0.0
    %256 = vmatpush1.msra.mxu0 0.0
    %257 = vmatprep.subr.mxu0 0.0
    %258 = vmatpush1.msra.mxu0 %v221
    %259 = vmatprep.subr.mxu0 0.0
    %260 = vmatpush1.msra.mxu0 %v220
    %261 = vmatprep.subr.mxu0 0.0
    %262 = vmatpush1.msra.mxu0 %v219
    %263 = vmatprep.subr.mxu0 0.0
    %264 = vmatpush1.msra.mxu0 %v218
    %265 = vmatprep.subr.mxu0 0.0
    %266 = vmatpush2.msra.mxu0 0.0
    %267 = vmatprep.subr.mxu0 0.0
    %268 = vmatpush2.msra.mxu0 0.0
    %269 = vmatprep.subr.mxu0 0.0
    %270 = vmatpush2.msra.mxu0 0.0
    %271 = vmatprep.subr.mxu0 0.0
    %272 = vmatpush2.msra.mxu0 0.0
    %273 = vmatprep.subr.mxu0 0.0
    %274 = vmatpush2.msra.mxu0 0.0
    %275 = vmatprep.subr.mxu0 0.0
    %276 = vmatpush2.msra.mxu0 0.0
    %277 = vmatprep.subr.mxu0 0.0
    %278 = vmatpush2.msra.mxu0 0.0
    %279 = vmatprep.subr.mxu0 0.0
    %280 = vmatpush2.msra.mxu0 0.0
    %281 = vmatprep.subr.mxu0 0.0
    %282 = vmatpush2.msra.mxu0 0.0
    %283 = vmatprep.subr.mxu0 0.0
    %284 = vmatpush2.msra.mxu0 0.0
    %285 = vmatprep.subr.mxu0 0.0
    %286 = vmatpush2.msra.mxu0 0.0
    %287 = vmatprep.subr.mxu0 0.0
    %288 = vmatpush2.msra.mxu0 0.0
    %289 = vmatprep.subr.mxu0 0.0
    %290 = vmatpush2.msra.mxu0 0.0
    %291 = vmatprep.subr.mxu0 0.0
    %292 = vmatpush2.msra.mxu0 0.0
    %293 = vmatprep.subr.mxu0 0.0
    %294 = vmatpush2.msra.mxu0 0.0
    %295 = vmatprep.subr.mxu0 0.0
    %296 = vmatpush2.msra.mxu0 0.0
    %297 = vmatprep.mubr.f32.mxu0 0.0
    %298 = vmatmul.mubr.f32.gmra.mxu0 %v228
    %v299 = vpop.f32.mrf.mxu0
    %v300 = vadd.f32 %v226, %v299
    %v301 = vpop.f32.mrf.mxu0
    %302 = vmatprep.mubr.f32.mxu0 0.0
    %303 = vmatmul.mubr.f32.gmra.mxu0 %v231
    %v304 = vpop.f32.mrf.mxu0
    %v305 = vadd.f32 %v226, %v304
    %v306 = vpop.f32.mrf.mxu0
    %307 = vdwg.mxu0
    %s308 = scalar_lea.vmem [#allocation6], 32
    %v309 = vld [vmem:[%s308] sm:$0xff]
    %v310 = vld [vmem:[%s308 + $0x8] sm:$0xff]
    %v311 = vld [vmem:[%s308 + $0x10] sm:$0xff]
    %v312 = vld [vmem:[%s308 + $0x18] sm:$0xff]
    %315 = vrot.lane.b32.xlu0 %v300, 120
    %v316 = vpop.permute.xlu0 %315
    %317 = vrot.lane.b32.xlu0 %v305, 120
    %v318 = vpop.permute.xlu0 %317
    %vm319 = vcmask 64512
    %v320 = vsel %vm319, %v300, 0
    %v322 = vsel %vm319, %v305, 0
    %v324 = vsel %vm319, %v316, 0
    %v326 = vsel %vm319, %v318, 0
    %328 = vmatprep.subr.mxu0 0.0
    %329 = vmatpush1.xpose.msra.mxu0 0.0
    %330 = vmatprep.subr.mxu0 0.0
    %331 = vmatpush1.xpose.msra.mxu0 0.0
    %332 = vmatprep.subr.mxu0 0.0
    %333 = vmatpush1.xpose.msra.mxu0 0.0
    %334 = vmatprep.subr.mxu0 0.0
    %335 = vmatpush1.xpose.msra.mxu0 0.0
    %336 = vmatprep.subr.mxu0 0.0
    %337 = vmatpush1.xpose.msra.mxu0 0.0
    %338 = vmatprep.subr.mxu0 0.0
    %339 = vmatpush1.xpose.msra.mxu0 0.0
    %340 = vmatprep.subr.mxu0 0.0
    %341 = vmatpush1.xpose.msra.mxu0 0.0
    %342 = vmatprep.subr.mxu0 0.0
    %343 = vmatpush1.xpose.msra.mxu0 0.0
    %344 = vmatprep.subr.mxu0 0.0
    %345 = vmatpush1.xpose.msra.mxu0 0.0
    %346 = vmatprep.subr.mxu0 0.0
    %347 = vmatpush1.xpose.msra.mxu0 0.0
    %348 = vmatprep.subr.mxu0 0.0
    %349 = vmatpush1.xpose.msra.mxu0 0.0
    %350 = vmatprep.subr.mxu0 0.0
    %351 = vmatpush1.xpose.msra.mxu0 0.0
    %352 = vmatprep.subr.mxu0 0.0
    %353 = vmatpush1.xpose.msra.mxu0 0.0
    %354 = vmatprep.subr.mxu0 0.0
    %355 = vmatpush1.xpose.msra.mxu0 0.0
    %356 = vmatprep.subr.mxu0 0.0
    %357 = vmatpush1.xpose.msra.mxu0 %v326
    %358 = vmatprep.subr.mxu0 0.0
    %359 = vmatpush1.xpose.msra.mxu0 %v324
    %360 = vmatprep.subr.mxu0 0.0
    %361 = vmatpush2.xpose.msra.mxu0 0.0
    %362 = vmatprep.subr.mxu0 0.0
    %363 = vmatpush2.xpose.msra.mxu0 0.0
    %364 = vmatprep.subr.mxu0 0.0
    %365 = vmatpush2.xpose.msra.mxu0 0.0
    %366 = vmatprep.subr.mxu0 0.0
    %367 = vmatpush2.xpose.msra.mxu0 0.0
    %368 = vmatprep.subr.mxu0 0.0
    %369 = vmatpush2.xpose.msra.mxu0 0.0
    %370 = vmatprep.subr.mxu0 0.0
    %371 = vmatpush2.xpose.msra.mxu0 0.0
    %372 = vmatprep.subr.mxu0 0.0
    %373 = vmatpush2.xpose.msra.mxu0 0.0
    %374 = vmatprep.subr.mxu0 0.0
    %375 = vmatpush2.xpose.msra.mxu0 0.0
    %376 = vmatprep.subr.mxu0 0.0
    %377 = vmatpush2.xpose.msra.mxu0 0.0
    %378 = vmatprep.subr.mxu0 0.0
    %379 = vmatpush2.xpose.msra.mxu0 0.0
    %380 = vmatprep.subr.mxu0 0.0
    %381 = vmatpush2.xpose.msra.mxu0 0.0
    %382 = vmatprep.subr.mxu0 0.0
    %383 = vmatpush2.xpose.msra.mxu0 0.0
    %384 = vmatprep.subr.mxu0 0.0
    %385 = vmatpush2.xpose.msra.mxu0 0.0
    %386 = vmatprep.subr.mxu0 0.0
    %387 = vmatpush2.xpose.msra.mxu0 0.0
    %388 = vmatprep.subr.mxu0 0.0
    %389 = vmatpush2.xpose.msra.mxu0 0.0
    %390 = vmatprep.subr.mxu0 0.0
    %391 = vmatpush2.xpose.msra.mxu0 0.0
    %392 = vmatprep.mubr.f32.mxu0 0.0
    %393 = vmatmul.mubr.f32.gmra.mxu0 %v320
    %v394 = vpop.f32.mrf.mxu0
    %v395 = vadd.f32 0.0, %v394
    %v396 = vpop.f32.mrf.mxu0
    %397 = vmatprep.mubr.f32.mxu0 0.0
    %398 = vmatmul.mubr.f32.gmra.mxu0 %v322
    %v399 = vpop.f32.mrf.mxu0
    %v400 = vadd.f32 0.0, %v399
    %v401 = vpop.f32.mrf.mxu0
    %402 = vdwg.mxu0
    %v403 = vmul.f32 %v395, 0.35355338
    %v404 = vmul.f32 %v400, 0.35355338
    %v405 = vadd.f32 %v403, %v216
    %v406 = vadd.f32 %v404, %v217
    %v407 = vmul.f32 %v405, 1.442695
    %v408 = vpow.pop %v407
    %v409 = vmul.f32 %v406, 1.442695
    %v410 = vpow.pop %v409
    %vm411 = vcmask 130048
    %v412 = vsel %vm411, %v408, 0.0
    %413 = vadd.xlane.f32.xlu0 %v412
    %v414 = vpop.xlane.xlu0 %413
    %v415 = vsel %vm411, %v410, 0.0
    %416 = vadd.xlane.f32.xlu0 %v415
    %v417 = vpop.xlane.xlu0 %416
    %v418 = vrcp.pop %v414
    %v419 = vrcp.pop %v417
    %v420 = vmul.f32 %v408, %v418
    %v421 = vmul.f32 %v410, %v419
    %422 = vrot.lane.b32.xlu0 %v300, 112
    %v423 = vpop.permute.xlu0 %422
    %424 = vrot.lane.b32.xlu0 %v305, 112
    %v425 = vpop.permute.xlu0 %424
    %v429 = vsel %vm411, %v420, 0
    %v432 = vsel %vm411, %v421, 0
    %434 = vmatprep.subr.mxu0 0.0
    %435 = vmatpush1.msra.mxu0 0.0
    %436 = vmatprep.subr.mxu0 0.0
    %437 = vmatpush1.msra.mxu0 0.0
    %438 = vmatprep.subr.mxu0 0.0
    %439 = vmatpush1.msra.mxu0 0.0
    %440 = vmatprep.subr.mxu0 0.0
    %441 = vmatpush1.msra.mxu0 0.0
    %442 = vmatprep.subr.mxu0 0.0
    %443 = vmatpush1.msra.mxu0 0.0
    %444 = vmatprep.subr.mxu0 0.0
    %445 = vmatpush1.msra.mxu0 0.0
    %446 = vmatprep.subr.mxu0 0.0
    %447 = vmatpush1.msra.mxu0 0.0
    %448 = vmatprep.subr.mxu0 0.0
    %449 = vmatpush1.msra.mxu0 0.0
    %450 = vmatprep.subr.mxu0 0.0
    %451 = vmatpush1.msra.mxu0 0.0
    %452 = vmatprep.subr.mxu0 0.0
    %453 = vmatpush1.msra.mxu0 0.0
    %454 = vmatprep.subr.mxu0 0.0
    %455 = vmatpush1.msra.mxu0 0.0
    %456 = vmatprep.subr.mxu0 0.0
    %457 = vmatpush1.msra.mxu0 0.0
    %458 = vmatprep.subr.mxu0 0.0
    %459 = vmatpush1.msra.mxu0 0.0
    %460 = vmatprep.subr.mxu0 0.0
    %461 = vmatpush1.msra.mxu0 0.0
    %462 = vmatprep.subr.mxu0 0.0
    %463 = vmatpush1.msra.mxu0 %v425
    %464 = vmatprep.subr.mxu0 0.0
    %465 = vmatpush1.msra.mxu0 %v423
    %466 = vmatprep.subr.mxu0 0.0
    %467 = vmatpush2.msra.mxu0 0.0
    %468 = vmatprep.subr.mxu0 0.0
    %469 = vmatpush2.msra.mxu0 0.0
    %470 = vmatprep.subr.mxu0 0.0
    %471 = vmatpush2.msra.mxu0 0.0
    %472 = vmatprep.subr.mxu0 0.0
    %473 = vmatpush2.msra.mxu0 0.0
    %474 = vmatprep.subr.mxu0 0.0
    %475 = vmatpush2.msra.mxu0 0.0
    %476 = vmatprep.subr.mxu0 0.0
    %477 = vmatpush2.msra.mxu0 0.0
    %478 = vmatprep.subr.mxu0 0.0
    %479 = vmatpush2.msra.mxu0 0.0
    %480 = vmatprep.subr.mxu0 0.0
    %481 = vmatpush2.msra.mxu0 0.0
    %482 = vmatprep.subr.mxu0 0.0
    %483 = vmatpush2.msra.mxu0 0.0
    %484 = vmatprep.subr.mxu0 0.0
    %485 = vmatpush2.msra.mxu0 0.0
    %486 = vmatprep.subr.mxu0 0.0
    %487 = vmatpush2.msra.mxu0 0.0
    %488 = vmatprep.subr.mxu0 0.0
    %489 = vmatpush2.msra.mxu0 0.0
    %490 = vmatprep.subr.mxu0 0.0
    %491 = vmatpush2.msra.mxu0 0.0
    %492 = vmatprep.subr.mxu0 0.0
    %493 = vmatpush2.msra.mxu0 0.0
    %494 = vmatprep.subr.mxu0 0.0
    %495 = vmatpush2.msra.mxu0 0.0
    %496 = vmatprep.subr.mxu0 0.0
    %497 = vmatpush2.msra.mxu0 0.0
    %498 = vmatprep.mubr.f32.mxu0 0.0
    %499 = vmatmul.mubr.f32.gmra.mxu0 %v429
    %v500 = vpop.f32.mrf.mxu0
    %v501 = vadd.f32 0.0, %v500
    %v502 = vpop.f32.mrf.mxu0
    %503 = vmatprep.mubr.f32.mxu0 0.0
    %504 = vmatmul.mubr.f32.gmra.mxu0 %v432
    %v505 = vpop.f32.mrf.mxu0
    %v506 = vadd.f32 0.0, %v505
    %v507 = vpop.f32.mrf.mxu0
    %508 = vdwg.mxu0
    %509 = vrot.lane.b32.xlu0 %v300, 104
    %v510 = vpop.permute.xlu0 %509
    %511 = vrot.lane.b32.xlu0 %v305, 104
    %v512 = vpop.permute.xlu0 %511
    %513 = vrot.lane.b32.xlu0 %v300, 96
    %v514 = vpop.permute.xlu0 %513
    %515 = vrot.lane.b32.xlu0 %v305, 96
    %v516 = vpop.permute.xlu0 %515
    %v517 = vsel %vm319, %v510, 0
    %v519 = vsel %vm319, %v512, 0
    %v521 = vsel %vm319, %v514, 0
    %v523 = vsel %vm319, %v516, 0
    %525 = vmatprep.subr.mxu0 0.0
    %526 = vmatpush1.xpose.msra.mxu0 0.0
    %527 = vmatprep.subr.mxu0 0.0
    %528 = vmatpush1.xpose.msra.mxu0 0.0
    %529 = vmatprep.subr.mxu0 0.0
    %530 = vmatpush1.xpose.msra.mxu0 0.0
    %531 = vmatprep.subr.mxu0 0.0
    %532 = vmatpush1.xpose.msra.mxu0 0.0
    %533 = vmatprep.subr.mxu0 0.0
    %534 = vmatpush1.xpose.msra.mxu0 0.0
    %535 = vmatprep.subr.mxu0 0.0
    %536 = vmatpush1.xpose.msra.mxu0 0.0
    %537 = vmatprep.subr.mxu0 0.0
    %538 = vmatpush1.xpose.msra.mxu0 0.0
    %539 = vmatprep.subr.mxu0 0.0
    %540 = vmatpush1.xpose.msra.mxu0 0.0
    %541 = vmatprep.subr.mxu0 0.0
    %542 = vmatpush1.xpose.msra.mxu0 0.0
    %543 = vmatprep.subr.mxu0 0.0
    %544 = vmatpush1.xpose.msra.mxu0 0.0
    %545 = vmatprep.subr.mxu0 0.0
    %546 = vmatpush1.xpose.msra.mxu0 0.0
    %547 = vmatprep.subr.mxu0 0.0
    %548 = vmatpush1.xpose.msra.mxu0 0.0
    %549 = vmatprep.subr.mxu0 0.0
    %550 = vmatpush1.xpose.msra.mxu0 0.0
    %551 = vmatprep.subr.mxu0 0.0
    %552 = vmatpush1.xpose.msra.mxu0 0.0
    %553 = vmatprep.subr.mxu0 0.0
    %554 = vmatpush1.xpose.msra.mxu0 %v523
    %555 = vmatprep.subr.mxu0 0.0
    %556 = vmatpush1.xpose.msra.mxu0 %v521
    %557 = vmatprep.subr.mxu0 0.0
    %558 = vmatpush2.xpose.msra.mxu0 0.0
    %559 = vmatprep.subr.mxu0 0.0
    %560 = vmatpush2.xpose.msra.mxu0 0.0
    %561 = vmatprep.subr.mxu0 0.0
    %562 = vmatpush2.xpose.msra.mxu0 0.0
    %563 = vmatprep.subr.mxu0 0.0
    %564 = vmatpush2.xpose.msra.mxu0 0.0
    %565 = vmatprep.subr.mxu0 0.0
    %566 = vmatpush2.xpose.msra.mxu0 0.0
    %567 = vmatprep.subr.mxu0 0.0
    %568 = vmatpush2.xpose.msra.mxu0 0.0
    %569 = vmatprep.subr.mxu0 0.0
    %570 = vmatpush2.xpose.msra.mxu0 0.0
    %571 = vmatprep.subr.mxu0 0.0
    %572 = vmatpush2.xpose.msra.mxu0 0.0
    %573 = vmatprep.subr.mxu0 0.0
    %574 = vmatpush2.xpose.msra.mxu0 0.0
    %575 = vmatprep.subr.mxu0 0.0
    %576 = vmatpush2.xpose.msra.mxu0 0.0
    %577 = vmatprep.subr.mxu0 0.0
    %578 = vmatpush2.xpose.msra.mxu0 0.0
    %579 = vmatprep.subr.mxu0 0.0
    %580 = vmatpush2.xpose.msra.mxu0 0.0
    %581 = vmatprep.subr.mxu0 0.0
    %582 = vmatpush2.xpose.msra.mxu0 0.0
    %583 = vmatprep.subr.mxu0 0.0
    %584 = vmatpush2.xpose.msra.mxu0 0.0
    %585 = vmatprep.subr.mxu0 0.0
    %586 = vmatpush2.xpose.msra.mxu0 0.0
    %587 = vmatprep.subr.mxu0 0.0
    %588 = vmatpush2.xpose.msra.mxu0 0.0
    %589 = vmatprep.mubr.f32.mxu0 0.0
    %590 = vmatmul.mubr.f32.gmra.mxu0 %v517
    %v591 = vpop.f32.mrf.mxu0
    %v592 = vadd.f32 0.0, %v591
    %v593 = vpop.f32.mrf.mxu0
    %594 = vmatprep.mubr.f32.mxu0 0.0
    %595 = vmatmul.mubr.f32.gmra.mxu0 %v519
    %v596 = vpop.f32.mrf.mxu0
    %v597 = vadd.f32 0.0, %v596
    %v598 = vpop.f32.mrf.mxu0
    %599 = vdwg.mxu0
    %v600 = vmul.f32 %v592, 0.35355338
    %v601 = vmul.f32 %v597, 0.35355338
    %v602 = vadd.f32 %v600, %v216
    %v603 = vadd.f32 %v601, %v217
    %v604 = vmul.f32 %v602, 1.442695
    %v605 = vpow.pop %v604
    %v606 = vmul.f32 %v603, 1.442695
    %v607 = vpow.pop %v606
    %v608 = vsel %vm411, %v605, 0.0
    %609 = vadd.xlane.f32.xlu0 %v608
    %v610 = vpop.xlane.xlu0 %609
    %v611 = vsel %vm411, %v607, 0.0
    %612 = vadd.xlane.f32.xlu0 %v611
    %v613 = vpop.xlane.xlu0 %612
    %v614 = vrcp.pop %v610
    %v615 = vrcp.pop %v613
    %v616 = vmul.f32 %v605, %v614
    %v617 = vmul.f32 %v607, %v615
    %618 = vrot.lane.b32.xlu0 %v300, 88
    %v619 = vpop.permute.xlu0 %618
    %620 = vrot.lane.b32.xlu0 %v305, 88
    %v621 = vpop.permute.xlu0 %620
    %v625 = vsel %vm411, %v616, 0
    %v628 = vsel %vm411, %v617, 0
    %630 = vmatprep.subr.mxu0 0.0
    %631 = vmatpush1.msra.mxu0 0.0
    %632 = vmatprep.subr.mxu0 0.0
    %633 = vmatpush1.msra.mxu0 0.0
    %634 = vmatprep.subr.mxu0 0.0
    %635 = vmatpush1.msra.mxu0 0.0
    %636 = vmatprep.subr.mxu0 0.0
    %637 = vmatpush1.msra.mxu0 0.0
    %638 = vmatprep.subr.mxu0 0.0
    %639 = vmatpush1.msra.mxu0 0.0
    %640 = vmatprep.subr.mxu0 0.0
    %641 = vmatpush1.msra.mxu0 0.0
    %642 = vmatprep.subr.mxu0 0.0
    %643 = vmatpush1.msra.mxu0 0.0
    %644 = vmatprep.subr.mxu0 0.0
    %645 = vmatpush1.msra.mxu0 0.0
    %646 = vmatprep.subr.mxu0 0.0
    %647 = vmatpush1.msra.mxu0 0.0
    %648 = vmatprep.subr.mxu0 0.0
    %649 = vmatpush1.msra.mxu0 0.0
    %650 = vmatprep.subr.mxu0 0.0
    %651 = vmatpush1.msra.mxu0 0.0
    %652 = vmatprep.subr.mxu0 0.0
    %653 = vmatpush1.msra.mxu0 0.0
    %654 = vmatprep.subr.mxu0 0.0
    %655 = vmatpush1.msra.mxu0 0.0
    %656 = vmatprep.subr.mxu0 0.0
    %657 = vmatpush1.msra.mxu0 0.0
    %658 = vmatprep.subr.mxu0 0.0
    %659 = vmatpush1.msra.mxu0 %v621
    %660 = vmatprep.subr.mxu0 0.0
    %661 = vmatpush1.msra.mxu0 %v619
    %662 = vmatprep.subr.mxu0 0.0
    %663 = vmatpush2.msra.mxu0 0.0
    %664 = vmatprep.subr.mxu0 0.0
    %665 = vmatpush2.msra.mxu0 0.0
    %666 = vmatprep.subr.mxu0 0.0
    %667 = vmatpush2.msra.mxu0 0.0
    %668 = vmatprep.subr.mxu0 0.0
    %669 = vmatpush2.msra.mxu0 0.0
    %670 = vmatprep.subr.mxu0 0.0
    %671 = vmatpush2.msra.mxu0 0.0
    %672 = vmatprep.subr.mxu0 0.0
    %673 = vmatpush2.msra.mxu0 0.0
    %674 = vmatprep.subr.mxu0 0.0
    %675 = vmatpush2.msra.mxu0 0.0
    %676 = vmatprep.subr.mxu0 0.0
    %677 = vmatpush2.msra.mxu0 0.0
    %678 = vmatprep.subr.mxu0 0.0
    %679 = vmatpush2.msra.mxu0 0.0
    %680 = vmatprep.subr.mxu0 0.0
    %681 = vmatpush2.msra.mxu0 0.0
    %682 = vmatprep.subr.mxu0 0.0
    %683 = vmatpush2.msra.mxu0 0.0
    %684 = vmatprep.subr.mxu0 0.0
    %685 = vmatpush2.msra.mxu0 0.0
    %686 = vmatprep.subr.mxu0 0.0
    %687 = vmatpush2.msra.mxu0 0.0
    %688 = vmatprep.subr.mxu0 0.0
    %689 = vmatpush2.msra.mxu0 0.0
    %690 = vmatprep.subr.mxu0 0.0
    %691 = vmatpush2.msra.mxu0 0.0
    %692 = vmatprep.subr.mxu0 0.0
    %693 = vmatpush2.msra.mxu0 0.0
    %694 = vmatprep.mubr.f32.mxu0 0.0
    %695 = vmatmul.mubr.f32.gmra.mxu0 %v625
    %v696 = vpop.f32.mrf.mxu0
    %v697 = vadd.f32 0.0, %v696
    %v698 = vpop.f32.mrf.mxu0
    %699 = vmatprep.mubr.f32.mxu0 0.0
    %700 = vmatmul.mubr.f32.gmra.mxu0 %v628
    %v701 = vpop.f32.mrf.mxu0
    %v702 = vadd.f32 0.0, %v701
    %v703 = vpop.f32.mrf.mxu0
    %704 = vdwg.mxu0
    %v706 = vsel %vm319, %v697, 0
    %v709 = vsel %vm319, %v702, 0
    %711 = vmatprep.subr.mxu0 0.0
    %712 = vmatpush1.msra.mxu0 0.0
    %713 = vmatprep.subr.mxu0 0.0
    %714 = vmatpush1.msra.mxu0 0.0
    %715 = vmatprep.subr.mxu0 0.0
    %716 = vmatpush1.msra.mxu0 0.0
    %717 = vmatprep.subr.mxu0 0.0
    %718 = vmatpush1.msra.mxu0 0.0
    %719 = vmatprep.subr.mxu0 0.0
    %720 = vmatpush1.msra.mxu0 0.0
    %721 = vmatprep.subr.mxu0 0.0
    %722 = vmatpush1.msra.mxu0 0.0
    %723 = vmatprep.subr.mxu0 0.0
    %724 = vmatpush1.msra.mxu0 0.0
    %725 = vmatprep.subr.mxu0 0.0
    %726 = vmatpush1.msra.mxu0 0.0
    %727 = vmatprep.subr.mxu0 0.0
    %728 = vmatpush1.msra.mxu0 0.0
    %729 = vmatprep.subr.mxu0 0.0
    %730 = vmatpush1.msra.mxu0 0.0
    %731 = vmatprep.subr.mxu0 0.0
    %732 = vmatpush1.msra.mxu0 0.0
    %733 = vmatprep.subr.mxu0 0.0
    %734 = vmatpush1.msra.mxu0 0.0
    %735 = vmatprep.subr.mxu0 0.0
    %736 = vmatpush1.msra.mxu0 0.0
    %737 = vmatprep.subr.mxu0 0.0
    %738 = vmatpush1.msra.mxu0 0.0
    %739 = vmatprep.subr.mxu0 0.0
    %740 = vmatpush1.msra.mxu0 0.0
    %741 = vmatprep.subr.mxu0 0.0
    %742 = vmatpush1.msra.mxu0 %v310
    %743 = vmatprep.subr.mxu0 0.0
    %744 = vmatpush2.msra.mxu0 0.0
    %745 = vmatprep.subr.mxu0 0.0
    %746 = vmatpush2.msra.mxu0 0.0
    %747 = vmatprep.subr.mxu0 0.0
    %748 = vmatpush2.msra.mxu0 0.0
    %749 = vmatprep.subr.mxu0 0.0
    %750 = vmatpush2.msra.mxu0 0.0
    %751 = vmatprep.subr.mxu0 0.0
    %752 = vmatpush2.msra.mxu0 0.0
    %753 = vmatprep.subr.mxu0 0.0
    %754 = vmatpush2.msra.mxu0 0.0
    %755 = vmatprep.subr.mxu0 0.0
    %756 = vmatpush2.msra.mxu0 0.0
    %757 = vmatprep.subr.mxu0 0.0
    %758 = vmatpush2.msra.mxu0 0.0
    %759 = vmatprep.subr.mxu0 0.0
    %760 = vmatpush2.msra.mxu0 0.0
    %761 = vmatprep.subr.mxu0 0.0
    %762 = vmatpush2.msra.mxu0 0.0
    %763 = vmatprep.subr.mxu0 0.0
    %764 = vmatpush2.msra.mxu0 0.0
    %765 = vmatprep.subr.mxu0 0.0
    %766 = vmatpush2.msra.mxu0 0.0
    %767 = vmatprep.subr.mxu0 0.0
    %768 = vmatpush2.msra.mxu0 0.0
    %769 = vmatprep.subr.mxu0 0.0
    %770 = vmatpush2.msra.mxu0 0.0
    %771 = vmatprep.subr.mxu0 0.0
    %772 = vmatpush2.msra.mxu0 0.0
    %773 = vmatprep.subr.mxu0 0.0
    %774 = vmatpush2.msra.mxu0 0.0
    %775 = vmatprep.mubr.f32.mxu0 0.0
    %776 = vmatmul.mubr.f32.gmra.mxu0 %v706
    %v777 = vpop.f32.mrf.mxu0
    %v778 = vadd.f32 0.0, %v777
    %v779 = vpop.f32.mrf.mxu0
    %780 = vmatprep.mubr.f32.mxu0 0.0
    %781 = vmatmul.mubr.f32.gmra.mxu0 %v709
    %v782 = vpop.f32.mrf.mxu0
    %v783 = vadd.f32 0.0, %v782
    %v784 = vpop.f32.mrf.mxu0
    %785 = vdwg.mxu0
    %v787 = vsel %vm319, %v501, 0
    %v790 = vsel %vm319, %v506, 0
    %792 = vmatprep.subr.mxu0 0.0
    %793 = vmatpush1.msra.mxu0 0.0
    %794 = vmatprep.subr.mxu0 0.0
    %795 = vmatpush1.msra.mxu0 0.0
    %796 = vmatprep.subr.mxu0 0.0
    %797 = vmatpush1.msra.mxu0 0.0
    %798 = vmatprep.subr.mxu0 0.0
    %799 = vmatpush1.msra.mxu0 0.0
    %800 = vmatprep.subr.mxu0 0.0
    %801 = vmatpush1.msra.mxu0 0.0
    %802 = vmatprep.subr.mxu0 0.0
    %803 = vmatpush1.msra.mxu0 0.0
    %804 = vmatprep.subr.mxu0 0.0
    %805 = vmatpush1.msra.mxu0 0.0
    %806 = vmatprep.subr.mxu0 0.0
    %807 = vmatpush1.msra.mxu0 0.0
    %808 = vmatprep.subr.mxu0 0.0
    %809 = vmatpush1.msra.mxu0 0.0
    %810 = vmatprep.subr.mxu0 0.0
    %811 = vmatpush1.msra.mxu0 0.0
    %812 = vmatprep.subr.mxu0 0.0
    %813 = vmatpush1.msra.mxu0 0.0
    %814 = vmatprep.subr.mxu0 0.0
    %815 = vmatpush1.msra.mxu0 0.0
    %816 = vmatprep.subr.mxu0 0.0
    %817 = vmatpush1.msra.mxu0 0.0
    %818 = vmatprep.subr.mxu0 0.0
    %819 = vmatpush1.msra.mxu0 0.0
    %820 = vmatprep.subr.mxu0 0.0
    %821 = vmatpush1.msra.mxu0 0.0
    %822 = vmatprep.subr.mxu0 0.0
    %823 = vmatpush1.msra.mxu0 %v309
    %824 = vmatprep.subr.mxu0 0.0
    %825 = vmatpush2.msra.mxu0 0.0
    %826 = vmatprep.subr.mxu0 0.0
    %827 = vmatpush2.msra.mxu0 0.0
    %828 = vmatprep.subr.mxu0 0.0
    %829 = vmatpush2.msra.mxu0 0.0
    %830 = vmatprep.subr.mxu0 0.0
    %831 = vmatpush2.msra.mxu0 0.0
    %832 = vmatprep.subr.mxu0 0.0
    %833 = vmatpush2.msra.mxu0 0.0
    %834 = vmatprep.subr.mxu0 0.0
    %835 = vmatpush2.msra.mxu0 0.0
    %836 = vmatprep.subr.mxu0 0.0
    %837 = vmatpush2.msra.mxu0 0.0
    %838 = vmatprep.subr.mxu0 0.0
    %839 = vmatpush2.msra.mxu0 0.0
    %840 = vmatprep.subr.mxu0 0.0
    %841 = vmatpush2.msra.mxu0 0.0
    %842 = vmatprep.subr.mxu0 0.0
    %843 = vmatpush2.msra.mxu0 0.0
    %844 = vmatprep.subr.mxu0 0.0
    %845 = vmatpush2.msra.mxu0 0.0
    %846 = vmatprep.subr.mxu0 0.0
    %847 = vmatpush2.msra.mxu0 0.0
    %848 = vmatprep.subr.mxu0 0.0
    %849 = vmatpush2.msra.mxu0 0.0
    %850 = vmatprep.subr.mxu0 0.0
    %851 = vmatpush2.msra.mxu0 0.0
    %852 = vmatprep.subr.mxu0 0.0
    %853 = vmatpush2.msra.mxu0 0.0
    %854 = vmatprep.subr.mxu0 0.0
    %855 = vmatpush2.msra.mxu0 0.0
    %856 = vmatprep.mubr.f32.mxu0 0.0
    %857 = vmatmul.mubr.f32.gmra.mxu0 %v787
    %v858 = vpop.f32.mrf.mxu0
    %v859 = vadd.f32 %v778, %v858
    %v860 = vpop.f32.mrf.mxu0
    %861 = vmatprep.mubr.f32.mxu0 0.0
    %862 = vmatmul.mubr.f32.gmra.mxu0 %v790
    %v863 = vpop.f32.mrf.mxu0
    %v864 = vadd.f32 %v783, %v863
    %v865 = vpop.f32.mrf.mxu0
    %866 = vdwg.mxu0
    %867 = vrot.lane.b32.xlu0 %v300, 80
    %v868 = vpop.permute.xlu0 %867
    %869 = vrot.lane.b32.xlu0 %v305, 80
    %v870 = vpop.permute.xlu0 %869
    %871 = vrot.lane.b32.xlu0 %v300, 72
    %v872 = vpop.permute.xlu0 %871
    %873 = vrot.lane.b32.xlu0 %v305, 72
    %v874 = vpop.permute.xlu0 %873
    %v875 = vsel %vm319, %v868, 0
    %v877 = vsel %vm319, %v870, 0
    %v879 = vsel %vm319, %v872, 0
    %v881 = vsel %vm319, %v874, 0
    %883 = vmatprep.subr.mxu0 0.0
    %884 = vmatpush1.xpose.msra.mxu0 0.0
    %885 = vmatprep.subr.mxu0 0.0
    %886 = vmatpush1.xpose.msra.mxu0 0.0
    %887 = vmatprep.subr.mxu0 0.0
    %888 = vmatpush1.xpose.msra.mxu0 0.0
    %889 = vmatprep.subr.mxu0 0.0
    %890 = vmatpush1.xpose.msra.mxu0 0.0
    %891 = vmatprep.subr.mxu0 0.0
    %892 = vmatpush1.xpose.msra.mxu0 0.0
    %893 = vmatprep.subr.mxu0 0.0
    %894 = vmatpush1.xpose.msra.mxu0 0.0
    %895 = vmatprep.subr.mxu0 0.0
    %896 = vmatpush1.xpose.msra.mxu0 0.0
    %897 = vmatprep.subr.mxu0 0.0
    %898 = vmatpush1.xpose.msra.mxu0 0.0
    %899 = vmatprep.subr.mxu0 0.0
    %900 = vmatpush1.xpose.msra.mxu0 0.0
    %901 = vmatprep.subr.mxu0 0.0
    %902 = vmatpush1.xpose.msra.mxu0 0.0
    %903 = vmatprep.subr.mxu0 0.0
    %904 = vmatpush1.xpose.msra.mxu0 0.0
    %905 = vmatprep.subr.mxu0 0.0
    %906 = vmatpush1.xpose.msra.mxu0 0.0
    %907 = vmatprep.subr.mxu0 0.0
    %908 = vmatpush1.xpose.msra.mxu0 0.0
    %909 = vmatprep.subr.mxu0 0.0
    %910 = vmatpush1.xpose.msra.mxu0 0.0
    %911 = vmatprep.subr.mxu0 0.0
    %912 = vmatpush1.xpose.msra.mxu0 %v881
    %913 = vmatprep.subr.mxu0 0.0
    %914 = vmatpush1.xpose.msra.mxu0 %v879
    %915 = vmatprep.subr.mxu0 0.0
    %916 = vmatpush2.xpose.msra.mxu0 0.0
    %917 = vmatprep.subr.mxu0 0.0
    %918 = vmatpush2.xpose.msra.mxu0 0.0
    %919 = vmatprep.subr.mxu0 0.0
    %920 = vmatpush2.xpose.msra.mxu0 0.0
    %921 = vmatprep.subr.mxu0 0.0
    %922 = vmatpush2.xpose.msra.mxu0 0.0
    %923 = vmatprep.subr.mxu0 0.0
    %924 = vmatpush2.xpose.msra.mxu0 0.0
    %925 = vmatprep.subr.mxu0 0.0
    %926 = vmatpush2.xpose.msra.mxu0 0.0
    %927 = vmatprep.subr.mxu0 0.0
    %928 = vmatpush2.xpose.msra.mxu0 0.0
    %929 = vmatprep.subr.mxu0 0.0
    %930 = vmatpush2.xpose.msra.mxu0 0.0
    %931 = vmatprep.subr.mxu0 0.0
    %932 = vmatpush2.xpose.msra.mxu0 0.0
    %933 = vmatprep.subr.mxu0 0.0
    %934 = vmatpush2.xpose.msra.mxu0 0.0
    %935 = vmatprep.subr.mxu0 0.0
    %936 = vmatpush2.xpose.msra.mxu0 0.0
    %937 = vmatprep.subr.mxu0 0.0
    %938 = vmatpush2.xpose.msra.mxu0 0.0
    %939 = vmatprep.subr.mxu0 0.0
    %940 = vmatpush2.xpose.msra.mxu0 0.0
    %941 = vmatprep.subr.mxu0 0.0
    %942 = vmatpush2.xpose.msra.mxu0 0.0
    %943 = vmatprep.subr.mxu0 0.0
    %944 = vmatpush2.xpose.msra.mxu0 0.0
    %945 = vmatprep.subr.mxu0 0.0
    %946 = vmatpush2.xpose.msra.mxu0 0.0
    %947 = vmatprep.mubr.f32.mxu0 0.0
    %948 = vmatmul.mubr.f32.gmra.mxu0 %v875
    %v949 = vpop.f32.mrf.mxu0
    %v950 = vadd.f32 0.0, %v949
    %v951 = vpop.f32.mrf.mxu0
    %952 = vmatprep.mubr.f32.mxu0 0.0
    %953 = vmatmul.mubr.f32.gmra.mxu0 %v877
    %v954 = vpop.f32.mrf.mxu0
    %v955 = vadd.f32 0.0, %v954
    %v956 = vpop.f32.mrf.mxu0
    %957 = vdwg.mxu0
    %v958 = vmul.f32 %v950, 0.35355338
    %v959 = vmul.f32 %v955, 0.35355338
    %v960 = vadd.f32 %v958, %v216
    %v961 = vadd.f32 %v959, %v217
    %v962 = vmul.f32 %v960, 1.442695
    %v963 = vpow.pop %v962
    %v964 = vmul.f32 %v961, 1.442695
    %v965 = vpow.pop %v964
    %v966 = vsel %vm411, %v963, 0.0
    %967 = vadd.xlane.f32.xlu0 %v966
    %v968 = vpop.xlane.xlu0 %967
    %v969 = vsel %vm411, %v965, 0.0
    %970 = vadd.xlane.f32.xlu0 %v969
    %v971 = vpop.xlane.xlu0 %970
    %v972 = vrcp.pop %v968
    %v973 = vrcp.pop %v971
    %v974 = vmul.f32 %v963, %v972
    %v975 = vmul.f32 %v965, %v973
    %976 = vrot.lane.b32.xlu0 %v300, 64
    %v977 = vpop.permute.xlu0 %976
    %978 = vrot.lane.b32.xlu0 %v305, 64
    %v979 = vpop.permute.xlu0 %978
    %v983 = vsel %vm411, %v974, 0
    %v986 = vsel %vm411, %v975, 0
    %988 = vmatprep.subr.mxu0 0.0
    %989 = vmatpush1.msra.mxu0 0.0
    %990 = vmatprep.subr.mxu0 0.0
    %991 = vmatpush1.msra.mxu0 0.0
    %992 = vmatprep.subr.mxu0 0.0
    %993 = vmatpush1.msra.mxu0 0.0
    %994 = vmatprep.subr.mxu0 0.0
    %995 = vmatpush1.msra.mxu0 0.0
    %996 = vmatprep.subr.mxu0 0.0
    %997 = vmatpush1.msra.mxu0 0.0
    %998 = vmatprep.subr.mxu0 0.0
    %999 = vmatpush1.msra.mxu0 0.0
    %1000 = vmatprep.subr.mxu0 0.0
    %1001 = vmatpush1.msra.mxu0 0.0
    %1002 = vmatprep.subr.mxu0 0.0
    %1003 = vmatpush1.msra.mxu0 0.0
    %1004 = vmatprep.subr.mxu0 0.0
    %1005 = vmatpush1.msra.mxu0 0.0
    %1006 = vmatprep.subr.mxu0 0.0
    %1007 = vmatpush1.msra.mxu0 0.0
    %1008 = vmatprep.subr.mxu0 0.0
    %1009 = vmatpush1.msra.mxu0 0.0
    %1010 = vmatprep.subr.mxu0 0.0
    %1011 = vmatpush1.msra.mxu0 0.0
    %1012 = vmatprep.subr.mxu0 0.0
    %1013 = vmatpush1.msra.mxu0 0.0
    %1014 = vmatprep.subr.mxu0 0.0
    %1015 = vmatpush1.msra.mxu0 0.0
    %1016 = vmatprep.subr.mxu0 0.0
    %1017 = vmatpush1.msra.mxu0 %v979
    %1018 = vmatprep.subr.mxu0 0.0
    %1019 = vmatpush1.msra.mxu0 %v977
    %1020 = vmatprep.subr.mxu0 0.0
    %1021 = vmatpush2.msra.mxu0 0.0
    %1022 = vmatprep.subr.mxu0 0.0
    %1023 = vmatpush2.msra.mxu0 0.0
    %1024 = vmatprep.subr.mxu0 0.0
    %1025 = vmatpush2.msra.mxu0 0.0
    %1026 = vmatprep.subr.mxu0 0.0
    %1027 = vmatpush2.msra.mxu0 0.0
    %1028 = vmatprep.subr.mxu0 0.0
    %1029 = vmatpush2.msra.mxu0 0.0
    %1030 = vmatprep.subr.mxu0 0.0
    %1031 = vmatpush2.msra.mxu0 0.0
    %1032 = vmatprep.subr.mxu0 0.0
    %1033 = vmatpush2.msra.mxu0 0.0
    %1034 = vmatprep.subr.mxu0 0.0
    %1035 = vmatpush2.msra.mxu0 0.0
    %1036 = vmatprep.subr.mxu0 0.0
    %1037 = vmatpush2.msra.mxu0 0.0
    %1038 = vmatprep.subr.mxu0 0.0
    %1039 = vmatpush2.msra.mxu0 0.0
    %1040 = vmatprep.subr.mxu0 0.0
    %1041 = vmatpush2.msra.mxu0 0.0
    %1042 = vmatprep.subr.mxu0 0.0
    %1043 = vmatpush2.msra.mxu0 0.0
    %1044 = vmatprep.subr.mxu0 0.0
    %1045 = vmatpush2.msra.mxu0 0.0
    %1046 = vmatprep.subr.mxu0 0.0
    %1047 = vmatpush2.msra.mxu0 0.0
    %1048 = vmatprep.subr.mxu0 0.0
    %1049 = vmatpush2.msra.mxu0 0.0
    %1050 = vmatprep.subr.mxu0 0.0
    %1051 = vmatpush2.msra.mxu0 0.0
    %1052 = vmatprep.mubr.f32.mxu0 0.0
    %1053 = vmatmul.mubr.f32.gmra.mxu0 %v983
    %v1054 = vpop.f32.mrf.mxu0
    %v1055 = vadd.f32 0.0, %v1054
    %v1056 = vpop.f32.mrf.mxu0
    %1057 = vmatprep.mubr.f32.mxu0 0.0
    %1058 = vmatmul.mubr.f32.gmra.mxu0 %v986
    %v1059 = vpop.f32.mrf.mxu0
    %v1060 = vadd.f32 0.0, %v1059
    %v1061 = vpop.f32.mrf.mxu0
    %1062 = vdwg.mxu0
    %v1064 = vsel %vm319, %v1055, 0
    %v1067 = vsel %vm319, %v1060, 0
    %1069 = vmatprep.subr.mxu0 0.0
    %1070 = vmatpush1.msra.mxu0 0.0
    %1071 = vmatprep.subr.mxu0 0.0
    %1072 = vmatpush1.msra.mxu0 0.0
    %1073 = vmatprep.subr.mxu0 0.0
    %1074 = vmatpush1.msra.mxu0 0.0
    %1075 = vmatprep.subr.mxu0 0.0
    %1076 = vmatpush1.msra.mxu0 0.0
    %1077 = vmatprep.subr.mxu0 0.0
    %1078 = vmatpush1.msra.mxu0 0.0
    %1079 = vmatprep.subr.mxu0 0.0
    %1080 = vmatpush1.msra.mxu0 0.0
    %1081 = vmatprep.subr.mxu0 0.0
    %1082 = vmatpush1.msra.mxu0 0.0
    %1083 = vmatprep.subr.mxu0 0.0
    %1084 = vmatpush1.msra.mxu0 0.0
    %1085 = vmatprep.subr.mxu0 0.0
    %1086 = vmatpush1.msra.mxu0 0.0
    %1087 = vmatprep.subr.mxu0 0.0
    %1088 = vmatpush1.msra.mxu0 0.0
    %1089 = vmatprep.subr.mxu0 0.0
    %1090 = vmatpush1.msra.mxu0 0.0
    %1091 = vmatprep.subr.mxu0 0.0
    %1092 = vmatpush1.msra.mxu0 0.0
    %1093 = vmatprep.subr.mxu0 0.0
    %1094 = vmatpush1.msra.mxu0 0.0
    %1095 = vmatprep.subr.mxu0 0.0
    %1096 = vmatpush1.msra.mxu0 0.0
    %1097 = vmatprep.subr.mxu0 0.0
    %1098 = vmatpush1.msra.mxu0 0.0
    %1099 = vmatprep.subr.mxu0 0.0
    %1100 = vmatpush1.msra.mxu0 %v311
    %1101 = vmatprep.subr.mxu0 0.0
    %1102 = vmatpush2.msra.mxu0 0.0
    %1103 = vmatprep.subr.mxu0 0.0
    %1104 = vmatpush2.msra.mxu0 0.0
    %1105 = vmatprep.subr.mxu0 0.0
    %1106 = vmatpush2.msra.mxu0 0.0
    %1107 = vmatprep.subr.mxu0 0.0
    %1108 = vmatpush2.msra.mxu0 0.0
    %1109 = vmatprep.subr.mxu0 0.0
    %1110 = vmatpush2.msra.mxu0 0.0
    %1111 = vmatprep.subr.mxu0 0.0
    %1112 = vmatpush2.msra.mxu0 0.0
    %1113 = vmatprep.subr.mxu0 0.0
    %1114 = vmatpush2.msra.mxu0 0.0
    %1115 = vmatprep.subr.mxu0 0.0
    %1116 = vmatpush2.msra.mxu0 0.0
    %1117 = vmatprep.subr.mxu0 0.0
    %1118 = vmatpush2.msra.mxu0 0.0
    %1119 = vmatprep.subr.mxu0 0.0
    %1120 = vmatpush2.msra.mxu0 0.0
    %1121 = vmatprep.subr.mxu0 0.0
    %1122 = vmatpush2.msra.mxu0 0.0
    %1123 = vmatprep.subr.mxu0 0.0
    %1124 = vmatpush2.msra.mxu0 0.0
    %1125 = vmatprep.subr.mxu0 0.0
    %1126 = vmatpush2.msra.mxu0 0.0
    %1127 = vmatprep.subr.mxu0 0.0
    %1128 = vmatpush2.msra.mxu0 0.0
    %1129 = vmatprep.subr.mxu0 0.0
    %1130 = vmatpush2.msra.mxu0 0.0
    %1131 = vmatprep.subr.mxu0 0.0
    %1132 = vmatpush2.msra.mxu0 0.0
    %1133 = vmatprep.mubr.f32.mxu0 0.0
    %1134 = vmatmul.mubr.f32.gmra.mxu0 %v1064
    %v1135 = vpop.f32.mrf.mxu0
    %v1136 = vadd.f32 0.0, %v1135
    %v1137 = vpop.f32.mrf.mxu0
    %1138 = vmatprep.mubr.f32.mxu0 0.0
    %1139 = vmatmul.mubr.f32.gmra.mxu0 %v1067
    %v1140 = vpop.f32.mrf.mxu0
    %v1141 = vadd.f32 0.0, %v1140
    %v1142 = vpop.f32.mrf.mxu0
    %1143 = vdwg.mxu0
    %v1144 = vadd.f32 %v859, %v1136
    %v1145 = vadd.f32 %v864, %v1141
    %1146 = vrot.lane.b32.xlu0 %v300, 56
    %v1147 = vpop.permute.xlu0 %1146
    %1148 = vrot.lane.b32.xlu0 %v305, 56
    %v1149 = vpop.permute.xlu0 %1148
    %1150 = vrot.lane.b32.xlu0 %v300, 48
    %v1151 = vpop.permute.xlu0 %1150
    %1152 = vrot.lane.b32.xlu0 %v305, 48
    %v1153 = vpop.permute.xlu0 %1152
    %v1154 = vsel %vm319, %v1147, 0
    %v1156 = vsel %vm319, %v1149, 0
    %v1158 = vsel %vm319, %v1151, 0
    %v1160 = vsel %vm319, %v1153, 0
    %1162 = vmatprep.subr.mxu0 0.0
    %1163 = vmatpush1.xpose.msra.mxu0 0.0
    %1164 = vmatprep.subr.mxu0 0.0
    %1165 = vmatpush1.xpose.msra.mxu0 0.0
    %1166 = vmatprep.subr.mxu0 0.0
    %1167 = vmatpush1.xpose.msra.mxu0 0.0
    %1168 = vmatprep.subr.mxu0 0.0
    %1169 = vmatpush1.xpose.msra.mxu0 0.0
    %1170 = vmatprep.subr.mxu0 0.0
    %1171 = vmatpush1.xpose.msra.mxu0 0.0
    %1172 = vmatprep.subr.mxu0 0.0
    %1173 = vmatpush1.xpose.msra.mxu0 0.0
    %1174 = vmatprep.subr.mxu0 0.0
    %1175 = vmatpush1.xpose.msra.mxu0 0.0
    %1176 = vmatprep.subr.mxu0 0.0
    %1177 = vmatpush1.xpose.msra.mxu0 0.0
    %1178 = vmatprep.subr.mxu0 0.0
    %1179 = vmatpush1.xpose.msra.mxu0 0.0
    %1180 = vmatprep.subr.mxu0 0.0
    %1181 = vmatpush1.xpose.msra.mxu0 0.0
    %1182 = vmatprep.subr.mxu0 0.0
    %1183 = vmatpush1.xpose.msra.mxu0 0.0
    %1184 = vmatprep.subr.mxu0 0.0
    %1185 = vmatpush1.xpose.msra.mxu0 0.0
    %1186 = vmatprep.subr.mxu0 0.0
    %1187 = vmatpush1.xpose.msra.mxu0 0.0
    %1188 = vmatprep.subr.mxu0 0.0
    %1189 = vmatpush1.xpose.msra.mxu0 0.0
    %1190 = vmatprep.subr.mxu0 0.0
    %1191 = vmatpush1.xpose.msra.mxu0 %v1160
    %1192 = vmatprep.subr.mxu0 0.0
    %1193 = vmatpush1.xpose.msra.mxu0 %v1158
    %1194 = vmatprep.subr.mxu0 0.0
    %1195 = vmatpush2.xpose.msra.mxu0 0.0
    %1196 = vmatprep.subr.mxu0 0.0
    %1197 = vmatpush2.xpose.msra.mxu0 0.0
    %1198 = vmatprep.subr.mxu0 0.0
    %1199 = vmatpush2.xpose.msra.mxu0 0.0
    %1200 = vmatprep.subr.mxu0 0.0
    %1201 = vmatpush2.xpose.msra.mxu0 0.0
    %1202 = vmatprep.subr.mxu0 0.0
    %1203 = vmatpush2.xpose.msra.mxu0 0.0
    %1204 = vmatprep.subr.mxu0 0.0
    %1205 = vmatpush2.xpose.msra.mxu0 0.0
    %1206 = vmatprep.subr.mxu0 0.0
    %1207 = vmatpush2.xpose.msra.mxu0 0.0
    %1208 = vmatprep.subr.mxu0 0.0
    %1209 = vmatpush2.xpose.msra.mxu0 0.0
    %1210 = vmatprep.subr.mxu0 0.0
    %1211 = vmatpush2.xpose.msra.mxu0 0.0
    %1212 = vmatprep.subr.mxu0 0.0
    %1213 = vmatpush2.xpose.msra.mxu0 0.0
    %1214 = vmatprep.subr.mxu0 0.0
    %1215 = vmatpush2.xpose.msra.mxu0 0.0
    %1216 = vmatprep.subr.mxu0 0.0
    %1217 = vmatpush2.xpose.msra.mxu0 0.0
    %1218 = vmatprep.subr.mxu0 0.0
    %1219 = vmatpush2.xpose.msra.mxu0 0.0
    %1220 = vmatprep.subr.mxu0 0.0
    %1221 = vmatpush2.xpose.msra.mxu0 0.0
    %1222 = vmatprep.subr.mxu0 0.0
    %1223 = vmatpush2.xpose.msra.mxu0 0.0
    %1224 = vmatprep.subr.mxu0 0.0
    %1225 = vmatpush2.xpose.msra.mxu0 0.0
    %1226 = vmatprep.mubr.f32.mxu0 0.0
    %1227 = vmatmul.mubr.f32.gmra.mxu0 %v1154
    %v1228 = vpop.f32.mrf.mxu0
    %v1229 = vadd.f32 0.0, %v1228
    %v1230 = vpop.f32.mrf.mxu0
    %1231 = vmatprep.mubr.f32.mxu0 0.0
    %1232 = vmatmul.mubr.f32.gmra.mxu0 %v1156
    %v1233 = vpop.f32.mrf.mxu0
    %v1234 = vadd.f32 0.0, %v1233
    %v1235 = vpop.f32.mrf.mxu0
    %1236 = vdwg.mxu0
    %v1237 = vmul.f32 %v1229, 0.35355338
    %v1238 = vmul.f32 %v1234, 0.35355338
    %v1239 = vadd.f32 %v1237, %v216
    %v1240 = vadd.f32 %v1238, %v217
    %v1241 = vmul.f32 %v1239, 1.442695
    %v1242 = vpow.pop %v1241
    %v1243 = vmul.f32 %v1240, 1.442695
    %v1244 = vpow.pop %v1243
    %v1245 = vsel %vm411, %v1242, 0.0
    %1246 = vadd.xlane.f32.xlu0 %v1245
    %v1247 = vpop.xlane.xlu0 %1246
    %v1248 = vsel %vm411, %v1244, 0.0
    %1249 = vadd.xlane.f32.xlu0 %v1248
    %v1250 = vpop.xlane.xlu0 %1249
    %v1251 = vrcp.pop %v1247
    %v1252 = vrcp.pop %v1250
    %v1253 = vmul.f32 %v1242, %v1251
    %v1254 = vmul.f32 %v1244, %v1252
    %1255 = vrot.lane.b32.xlu0 %v300, 40
    %v1256 = vpop.permute.xlu0 %1255
    %1257 = vrot.lane.b32.xlu0 %v305, 40
    %v1258 = vpop.permute.xlu0 %1257
    %v1262 = vsel %vm411, %v1253, 0
    %v1265 = vsel %vm411, %v1254, 0
    %1267 = vmatprep.subr.mxu0 0.0
    %1268 = vmatpush1.msra.mxu0 0.0
    %1269 = vmatprep.subr.mxu0 0.0
    %1270 = vmatpush1.msra.mxu0 0.0
    %1271 = vmatprep.subr.mxu0 0.0
    %1272 = vmatpush1.msra.mxu0 0.0
    %1273 = vmatprep.subr.mxu0 0.0
    %1274 = vmatpush1.msra.mxu0 0.0
    %1275 = vmatprep.subr.mxu0 0.0
    %1276 = vmatpush1.msra.mxu0 0.0
    %1277 = vmatprep.subr.mxu0 0.0
    %1278 = vmatpush1.msra.mxu0 0.0
    %1279 = vmatprep.subr.mxu0 0.0
    %1280 = vmatpush1.msra.mxu0 0.0
    %1281 = vmatprep.subr.mxu0 0.0
    %1282 = vmatpush1.msra.mxu0 0.0
    %1283 = vmatprep.subr.mxu0 0.0
    %1284 = vmatpush1.msra.mxu0 0.0
    %1285 = vmatprep.subr.mxu0 0.0
    %1286 = vmatpush1.msra.mxu0 0.0
    %1287 = vmatprep.subr.mxu0 0.0
    %1288 = vmatpush1.msra.mxu0 0.0
    %1289 = vmatprep.subr.mxu0 0.0
    %1290 = vmatpush1.msra.mxu0 0.0
    %1291 = vmatprep.subr.mxu0 0.0
    %1292 = vmatpush1.msra.mxu0 0.0
    %1293 = vmatprep.subr.mxu0 0.0
    %1294 = vmatpush1.msra.mxu0 0.0
    %1295 = vmatprep.subr.mxu0 0.0
    %1296 = vmatpush1.msra.mxu0 %v1258
    %1297 = vmatprep.subr.mxu0 0.0
    %1298 = vmatpush1.msra.mxu0 %v1256
    %1299 = vmatprep.subr.mxu0 0.0
    %1300 = vmatpush2.msra.mxu0 0.0
    %1301 = vmatprep.subr.mxu0 0.0
    %1302 = vmatpush2.msra.mxu0 0.0
    %1303 = vmatprep.subr.mxu0 0.0
    %1304 = vmatpush2.msra.mxu0 0.0
    %1305 = vmatprep.subr.mxu0 0.0
    %1306 = vmatpush2.msra.mxu0 0.0
    %1307 = vmatprep.subr.mxu0 0.0
    %1308 = vmatpush2.msra.mxu0 0.0
    %1309 = vmatprep.subr.mxu0 0.0
    %1310 = vmatpush2.msra.mxu0 0.0
    %1311 = vmatprep.subr.mxu0 0.0
    %1312 = vmatpush2.msra.mxu0 0.0
    %1313 = vmatprep.subr.mxu0 0.0
    %1314 = vmatpush2.msra.mxu0 0.0
    %1315 = vmatprep.subr.mxu0 0.0
    %1316 = vmatpush2.msra.mxu0 0.0
    %1317 = vmatprep.subr.mxu0 0.0
    %1318 = vmatpush2.msra.mxu0 0.0
    %1319 = vmatprep.subr.mxu0 0.0
    %1320 = vmatpush2.msra.mxu0 0.0
    %1321 = vmatprep.subr.mxu0 0.0
    %1322 = vmatpush2.msra.mxu0 0.0
    %1323 = vmatprep.subr.mxu0 0.0
    %1324 = vmatpush2.msra.mxu0 0.0
    %1325 = vmatprep.subr.mxu0 0.0
    %1326 = vmatpush2.msra.mxu0 0.0
    %1327 = vmatprep.subr.mxu0 0.0
    %1328 = vmatpush2.msra.mxu0 0.0
    %1329 = vmatprep.subr.mxu0 0.0
    %1330 = vmatpush2.msra.mxu0 0.0
    %1331 = vmatprep.mubr.f32.mxu0 0.0
    %1332 = vmatmul.mubr.f32.gmra.mxu0 %v1262
    %v1333 = vpop.f32.mrf.mxu0
    %v1334 = vadd.f32 0.0, %v1333
    %v1335 = vpop.f32.mrf.mxu0
    %1336 = vmatprep.mubr.f32.mxu0 0.0
    %1337 = vmatmul.mubr.f32.gmra.mxu0 %v1265
    %v1338 = vpop.f32.mrf.mxu0
    %v1339 = vadd.f32 0.0, %v1338
    %v1340 = vpop.f32.mrf.mxu0
    %1341 = vdwg.mxu0
    %v1343 = vsel %vm319, %v1334, 0
    %v1346 = vsel %vm319, %v1339, 0
    %1348 = vmatprep.subr.mxu0 0.0
    %1349 = vmatpush1.msra.mxu0 0.0
    %1350 = vmatprep.subr.mxu0 0.0
    %1351 = vmatpush1.msra.mxu0 0.0
    %1352 = vmatprep.subr.mxu0 0.0
    %1353 = vmatpush1.msra.mxu0 0.0
    %1354 = vmatprep.subr.mxu0 0.0
    %1355 = vmatpush1.msra.mxu0 0.0
    %1356 = vmatprep.subr.mxu0 0.0
    %1357 = vmatpush1.msra.mxu0 0.0
    %1358 = vmatprep.subr.mxu0 0.0
    %1359 = vmatpush1.msra.mxu0 0.0
    %1360 = vmatprep.subr.mxu0 0.0
    %1361 = vmatpush1.msra.mxu0 0.0
    %1362 = vmatprep.subr.mxu0 0.0
    %1363 = vmatpush1.msra.mxu0 0.0
    %1364 = vmatprep.subr.mxu0 0.0
    %1365 = vmatpush1.msra.mxu0 0.0
    %1366 = vmatprep.subr.mxu0 0.0
    %1367 = vmatpush1.msra.mxu0 0.0
    %1368 = vmatprep.subr.mxu0 0.0
    %1369 = vmatpush1.msra.mxu0 0.0
    %1370 = vmatprep.subr.mxu0 0.0
    %1371 = vmatpush1.msra.mxu0 0.0
    %1372 = vmatprep.subr.mxu0 0.0
    %1373 = vmatpush1.msra.mxu0 0.0
    %1374 = vmatprep.subr.mxu0 0.0
    %1375 = vmatpush1.msra.mxu0 0.0
    %1376 = vmatprep.subr.mxu0 0.0
    %1377 = vmatpush1.msra.mxu0 0.0
    %1378 = vmatprep.subr.mxu0 0.0
    %1379 = vmatpush1.msra.mxu0 %v312
    %1380 = vmatprep.subr.mxu0 0.0
    %1381 = vmatpush2.msra.mxu0 0.0
    %1382 = vmatprep.subr.mxu0 0.0
    %1383 = vmatpush2.msra.mxu0 0.0
    %1384 = vmatprep.subr.mxu0 0.0
    %1385 = vmatpush2.msra.mxu0 0.0
    %1386 = vmatprep.subr.mxu0 0.0
    %1387 = vmatpush2.msra.mxu0 0.0
    %1388 = vmatprep.subr.mxu0 0.0
    %1389 = vmatpush2.msra.mxu0 0.0
    %1390 = vmatprep.subr.mxu0 0.0
    %1391 = vmatpush2.msra.mxu0 0.0
    %1392 = vmatprep.subr.mxu0 0.0
    %1393 = vmatpush2.msra.mxu0 0.0
    %1394 = vmatprep.subr.mxu0 0.0
    %1395 = vmatpush2.msra.mxu0 0.0
    %1396 = vmatprep.subr.mxu0 0.0
    %1397 = vmatpush2.msra.mxu0 0.0
    %1398 = vmatprep.subr.mxu0 0.0
    %1399 = vmatpush2.msra.mxu0 0.0
    %1400 = vmatprep.subr.mxu0 0.0
    %1401 = vmatpush2.msra.mxu0 0.0
    %1402 = vmatprep.subr.mxu0 0.0
    %1403 = vmatpush2.msra.mxu0 0.0
    %1404 = vmatprep.subr.mxu0 0.0
    %1405 = vmatpush2.msra.mxu0 0.0
    %1406 = vmatprep.subr.mxu0 0.0
    %1407 = vmatpush2.msra.mxu0 0.0
    %1408 = vmatprep.subr.mxu0 0.0
    %1409 = vmatpush2.msra.mxu0 0.0
    %1410 = vmatprep.subr.mxu0 0.0
    %1411 = vmatpush2.msra.mxu0 0.0
    %1412 = vmatprep.mubr.f32.mxu0 0.0
    %1413 = vmatmul.mubr.f32.gmra.mxu0 %v1343
    %v1414 = vpop.f32.mrf.mxu0
    %v1415 = vadd.f32 0.0, %v1414
    %v1416 = vpop.f32.mrf.mxu0
    %1417 = vmatprep.mubr.f32.mxu0 0.0
    %1418 = vmatmul.mubr.f32.gmra.mxu0 %v1346
    %v1419 = vpop.f32.mrf.mxu0
    %v1420 = vadd.f32 0.0, %v1419
    %v1421 = vpop.f32.mrf.mxu0
    %1422 = vdwg.mxu0
    %v1423 = vadd.f32 %v1144, %v1415
    %v1424 = vadd.f32 %v1145, %v1420
    %v1425 = vld [vmem:[%s5 + $0x3] sm:$0x1]
    %v1426 = vlaneseq
    %v1427 = vshrl.u32 %v1426, 7
    %v1428 = vsub.s32 0, %v1427
    %v1429 = vrot.slane %v1425, %v1428
    %v1430 = vadd.f32 %v1423, %v1429
    %v1431 = vadd.f32 %v1424, %v1429
    %v1432 = vadd.f32 %v1430, %v214
    %v1433 = vadd.f32 %v1431, %v215
    %v1434 = vld [vmem:[%s5 + $0x4] sm:$0x1]
    %v1435 = vld [vmem:[%s5 + $0x5] sm:$0x1]
    %v1436 = vsel %vm176, %v1432, 0.0
    %1437 = vadd.xlane.f32.xlu0 %v1436
    %v1438 = vpop.xlane.xlu0 %1437
    %v1439 = vsel %vm176, %v1433, 0.0
    %1440 = vadd.xlane.f32.xlu0 %v1439
    %v1441 = vpop.xlane.xlu0 %1440
    %v1442 = vmul.f32 %v1438, %v183
    %v1443 = vmul.f32 %v1441, %v183
    %v1444 = vsub.f32 %v1432, %v1442
    %v1445 = vsub.f32 %v1433, %v1443
    %v1446 = vmul.f32 %v1444, %v1444
    %v1447 = vmul.f32 %v1445, %v1445
    %v1448 = vsel %vm176, %v1446, 0.0
    %1449 = vadd.xlane.f32.xlu0 %v1448
    %v1450 = vpop.xlane.xlu0 %1449
    %v1451 = vsel %vm176, %v1447, 0.0
    %1452 = vadd.xlane.f32.xlu0 %v1451
    %v1453 = vpop.xlane.xlu0 %1452
    %v1454 = vmul.f32 %v1450, %v183
    %v1455 = vmul.f32 %v1453, %v183
    %v1456 = vadd.f32 %v1454, 1e-12
    %v1457 = vadd.f32 %v1455, 1e-12
    %v1458 = vrsqrt.pop %v1456
    %v1459 = vrsqrt.pop %v1457
    %v1460 = vmul.f32 %v1444, %v1458
    %v1461 = vmul.f32 %v1445, %v1459
    %v1462 = vlaneseq
    %v1463 = vshrl.u32 %v1462, 7
    %v1464 = vsub.s32 0, %v1463
    %v1465 = vrot.slane %v1434, %v1464
    %v1466 = vmul.f32 %v1460, %v1465
    %v1467 = vmul.f32 %v1461, %v1465
    %v1468 = vlaneseq
    %v1469 = vshrl.u32 %v1468, 7
    %v1470 = vsub.s32 0, %v1469
    %v1471 = vrot.slane %v1435, %v1470
    %v1472 = vadd.f32 %v1466, %v1471
    %v1473 = vadd.f32 %v1467, %v1471
    %s1474 = scalar_lea.vmem [#allocation6], 64
    %v1475 = vld [vmem:[%s1474] sm:$0xff]
    %v1476 = vld [vmem:[%s1474 + $0x8] sm:$0xff]
    %v1477 = vld [vmem:[%s1474 + $0x10] sm:$0xff]
    %v1478 = vld [vmem:[%s1474 + $0x18] sm:$0xff]
    %v1479 = vld [vmem:[%s5 + $0x6] sm:$0x1]
    %v1480 = vlaneseq
    %v1481 = vshrl.u32 %v1480, 7
    %v1482 = vsub.s32 0, %v1481
    %v1483 = vrot.slane %v1479, %v1482
    %v1485 = vsel %vm176, %v1472, 0
    %v1488 = vsel %vm176, %v1473, 0
    %1490 = vmatprep.subr.mxu0 0.0
    %1491 = vmatpush1.msra.mxu0 0.0
    %1492 = vmatprep.subr.mxu0 0.0
    %1493 = vmatpush1.msra.mxu0 0.0
    %1494 = vmatprep.subr.mxu0 0.0
    %1495 = vmatpush1.msra.mxu0 0.0
    %1496 = vmatprep.subr.mxu0 0.0
    %1497 = vmatpush1.msra.mxu0 0.0
    %1498 = vmatprep.subr.mxu0 0.0
    %1499 = vmatpush1.msra.mxu0 0.0
    %1500 = vmatprep.subr.mxu0 0.0
    %1501 = vmatpush1.msra.mxu0 0.0
    %1502 = vmatprep.subr.mxu0 0.0
    %1503 = vmatpush1.msra.mxu0 0.0
    %1504 = vmatprep.subr.mxu0 0.0
    %1505 = vmatpush1.msra.mxu0 0.0
    %1506 = vmatprep.subr.mxu0 0.0
    %1507 = vmatpush1.msra.mxu0 0.0
    %1508 = vmatprep.subr.mxu0 0.0
    %1509 = vmatpush1.msra.mxu0 0.0
    %1510 = vmatprep.subr.mxu0 0.0
    %1511 = vmatpush1.msra.mxu0 0.0
    %1512 = vmatprep.subr.mxu0 0.0
    %1513 = vmatpush1.msra.mxu0 0.0
    %1514 = vmatprep.subr.mxu0 0.0
    %1515 = vmatpush1.msra.mxu0 %v1478
    %1516 = vmatprep.subr.mxu0 0.0
    %1517 = vmatpush1.msra.mxu0 %v1477
    %1518 = vmatprep.subr.mxu0 0.0
    %1519 = vmatpush1.msra.mxu0 %v1476
    %1520 = vmatprep.subr.mxu0 0.0
    %1521 = vmatpush1.msra.mxu0 %v1475
    %1522 = vmatprep.subr.mxu0 0.0
    %1523 = vmatpush2.msra.mxu0 0.0
    %1524 = vmatprep.subr.mxu0 0.0
    %1525 = vmatpush2.msra.mxu0 0.0
    %1526 = vmatprep.subr.mxu0 0.0
    %1527 = vmatpush2.msra.mxu0 0.0
    %1528 = vmatprep.subr.mxu0 0.0
    %1529 = vmatpush2.msra.mxu0 0.0
    %1530 = vmatprep.subr.mxu0 0.0
    %1531 = vmatpush2.msra.mxu0 0.0
    %1532 = vmatprep.subr.mxu0 0.0
    %1533 = vmatpush2.msra.mxu0 0.0
    %1534 = vmatprep.subr.mxu0 0.0
    %1535 = vmatpush2.msra.mxu0 0.0
    %1536 = vmatprep.subr.mxu0 0.0
    %1537 = vmatpush2.msra.mxu0 0.0
    %1538 = vmatprep.subr.mxu0 0.0
    %1539 = vmatpush2.msra.mxu0 0.0
    %1540 = vmatprep.subr.mxu0 0.0
    %1541 = vmatpush2.msra.mxu0 0.0
    %1542 = vmatprep.subr.mxu0 0.0
    %1543 = vmatpush2.msra.mxu0 0.0
    %1544 = vmatprep.subr.mxu0 0.0
    %1545 = vmatpush2.msra.mxu0 0.0
    %1546 = vmatprep.subr.mxu0 0.0
    %1547 = vmatpush2.msra.mxu0 0.0
    %1548 = vmatprep.subr.mxu0 0.0
    %1549 = vmatpush2.msra.mxu0 0.0
    %1550 = vmatprep.subr.mxu0 0.0
    %1551 = vmatpush2.msra.mxu0 0.0
    %1552 = vmatprep.subr.mxu0 0.0
    %1553 = vmatpush2.msra.mxu0 0.0
    %1554 = vmatprep.mubr.f32.mxu0 0.0
    %1555 = vmatmul.mubr.f32.gmra.mxu0 %v1485
    %v1556 = vpop.f32.mrf.mxu0
    %v1557 = vadd.f32 %v1483, %v1556
    %v1558 = vpop.f32.mrf.mxu0
    %1559 = vmatprep.mubr.f32.mxu0 0.0
    %1560 = vmatmul.mubr.f32.gmra.mxu0 %v1488
    %v1561 = vpop.f32.mrf.mxu0
    %v1562 = vadd.f32 %v1483, %v1561
    %v1563 = vpop.f32.mrf.mxu0
    %1564 = vdwg.mxu0
    %v1565 = vmul.f32 %v1557, 0.5
    %v1566 = vmul.f32 %v1562, 0.5
    %v1567 = vmul.f32 %v1557, 0.044715
    %v1568 = vmul.f32 %v1562, 0.044715
    %v1569 = vmul.f32 %v1567, %v1557
    %v1570 = vmul.f32 %v1568, %v1562
    %v1571 = vmul.f32 %v1569, %v1557
    %v1572 = vmul.f32 %v1570, %v1562
    %v1573 = vadd.f32 %v1557, %v1571
    %v1574 = vadd.f32 %v1562, %v1572
    %v1575 = vmul.f32 %v1573, 0.7978846
    %v1576 = vmul.f32 %v1574, 0.7978846
    %v1577 = vtanh.pop %v1575
    %v1578 = vtanh.pop %v1576
    %v1579 = vadd.f32 %v1577, 1.0
    %v1580 = vadd.f32 %v1578, 1.0
    %v1581 = vmul.f32 %v1565, %v1579
    %v1582 = vmul.f32 %v1566, %v1580
    %s1583 = scalar_lea.vmem [#allocation6], 96
    %v1584 = vld [vmem:[%s1583] sm:$0xff]
    %v1585 = vld [vmem:[%s1583 + $0x8] sm:$0xff]
    %v1586 = vld [vmem:[%s1583 + $0x10] sm:$0xff]
    %v1587 = vld [vmem:[%s1583 + $0x18] sm:$0xff]
    %v1588 = vld [vmem:[%s5 + $0x7] sm:$0x1]
    %v1589 = vlaneseq
    %v1590 = vshrl.u32 %v1589, 7
    %v1591 = vsub.s32 0, %v1590
    %v1592 = vrot.slane %v1588, %v1591
    %v1594 = vsel %vm176, %v1581, 0
    %v1597 = vsel %vm176, %v1582, 0
    %1599 = vmatprep.subr.mxu0 0.0
    %1600 = vmatpush1.msra.mxu0 0.0
    %1601 = vmatprep.subr.mxu0 0.0
    %1602 = vmatpush1.msra.mxu0 0.0
    %1603 = vmatprep.subr.mxu0 0.0
    %1604 = vmatpush1.msra.mxu0 0.0
    %1605 = vmatprep.subr.mxu0 0.0
    %1606 = vmatpush1.msra.mxu0 0.0
    %1607 = vmatprep.subr.mxu0 0.0
    %1608 = vmatpush1.msra.mxu0 0.0
    %1609 = vmatprep.subr.mxu0 0.0
    %1610 = vmatpush1.msra.mxu0 0.0
    %1611 = vmatprep.subr.mxu0 0.0
    %1612 = vmatpush1.msra.mxu0 0.0
    %1613 = vmatprep.subr.mxu0 0.0
    %1614 = vmatpush1.msra.mxu0 0.0
    %1615 = vmatprep.subr.mxu0 0.0
    %1616 = vmatpush1.msra.mxu0 0.0
    %1617 = vmatprep.subr.mxu0 0.0
    %1618 = vmatpush1.msra.mxu0 0.0
    %1619 = vmatprep.subr.mxu0 0.0
    %1620 = vmatpush1.msra.mxu0 0.0
    %1621 = vmatprep.subr.mxu0 0.0
    %1622 = vmatpush1.msra.mxu0 0.0
    %1623 = vmatprep.subr.mxu0 0.0
    %1624 = vmatpush1.msra.mxu0 %v1587
    %1625 = vmatprep.subr.mxu0 0.0
    %1626 = vmatpush1.msra.mxu0 %v1586
    %1627 = vmatprep.subr.mxu0 0.0
    %1628 = vmatpush1.msra.mxu0 %v1585
    %1629 = vmatprep.subr.mxu0 0.0
    %1630 = vmatpush1.msra.mxu0 %v1584
    %1631 = vmatprep.subr.mxu0 0.0
    %1632 = vmatpush2.msra.mxu0 0.0
    %1633 = vmatprep.subr.mxu0 0.0
    %1634 = vmatpush2.msra.mxu0 0.0
    %1635 = vmatprep.subr.mxu0 0.0
    %1636 = vmatpush2.msra.mxu0 0.0
    %1637 = vmatprep.subr.mxu0 0.0
    %1638 = vmatpush2.msra.mxu0 0.0
    %1639 = vmatprep.subr.mxu0 0.0
    %1640 = vmatpush2.msra.mxu0 0.0
    %1641 = vmatprep.subr.mxu0 0.0
    %1642 = vmatpush2.msra.mxu0 0.0
    %1643 = vmatprep.subr.mxu0 0.0
    %1644 = vmatpush2.msra.mxu0 0.0
    %1645 = vmatprep.subr.mxu0 0.0
    %1646 = vmatpush2.msra.mxu0 0.0
    %1647 = vmatprep.subr.mxu0 0.0
    %1648 = vmatpush2.msra.mxu0 0.0
    %1649 = vmatprep.subr.mxu0 0.0
    %1650 = vmatpush2.msra.mxu0 0.0
    %1651 = vmatprep.subr.mxu0 0.0
    %1652 = vmatpush2.msra.mxu0 0.0
    %1653 = vmatprep.subr.mxu0 0.0
    %1654 = vmatpush2.msra.mxu0 0.0
    %1655 = vmatprep.subr.mxu0 0.0
    %1656 = vmatpush2.msra.mxu0 0.0
    %1657 = vmatprep.subr.mxu0 0.0
    %1658 = vmatpush2.msra.mxu0 0.0
    %1659 = vmatprep.subr.mxu0 0.0
    %1660 = vmatpush2.msra.mxu0 0.0
    %1661 = vmatprep.subr.mxu0 0.0
    %1662 = vmatpush2.msra.mxu0 0.0
    %1663 = vmatprep.mubr.f32.mxu0 0.0
    %1664 = vmatmul.mubr.f32.gmra.mxu0 %v1594
    %v1665 = vpop.f32.mrf.mxu0
    %v1666 = vadd.f32 %v1592, %v1665
    %v1667 = vpop.f32.mrf.mxu0
    %1668 = vmatprep.mubr.f32.mxu0 0.0
    %1669 = vmatmul.mubr.f32.gmra.mxu0 %v1597
    %v1670 = vpop.f32.mrf.mxu0
    %v1671 = vadd.f32 %v1592, %v1670
    %v1672 = vpop.f32.mrf.mxu0
    %1673 = vdwg.mxu0
    %v1674 = vadd.f32 %v1666, %v1472
    %v1675 = vadd.f32 %v1671, %v1473
    %v1676 = vld [vmem:[%s5 + $0x8] sm:$0x1]
    %v1677 = vld [vmem:[%s5 + $0x9] sm:$0x1]
    %v1678 = vsel %vm176, %v1674, 0.0
    %1679 = vadd.xlane.f32.xlu0 %v1678
    %v1680 = vpop.xlane.xlu0 %1679
    %v1681 = vsel %vm176, %v1675, 0.0
    %1682 = vadd.xlane.f32.xlu0 %v1681
    %v1683 = vpop.xlane.xlu0 %1682
    %v1684 = vmul.f32 %v1680, %v183
    %v1685 = vmul.f32 %v1683, %v183
    %v1686 = vsub.f32 %v1674, %v1684
    %v1687 = vsub.f32 %v1675, %v1685
    %v1688 = vmul.f32 %v1686, %v1686
    %v1689 = vmul.f32 %v1687, %v1687
    %v1690 = vsel %vm176, %v1688, 0.0
    %1691 = vadd.xlane.f32.xlu0 %v1690
    %v1692 = vpop.xlane.xlu0 %1691
    %v1693 = vsel %vm176, %v1689, 0.0
    %1694 = vadd.xlane.f32.xlu0 %v1693
    %v1695 = vpop.xlane.xlu0 %1694
    %v1696 = vmul.f32 %v1692, %v183
    %v1697 = vmul.f32 %v1695, %v183
    %v1698 = vadd.f32 %v1696, 1e-12
    %v1699 = vadd.f32 %v1697, 1e-12
    %v1700 = vrsqrt.pop %v1698
    %v1701 = vrsqrt.pop %v1699
    %v1702 = vmul.f32 %v1686, %v1700
    %v1703 = vmul.f32 %v1687, %v1701
    %v1704 = vlaneseq
    %v1705 = vshrl.u32 %v1704, 7
    %v1706 = vsub.s32 0, %v1705
    %v1707 = vrot.slane %v1676, %v1706
    %v1708 = vmul.f32 %v1702, %v1707
    %v1709 = vmul.f32 %v1703, %v1707
    %v1710 = vlaneseq
    %v1711 = vshrl.u32 %v1710, 7
    %v1712 = vsub.s32 0, %v1711
    %v1713 = vrot.slane %v1677, %v1712
    %v1714 = vadd.f32 %v1708, %v1713
    %v1715 = vadd.f32 %v1709, %v1713
    %s1716 = scalar_lea.vmem [#allocation2], 32
    %v1717 = vld [vmem:[%s1716] sm:$0xff]
    %v1718 = vld [vmem:[%s1716 + $0x8] sm:$0xff]
    %v1719 = vld [vmem:[%s1716 + $0x10] sm:$0xff]
    %v1720 = vld [vmem:[%s1716 + $0x18] sm:$0xff]
    %v1721 = vld [vmem:[#allocation4 + $0x1] sm:$0x1]
    %v1722 = vlaneseq
    %v1723 = vshrl.u32 %v1722, 7
    %v1724 = vsub.s32 0, %v1723
    %v1725 = vrot.slane %v1721, %v1724
    %v1727 = vsel %vm176, %v1714, 0
    %v1730 = vsel %vm176, %v1715, 0
    %1732 = vmatprep.subr.mxu0 0.0
    %1733 = vmatpush1.msra.mxu0 0.0
    %1734 = vmatprep.subr.mxu0 0.0
    %1735 = vmatpush1.msra.mxu0 0.0
    %1736 = vmatprep.subr.mxu0 0.0
    %1737 = vmatpush1.msra.mxu0 0.0
    %1738 = vmatprep.subr.mxu0 0.0
    %1739 = vmatpush1.msra.mxu0 0.0
    %1740 = vmatprep.subr.mxu0 0.0
    %1741 = vmatpush1.msra.mxu0 0.0
    %1742 = vmatprep.subr.mxu0 0.0
    %1743 = vmatpush1.msra.mxu0 0.0
    %1744 = vmatprep.subr.mxu0 0.0
    %1745 = vmatpush1.msra.mxu0 0.0
    %1746 = vmatprep.subr.mxu0 0.0
    %1747 = vmatpush1.msra.mxu0 0.0
    %1748 = vmatprep.subr.mxu0 0.0
    %1749 = vmatpush1.msra.mxu0 0.0
    %1750 = vmatprep.subr.mxu0 0.0
    %1751 = vmatpush1.msra.mxu0 0.0
    %1752 = vmatprep.subr.mxu0 0.0
    %1753 = vmatpush1.msra.mxu0 0.0
    %1754 = vmatprep.subr.mxu0 0.0
    %1755 = vmatpush1.msra.mxu0 0.0
    %1756 = vmatprep.subr.mxu0 0.0
    %1757 = vmatpush1.msra.mxu0 %v1720
    %1758 = vmatprep.subr.mxu0 0.0
    %1759 = vmatpush1.msra.mxu0 %v1719
    %1760 = vmatprep.subr.mxu0 0.0
    %1761 = vmatpush1.msra.mxu0 %v1718
    %1762 = vmatprep.subr.mxu0 0.0
    %1763 = vmatpush1.msra.mxu0 %v1717
    %1764 = vmatprep.subr.mxu0 0.0
    %1765 = vmatpush2.msra.mxu0 0.0
    %1766 = vmatprep.subr.mxu0 0.0
    %1767 = vmatpush2.msra.mxu0 0.0
    %1768 = vmatprep.subr.mxu0 0.0
    %1769 = vmatpush2.msra.mxu0 0.0
    %1770 = vmatprep.subr.mxu0 0.0
    %1771 = vmatpush2.msra.mxu0 0.0
    %1772 = vmatprep.subr.mxu0 0.0
    %1773 = vmatpush2.msra.mxu0 0.0
    %1774 = vmatprep.subr.mxu0 0.0
    %1775 = vmatpush2.msra.mxu0 0.0
    %1776 = vmatprep.subr.mxu0 0.0
    %1777 = vmatpush2.msra.mxu0 0.0
    %1778 = vmatprep.subr.mxu0 0.0
    %1779 = vmatpush2.msra.mxu0 0.0
    %1780 = vmatprep.subr.mxu0 0.0
    %1781 = vmatpush2.msra.mxu0 0.0
    %1782 = vmatprep.subr.mxu0 0.0
    %1783 = vmatpush2.msra.mxu0 0.0
    %1784 = vmatprep.subr.mxu0 0.0
    %1785 = vmatpush2.msra.mxu0 0.0
    %1786 = vmatprep.subr.mxu0 0.0
    %1787 = vmatpush2.msra.mxu0 0.0
    %1788 = vmatprep.subr.mxu0 0.0
    %1789 = vmatpush2.msra.mxu0 0.0
    %1790 = vmatprep.subr.mxu0 0.0
    %1791 = vmatpush2.msra.mxu0 0.0
    %1792 = vmatprep.subr.mxu0 0.0
    %1793 = vmatpush2.msra.mxu0 0.0
    %1794 = vmatprep.subr.mxu0 0.0
    %1795 = vmatpush2.msra.mxu0 0.0
    %1796 = vmatprep.mubr.f32.mxu0 0.0
    %1797 = vmatmul.mubr.f32.gmra.mxu0 %v1727
    %v1798 = vpop.f32.mrf.mxu0
    %v1799 = vadd.f32 %v1725, %v1798
    %v1800 = vpop.f32.mrf.mxu0
    %1801 = vmatprep.mubr.f32.mxu0 0.0
    %1802 = vmatmul.mubr.f32.gmra.mxu0 %v1730
    %v1803 = vpop.f32.mrf.mxu0
    %v1804 = vadd.f32 %v1725, %v1803
    %v1805 = vpop.f32.mrf.mxu0
    %1806 = vdwg.mxu0
    %s1807 = scalar_lea.vmem [#allocation6], 128
    %v1808 = vld [vmem:[%s1807] sm:$0xff]
    %v1809 = vld [vmem:[%s1807 + $0x8] sm:$0xff]
    %v1810 = vld [vmem:[%s1807 + $0x10] sm:$0xff]
    %v1811 = vld [vmem:[%s1807 + $0x18] sm:$0xff]
    %1814 = vrot.lane.b32.xlu0 %v1799, 120
    %v1815 = vpop.permute.xlu0 %1814
    %1816 = vrot.lane.b32.xlu0 %v1804, 120
    %v1817 = vpop.permute.xlu0 %1816
    %v1818 = vsel %vm319, %v1799, 0
    %v1820 = vsel %vm319, %v1804, 0
    %v1822 = vsel %vm319, %v1815, 0
    %v1824 = vsel %vm319, %v1817, 0
    %1826 = vmatprep.subr.mxu0 0.0
    %1827 = vmatpush1.xpose.msra.mxu0 0.0
    %1828 = vmatprep.subr.mxu0 0.0
    %1829 = vmatpush1.xpose.msra.mxu0 0.0
    %1830 = vmatprep.subr.mxu0 0.0
    %1831 = vmatpush1.xpose.msra.mxu0 0.0
    %1832 = vmatprep.subr.mxu0 0.0
    %1833 = vmatpush1.xpose.msra.mxu0 0.0
    %1834 = vmatprep.subr.mxu0 0.0
    %1835 = vmatpush1.xpose.msra.mxu0 0.0
    %1836 = vmatprep.subr.mxu0 0.0
    %1837 = vmatpush1.xpose.msra.mxu0 0.0
    %1838 = vmatprep.subr.mxu0 0.0
    %1839 = vmatpush1.xpose.msra.mxu0 0.0
    %1840 = vmatprep.subr.mxu0 0.0
    %1841 = vmatpush1.xpose.msra.mxu0 0.0
    %1842 = vmatprep.subr.mxu0 0.0
    %1843 = vmatpush1.xpose.msra.mxu0 0.0
    %1844 = vmatprep.subr.mxu0 0.0
    %1845 = vmatpush1.xpose.msra.mxu0 0.0
    %1846 = vmatprep.subr.mxu0 0.0
    %1847 = vmatpush1.xpose.msra.mxu0 0.0
    %1848 = vmatprep.subr.mxu0 0.0
    %1849 = vmatpush1.xpose.msra.mxu0 0.0
    %1850 = vmatprep.subr.mxu0 0.0
    %1851 = vmatpush1.xpose.msra.mxu0 0.0
    %1852 = vmatprep.subr.mxu0 0.0
    %1853 = vmatpush1.xpose.msra.mxu0 0.0
    %1854 = vmatprep.subr.mxu0 0.0
    %1855 = vmatpush1.xpose.msra.mxu0 %v1824
    %1856 = vmatprep.subr.mxu0 0.0
    %1857 = vmatpush1.xpose.msra.mxu0 %v1822
    %1858 = vmatprep.subr.mxu0 0.0
    %1859 = vmatpush2.xpose.msra.mxu0 0.0
    %1860 = vmatprep.subr.mxu0 0.0
    %1861 = vmatpush2.xpose.msra.mxu0 0.0
    %1862 = vmatprep.subr.mxu0 0.0
    %1863 = vmatpush2.xpose.msra.mxu0 0.0
    %1864 = vmatprep.subr.mxu0 0.0
    %1865 = vmatpush2.xpose.msra.mxu0 0.0
    %1866 = vmatprep.subr.mxu0 0.0
    %1867 = vmatpush2.xpose.msra.mxu0 0.0
    %1868 = vmatprep.subr.mxu0 0.0
    %1869 = vmatpush2.xpose.msra.mxu0 0.0
    %1870 = vmatprep.subr.mxu0 0.0
    %1871 = vmatpush2.xpose.msra.mxu0 0.0
    %1872 = vmatprep.subr.mxu0 0.0
    %1873 = vmatpush2.xpose.msra.mxu0 0.0
    %1874 = vmatprep.subr.mxu0 0.0
    %1875 = vmatpush2.xpose.msra.mxu0 0.0
    %1876 = vmatprep.subr.mxu0 0.0
    %1877 = vmatpush2.xpose.msra.mxu0 0.0
    %1878 = vmatprep.subr.mxu0 0.0
    %1879 = vmatpush2.xpose.msra.mxu0 0.0
    %1880 = vmatprep.subr.mxu0 0.0
    %1881 = vmatpush2.xpose.msra.mxu0 0.0
    %1882 = vmatprep.subr.mxu0 0.0
    %1883 = vmatpush2.xpose.msra.mxu0 0.0
    %1884 = vmatprep.subr.mxu0 0.0
    %1885 = vmatpush2.xpose.msra.mxu0 0.0
    %1886 = vmatprep.subr.mxu0 0.0
    %1887 = vmatpush2.xpose.msra.mxu0 0.0
    %1888 = vmatprep.subr.mxu0 0.0
    %1889 = vmatpush2.xpose.msra.mxu0 0.0
    %1890 = vmatprep.mubr.f32.mxu0 0.0
    %1891 = vmatmul.mubr.f32.gmra.mxu0 %v1818
    %v1892 = vpop.f32.mrf.mxu0
    %v1893 = vadd.f32 0.0, %v1892
    %v1894 = vpop.f32.mrf.mxu0
    %1895 = vmatprep.mubr.f32.mxu0 0.0
    %1896 = vmatmul.mubr.f32.gmra.mxu0 %v1820
    %v1897 = vpop.f32.mrf.mxu0
    %v1898 = vadd.f32 0.0, %v1897
    %v1899 = vpop.f32.mrf.mxu0
    %1900 = vdwg.mxu0
    %v1901 = vmul.f32 %v1893, 0.35355338
    %v1902 = vmul.f32 %v1898, 0.35355338
    %v1903 = vadd.f32 %v1901, %v216
    %v1904 = vadd.f32 %v1902, %v217
    %v1905 = vmul.f32 %v1903, 1.442695
    %v1906 = vpow.pop %v1905
    %v1907 = vmul.f32 %v1904, 1.442695
    %v1908 = vpow.pop %v1907
    %v1909 = vsel %vm411, %v1906, 0.0
    %1910 = vadd.xlane.f32.xlu0 %v1909
    %v1911 = vpop.xlane.xlu0 %1910
    %v1912 = vsel %vm411, %v1908, 0.0
    %1913 = vadd.xlane.f32.xlu0 %v1912
    %v1914 = vpop.xlane.xlu0 %1913
    %v1915 = vrcp.pop %v1911
    %v1916 = vrcp.pop %v1914
    %v1917 = vmul.f32 %v1906, %v1915
    %v1918 = vmul.f32 %v1908, %v1916
    %1919 = vrot.lane.b32.xlu0 %v1799, 112
    %v1920 = vpop.permute.xlu0 %1919
    %1921 = vrot.lane.b32.xlu0 %v1804, 112
    %v1922 = vpop.permute.xlu0 %1921
    %v1926 = vsel %vm411, %v1917, 0
    %v1929 = vsel %vm411, %v1918, 0
    %1931 = vmatprep.subr.mxu0 0.0
    %1932 = vmatpush1.msra.mxu0 0.0
    %1933 = vmatprep.subr.mxu0 0.0
    %1934 = vmatpush1.msra.mxu0 0.0
    %1935 = vmatprep.subr.mxu0 0.0
    %1936 = vmatpush1.msra.mxu0 0.0
    %1937 = vmatprep.subr.mxu0 0.0
    %1938 = vmatpush1.msra.mxu0 0.0
    %1939 = vmatprep.subr.mxu0 0.0
    %1940 = vmatpush1.msra.mxu0 0.0
    %1941 = vmatprep.subr.mxu0 0.0
    %1942 = vmatpush1.msra.mxu0 0.0
    %1943 = vmatprep.subr.mxu0 0.0
    %1944 = vmatpush1.msra.mxu0 0.0
    %1945 = vmatprep.subr.mxu0 0.0
    %1946 = vmatpush1.msra.mxu0 0.0
    %1947 = vmatprep.subr.mxu0 0.0
    %1948 = vmatpush1.msra.mxu0 0.0
    %1949 = vmatprep.subr.mxu0 0.0
    %1950 = vmatpush1.msra.mxu0 0.0
    %1951 = vmatprep.subr.mxu0 0.0
    %1952 = vmatpush1.msra.mxu0 0.0
    %1953 = vmatprep.subr.mxu0 0.0
    %1954 = vmatpush1.msra.mxu0 0.0
    %1955 = vmatprep.subr.mxu0 0.0
    %1956 = vmatpush1.msra.mxu0 0.0
    %1957 = vmatprep.subr.mxu0 0.0
    %1958 = vmatpush1.msra.mxu0 0.0
    %1959 = vmatprep.subr.mxu0 0.0
    %1960 = vmatpush1.msra.mxu0 %v1922
    %1961 = vmatprep.subr.mxu0 0.0
    %1962 = vmatpush1.msra.mxu0 %v1920
    %1963 = vmatprep.subr.mxu0 0.0
    %1964 = vmatpush2.msra.mxu0 0.0
    %1965 = vmatprep.subr.mxu0 0.0
    %1966 = vmatpush2.msra.mxu0 0.0
    %1967 = vmatprep.subr.mxu0 0.0
    %1968 = vmatpush2.msra.mxu0 0.0
    %1969 = vmatprep.subr.mxu0 0.0
    %1970 = vmatpush2.msra.mxu0 0.0
    %1971 = vmatprep.subr.mxu0 0.0
    %1972 = vmatpush2.msra.mxu0 0.0
    %1973 = vmatprep.subr.mxu0 0.0
    %1974 = vmatpush2.msra.mxu0 0.0
    %1975 = vmatprep.subr.mxu0 0.0
    %1976 = vmatpush2.msra.mxu0 0.0
    %1977 = vmatprep.subr.mxu0 0.0
    %1978 = vmatpush2.msra.mxu0 0.0
    %1979 = vmatprep.subr.mxu0 0.0
    %1980 = vmatpush2.msra.mxu0 0.0
    %1981 = vmatprep.subr.mxu0 0.0
    %1982 = vmatpush2.msra.mxu0 0.0
    %1983 = vmatprep.subr.mxu0 0.0
    %1984 = vmatpush2.msra.mxu0 0.0
    %1985 = vmatprep.subr.mxu0 0.0
    %1986 = vmatpush2.msra.mxu0 0.0
    %1987 = vmatprep.subr.mxu0 0.0
    %1988 = vmatpush2.msra.mxu0 0.0
    %1989 = vmatprep.subr.mxu0 0.0
    %1990 = vmatpush2.msra.mxu0 0.0
    %1991 = vmatprep.subr.mxu0 0.0
    %1992 = vmatpush2.msra.mxu0 0.0
    %1993 = vmatprep.subr.mxu0 0.0
    %1994 = vmatpush2.msra.mxu0 0.0
    %1995 = vmatprep.mubr.f32.mxu0 0.0
    %1996 = vmatmul.mubr.f32.gmra.mxu0 %v1926
    %v1997 = vpop.f32.mrf.mxu0
    %v1998 = vadd.f32 0.0, %v1997
    %v1999 = vpop.f32.mrf.mxu0
    %2000 = vmatprep.mubr.f32.mxu0 0.0
    %2001 = vmatmul.mubr.f32.gmra.mxu0 %v1929
    %v2002 = vpop.f32.mrf.mxu0
    %v2003 = vadd.f32 0.0, %v2002
    %v2004 = vpop.f32.mrf.mxu0
    %2005 = vdwg.mxu0
    %2006 = vrot.lane.b32.xlu0 %v1799, 104
    %v2007 = vpop.permute.xlu0 %2006
    %2008 = vrot.lane.b32.xlu0 %v1804, 104
    %v2009 = vpop.permute.xlu0 %2008
    %2010 = vrot.lane.b32.xlu0 %v1799, 96
    %v2011 = vpop.permute.xlu0 %2010
    %2012 = vrot.lane.b32.xlu0 %v1804, 96
    %v2013 = vpop.permute.xlu0 %2012
    %v2014 = vsel %vm319, %v2007, 0
    %v2016 = vsel %vm319, %v2009, 0
    %v2018 = vsel %vm319, %v2011, 0
    %v2020 = vsel %vm319, %v2013, 0
    %2022 = vmatprep.subr.mxu0 0.0
    %2023 = vmatpush1.xpose.msra.mxu0 0.0
    %2024 = vmatprep.subr.mxu0 0.0
    %2025 = vmatpush1.xpose.msra.mxu0 0.0
    %2026 = vmatprep.subr.mxu0 0.0
    %2027 = vmatpush1.xpose.msra.mxu0 0.0
    %2028 = vmatprep.subr.mxu0 0.0
    %2029 = vmatpush1.xpose.msra.mxu0 0.0
    %2030 = vmatprep.subr.mxu0 0.0
    %2031 = vmatpush1.xpose.msra.mxu0 0.0
    %2032 = vmatprep.subr.mxu0 0.0
    %2033 = vmatpush1.xpose.msra.mxu0 0.0
    %2034 = vmatprep.subr.mxu0 0.0
    %2035 = vmatpush1.xpose.msra.mxu0 0.0
    %2036 = vmatprep.subr.mxu0 0.0
    %2037 = vmatpush1.xpose.msra.mxu0 0.0
    %2038 = vmatprep.subr.mxu0 0.0
    %2039 = vmatpush1.xpose.msra.mxu0 0.0
    %2040 = vmatprep.subr.mxu0 0.0
    %2041 = vmatpush1.xpose.msra.mxu0 0.0
    %2042 = vmatprep.subr.mxu0 0.0
    %2043 = vmatpush1.xpose.msra.mxu0 0.0
    %2044 = vmatprep.subr.mxu0 0.0
    %2045 = vmatpush1.xpose.msra.mxu0 0.0
    %2046 = vmatprep.subr.mxu0 0.0
    %2047 = vmatpush1.xpose.msra.mxu0 0.0
    %2048 = vmatprep.subr.mxu0 0.0
    %2049 = vmatpush1.xpose.msra.mxu0 0.0
    %2050 = vmatprep.subr.mxu0 0.0
    %2051 = vmatpush1.xpose.msra.mxu0 %v2020
    %2052 = vmatprep.subr.mxu0 0.0
    %2053 = vmatpush1.xpose.msra.mxu0 %v2018
    %2054 = vmatprep.subr.mxu0 0.0
    %2055 = vmatpush2.xpose.msra.mxu0 0.0
    %2056 = vmatprep.subr.mxu0 0.0
    %2057 = vmatpush2.xpose.msra.mxu0 0.0
    %2058 = vmatprep.subr.mxu0 0.0
    %2059 = vmatpush2.xpose.msra.mxu0 0.0
    %2060 = vmatprep.subr.mxu0 0.0
    %2061 = vmatpush2.xpose.msra.mxu0 0.0
    %2062 = vmatprep.subr.mxu0 0.0
    %2063 = vmatpush2.xpose.msra.mxu0 0.0
    %2064 = vmatprep.subr.mxu0 0.0
    %2065 = vmatpush2.xpose.msra.mxu0 0.0
    %2066 = vmatprep.subr.mxu0 0.0
    %2067 = vmatpush2.xpose.msra.mxu0 0.0
    %2068 = vmatprep.subr.mxu0 0.0
    %2069 = vmatpush2.xpose.msra.mxu0 0.0
    %2070 = vmatprep.subr.mxu0 0.0
    %2071 = vmatpush2.xpose.msra.mxu0 0.0
    %2072 = vmatprep.subr.mxu0 0.0
    %2073 = vmatpush2.xpose.msra.mxu0 0.0
    %2074 = vmatprep.subr.mxu0 0.0
    %2075 = vmatpush2.xpose.msra.mxu0 0.0
    %2076 = vmatprep.subr.mxu0 0.0
    %2077 = vmatpush2.xpose.msra.mxu0 0.0
    %2078 = vmatprep.subr.mxu0 0.0
    %2079 = vmatpush2.xpose.msra.mxu0 0.0
    %2080 = vmatprep.subr.mxu0 0.0
    %2081 = vmatpush2.xpose.msra.mxu0 0.0
    %2082 = vmatprep.subr.mxu0 0.0
    %2083 = vmatpush2.xpose.msra.mxu0 0.0
    %2084 = vmatprep.subr.mxu0 0.0
    %2085 = vmatpush2.xpose.msra.mxu0 0.0
    %2086 = vmatprep.mubr.f32.mxu0 0.0
    %2087 = vmatmul.mubr.f32.gmra.mxu0 %v2014
    %v2088 = vpop.f32.mrf.mxu0
    %v2089 = vadd.f32 0.0, %v2088
    %v2090 = vpop.f32.mrf.mxu0
    %2091 = vmatprep.mubr.f32.mxu0 0.0
    %2092 = vmatmul.mubr.f32.gmra.mxu0 %v2016
    %v2093 = vpop.f32.mrf.mxu0
    %v2094 = vadd.f32 0.0, %v2093
    %v2095 = vpop.f32.mrf.mxu0
    %2096 = vdwg.mxu0
    %v2097 = vmul.f32 %v2089, 0.35355338
    %v2098 = vmul.f32 %v2094, 0.35355338
    %v2099 = vadd.f32 %v2097, %v216
    %v2100 = vadd.f32 %v2098, %v217
    %v2101 = vmul.f32 %v2099, 1.442695
    %v2102 = vpow.pop %v2101
    %v2103 = vmul.f32 %v2100, 1.442695
    %v2104 = vpow.pop %v2103
    %v2105 = vsel %vm411, %v2102, 0.0
    %2106 = vadd.xlane.f32.xlu0 %v2105
    %v2107 = vpop.xlane.xlu0 %2106
    %v2108 = vsel %vm411, %v2104, 0.0
    %2109 = vadd.xlane.f32.xlu0 %v2108
    %v2110 = vpop.xlane.xlu0 %2109
    %v2111 = vrcp.pop %v2107
    %v2112 = vrcp.pop %v2110
    %v2113 = vmul.f32 %v2102, %v2111
    %v2114 = vmul.f32 %v2104, %v2112
    %2115 = vrot.lane.b32.xlu0 %v1799, 88
    %v2116 = vpop.permute.xlu0 %2115
    %2117 = vrot.lane.b32.xlu0 %v1804, 88
    %v2118 = vpop.permute.xlu0 %2117
    %v2122 = vsel %vm411, %v2113, 0
    %v2125 = vsel %vm411, %v2114, 0
    %2127 = vmatprep.subr.mxu0 0.0
    %2128 = vmatpush1.msra.mxu0 0.0
    %2129 = vmatprep.subr.mxu0 0.0
    %2130 = vmatpush1.msra.mxu0 0.0
    %2131 = vmatprep.subr.mxu0 0.0
    %2132 = vmatpush1.msra.mxu0 0.0
    %2133 = vmatprep.subr.mxu0 0.0
    %2134 = vmatpush1.msra.mxu0 0.0
    %2135 = vmatprep.subr.mxu0 0.0
    %2136 = vmatpush1.msra.mxu0 0.0
    %2137 = vmatprep.subr.mxu0 0.0
    %2138 = vmatpush1.msra.mxu0 0.0
    %2139 = vmatprep.subr.mxu0 0.0
    %2140 = vmatpush1.msra.mxu0 0.0
    %2141 = vmatprep.subr.mxu0 0.0
    %2142 = vmatpush1.msra.mxu0 0.0
    %2143 = vmatprep.subr.mxu0 0.0
    %2144 = vmatpush1.msra.mxu0 0.0
    %2145 = vmatprep.subr.mxu0 0.0
    %2146 = vmatpush1.msra.mxu0 0.0
    %2147 = vmatprep.subr.mxu0 0.0
    %2148 = vmatpush1.msra.mxu0 0.0
    %2149 = vmatprep.subr.mxu0 0.0
    %2150 = vmatpush1.msra.mxu0 0.0
    %2151 = vmatprep.subr.mxu0 0.0
    %2152 = vmatpush1.msra.mxu0 0.0
    %2153 = vmatprep.subr.mxu0 0.0
    %2154 = vmatpush1.msra.mxu0 0.0
    %2155 = vmatprep.subr.mxu0 0.0
    %2156 = vmatpush1.msra.mxu0 %v2118
    %2157 = vmatprep.subr.mxu0 0.0
    %2158 = vmatpush1.msra.mxu0 %v2116
    %2159 = vmatprep.subr.mxu0 0.0
    %2160 = vmatpush2.msra.mxu0 0.0
    %2161 = vmatprep.subr.mxu0 0.0
    %2162 = vmatpush2.msra.mxu0 0.0
    %2163 = vmatprep.subr.mxu0 0.0
    %2164 = vmatpush2.msra.mxu0 0.0
    %2165 = vmatprep.subr.mxu0 0.0
    %2166 = vmatpush2.msra.mxu0 0.0
    %2167 = vmatprep.subr.mxu0 0.0
    %2168 = vmatpush2.msra.mxu0 0.0
    %2169 = vmatprep.subr.mxu0 0.0
    %2170 = vmatpush2.msra.mxu0 0.0
    %2171 = vmatprep.subr.mxu0 0.0
    %2172 = vmatpush2.msra.mxu0 0.0
    %2173 = vmatprep.subr.mxu0 0.0
    %2174 = vmatpush2.msra.mxu0 0.0
    %2175 = vmatprep.subr.mxu0 0.0
    %2176 = vmatpush2.msra.mxu0 0.0
    %2177 = vmatprep.subr.mxu0 0.0
    %2178 = vmatpush2.msra.mxu0 0.0
    %2179 = vmatprep.subr.mxu0 0.0
    %2180 = vmatpush2.msra.mxu0 0.0
    %2181 = vmatprep.subr.mxu0 0.0
    %2182 = vmatpush2.msra.mxu0 0.0
    %2183 = vmatprep.subr.mxu0 0.0
    %2184 = vmatpush2.msra.mxu0 0.0
    %2185 = vmatprep.subr.mxu0 0.0
    %2186 = vmatpush2.msra.mxu0 0.0
    %2187 = vmatprep.subr.mxu0 0.0
    %2188 = vmatpush2.msra.mxu0 0.0
    %2189 = vmatprep.subr.mxu0 0.0
    %2190 = vmatpush2.msra.mxu0 0.0
    %2191 = vmatprep.mubr.f32.mxu0 0.0
    %2192 = vmatmul.mubr.f32.gmra.mxu0 %v2122
    %v2193 = vpop.f32.mrf.mxu0
    %v2194 = vadd.f32 0.0, %v2193
    %v2195 = vpop.f32.mrf.mxu0
    %2196 = vmatprep.mubr.f32.mxu0 0.0
    %2197 = vmatmul.mubr.f32.gmra.mxu0 %v2125
    %v2198 = vpop.f32.mrf.mxu0
    %v2199 = vadd.f32 0.0, %v2198
    %v2200 = vpop.f32.mrf.mxu0
    %2201 = vdwg.mxu0
    %v2203 = vsel %vm319, %v2194, 0
    %v2206 = vsel %vm319, %v2199, 0
    %2208 = vmatprep.subr.mxu0 0.0
    %2209 = vmatpush1.msra.mxu0 0.0
    %2210 = vmatprep.subr.mxu0 0.0
    %2211 = vmatpush1.msra.mxu0 0.0
    %2212 = vmatprep.subr.mxu0 0.0
    %2213 = vmatpush1.msra.mxu0 0.0
    %2214 = vmatprep.subr.mxu0 0.0
    %2215 = vmatpush1.msra.mxu0 0.0
    %2216 = vmatprep.subr.mxu0 0.0
    %2217 = vmatpush1.msra.mxu0 0.0
    %2218 = vmatprep.subr.mxu0 0.0
    %2219 = vmatpush1.msra.mxu0 0.0
    %2220 = vmatprep.subr.mxu0 0.0
    %2221 = vmatpush1.msra.mxu0 0.0
    %2222 = vmatprep.subr.mxu0 0.0
    %2223 = vmatpush1.msra.mxu0 0.0
    %2224 = vmatprep.subr.mxu0 0.0
    %2225 = vmatpush1.msra.mxu0 0.0
    %2226 = vmatprep.subr.mxu0 0.0
    %2227 = vmatpush1.msra.mxu0 0.0
    %2228 = vmatprep.subr.mxu0 0.0
    %2229 = vmatpush1.msra.mxu0 0.0
    %2230 = vmatprep.subr.mxu0 0.0
    %2231 = vmatpush1.msra.mxu0 0.0
    %2232 = vmatprep.subr.mxu0 0.0
    %2233 = vmatpush1.msra.mxu0 0.0
    %2234 = vmatprep.subr.mxu0 0.0
    %2235 = vmatpush1.msra.mxu0 0.0
    %2236 = vmatprep.subr.mxu0 0.0
    %2237 = vmatpush1.msra.mxu0 0.0
    %2238 = vmatprep.subr.mxu0 0.0
    %2239 = vmatpush1.msra.mxu0 %v1809
    %2240 = vmatprep.subr.mxu0 0.0
    %2241 = vmatpush2.msra.mxu0 0.0
    %2242 = vmatprep.subr.mxu0 0.0
    %2243 = vmatpush2.msra.mxu0 0.0
    %2244 = vmatprep.subr.mxu0 0.0
    %2245 = vmatpush2.msra.mxu0 0.0
    %2246 = vmatprep.subr.mxu0 0.0
    %2247 = vmatpush2.msra.mxu0 0.0
    %2248 = vmatprep.subr.mxu0 0.0
    %2249 = vmatpush2.msra.mxu0 0.0
    %2250 = vmatprep.subr.mxu0 0.0
    %2251 = vmatpush2.msra.mxu0 0.0
    %2252 = vmatprep.subr.mxu0 0.0
    %2253 = vmatpush2.msra.mxu0 0.0
    %2254 = vmatprep.subr.mxu0 0.0
    %2255 = vmatpush2.msra.mxu0 0.0
    %2256 = vmatprep.subr.mxu0 0.0
    %2257 = vmatpush2.msra.mxu0 0.0
    %2258 = vmatprep.subr.mxu0 0.0
    %2259 = vmatpush2.msra.mxu0 0.0
    %2260 = vmatprep.subr.mxu0 0.0
    %2261 = vmatpush2.msra.mxu0 0.0
    %2262 = vmatprep.subr.mxu0 0.0
    %2263 = vmatpush2.msra.mxu0 0.0
    %2264 = vmatprep.subr.mxu0 0.0
    %2265 = vmatpush2.msra.mxu0 0.0
    %2266 = vmatprep.subr.mxu0 0.0
    %2267 = vmatpush2.msra.mxu0 0.0
    %2268 = vmatprep.subr.mxu0 0.0
    %2269 = vmatpush2.msra.mxu0 0.0
    %2270 = vmatprep.subr.mxu0 0.0
    %2271 = vmatpush2.msra.mxu0 0.0
    %2272 = vmatprep.mubr.f32.mxu0 0.0
    %2273 = vmatmul.mubr.f32.gmra.mxu0 %v2203
    %v2274 = vpop.f32.mrf.mxu0
    %v2275 = vadd.f32 0.0, %v2274
    %v2276 = vpop.f32.mrf.mxu0
    %2277 = vmatprep.mubr.f32.mxu0 0.0
    %2278 = vmatmul.mubr.f32.gmra.mxu0 %v2206
    %v2279 = vpop.f32.mrf.mxu0
    %v2280 = vadd.f32 0.0, %v2279
    %v2281 = vpop.f32.mrf.mxu0
    %2282 = vdwg.mxu0
    %v2284 = vsel %vm319, %v1998, 0
    %v2287 = vsel %vm319, %v2003, 0
    %2289 = vmatprep.subr.mxu0 0.0
    %2290 = vmatpush1.msra.mxu0 0.0
    %2291 = vmatprep.subr.mxu0 0.0
    %2292 = vmatpush1.msra.mxu0 0.0
    %2293 = vmatprep.subr.mxu0 0.0
    %2294 = vmatpush1.msra.mxu0 0.0
    %2295 = vmatprep.subr.mxu0 0.0
    %2296 = vmatpush1.msra.mxu0 0.0
    %2297 = vmatprep.subr.mxu0 0.0
    %2298 = vmatpush1.msra.mxu0 0.0
    %2299 = vmatprep.subr.mxu0 0.0
    %2300 = vmatpush1.msra.mxu0 0.0
    %2301 = vmatprep.subr.mxu0 0.0
    %2302 = vmatpush1.msra.mxu0 0.0
    %2303 = vmatprep.subr.mxu0 0.0
    %2304 = vmatpush1.msra.mxu0 0.0
    %2305 = vmatprep.subr.mxu0 0.0
    %2306 = vmatpush1.msra.mxu0 0.0
    %2307 = vmatprep.subr.mxu0 0.0
    %2308 = vmatpush1.msra.mxu0 0.0
    %2309 = vmatprep.subr.mxu0 0.0
    %2310 = vmatpush1.msra.mxu0 0.0
    %2311 = vmatprep.subr.mxu0 0.0
    %2312 = vmatpush1.msra.mxu0 0.0
    %2313 = vmatprep.subr.mxu0 0.0
    %2314 = vmatpush1.msra.mxu0 0.0
    %2315 = vmatprep.subr.mxu0 0.0
    %2316 = vmatpush1.msra.mxu0 0.0
    %2317 = vmatprep.subr.mxu0 0.0
    %2318 = vmatpush1.msra.mxu0 0.0
    %2319 = vmatprep.subr.mxu0 0.0
    %2320 = vmatpush1.msra.mxu0 %v1808
    %2321 = vmatprep.subr.mxu0 0.0
    %2322 = vmatpush2.msra.mxu0 0.0
    %2323 = vmatprep.subr.mxu0 0.0
    %2324 = vmatpush2.msra.mxu0 0.0
    %2325 = vmatprep.subr.mxu0 0.0
    %2326 = vmatpush2.msra.mxu0 0.0
    %2327 = vmatprep.subr.mxu0 0.0
    %2328 = vmatpush2.msra.mxu0 0.0
    %2329 = vmatprep.subr.mxu0 0.0
    %2330 = vmatpush2.msra.mxu0 0.0
    %2331 = vmatprep.subr.mxu0 0.0
    %2332 = vmatpush2.msra.mxu0 0.0
    %2333 = vmatprep.subr.mxu0 0.0
    %2334 = vmatpush2.msra.mxu0 0.0
    %2335 = vmatprep.subr.mxu0 0.0
    %2336 = vmatpush2.msra.mxu0 0.0
    %2337 = vmatprep.subr.mxu0 0.0
    %2338 = vmatpush2.msra.mxu0 0.0
    %2339 = vmatprep.subr.mxu0 0.0
    %2340 = vmatpush2.msra.mxu0 0.0
    %2341 = vmatprep.subr.mxu0 0.0
    %2342 = vmatpush2.msra.mxu0 0.0
    %2343 = vmatprep.subr.mxu0 0.0
    %2344 = vmatpush2.msra.mxu0 0.0
    %2345 = vmatprep.subr.mxu0 0.0
    %2346 = vmatpush2.msra.mxu0 0.0
    %2347 = vmatprep.subr.mxu0 0.0
    %2348 = vmatpush2.msra.mxu0 0.0
    %2349 = vmatprep.subr.mxu0 0.0
    %2350 = vmatpush2.msra.mxu0 0.0
    %2351 = vmatprep.subr.mxu0 0.0
    %2352 = vmatpush2.msra.mxu0 0.0
    %2353 = vmatprep.mubr.f32.mxu0 0.0
    %2354 = vmatmul.mubr.f32.gmra.mxu0 %v2284
    %v2355 = vpop.f32.mrf.mxu0
    %v2356 = vadd.f32 %v2275, %v2355
    %v2357 = vpop.f32.mrf.mxu0
    %2358 = vmatprep.mubr.f32.mxu0 0.0
    %2359 = vmatmul.mubr.f32.gmra.mxu0 %v2287
    %v2360 = vpop.f32.mrf.mxu0
    %v2361 = vadd.f32 %v2280, %v2360
    %v2362 = vpop.f32.mrf.mxu0
    %2363 = vdwg.mxu0
    %2364 = vrot.lane.b32.xlu0 %v1799, 80
    %v2365 = vpop.permute.xlu0 %2364
    %2366 = vrot.lane.b32.xlu0 %v1804, 80
    %v2367 = vpop.permute.xlu0 %2366
    %2368 = vrot.lane.b32.xlu0 %v1799, 72
    %v2369 = vpop.permute.xlu0 %2368
    %2370 = vrot.lane.b32.xlu0 %v1804, 72
    %v2371 = vpop.permute.xlu0 %2370
    %v2372 = vsel %vm319, %v2365, 0
    %v2374 = vsel %vm319, %v2367, 0
    %v2376 = vsel %vm319, %v2369, 0
    %v2378 = vsel %vm319, %v2371, 0
    %2380 = vmatprep.subr.mxu0 0.0
    %2381 = vmatpush1.xpose.msra.mxu0 0.0
    %2382 = vmatprep.subr.mxu0 0.0
    %2383 = vmatpush1.xpose.msra.mxu0 0.0
    %2384 = vmatprep.subr.mxu0 0.0
    %2385 = vmatpush1.xpose.msra.mxu0 0.0
    %2386 = vmatprep.subr.mxu0 0.0
    %2387 = vmatpush1.xpose.msra.mxu0 0.0
    %2388 = vmatprep.subr.mxu0 0.0
    %2389 = vmatpush1.xpose.msra.mxu0 0.0
    %2390 = vmatprep.subr.mxu0 0.0
    %2391 = vmatpush1.xpose.msra.mxu0 0.0
    %2392 = vmatprep.subr.mxu0 0.0
    %2393 = vmatpush1.xpose.msra.mxu0 0.0
    %2394 = vmatprep.subr.mxu0 0.0
    %2395 = vmatpush1.xpose.msra.mxu0 0.0
    %2396 = vmatprep.subr.mxu0 0.0
    %2397 = vmatpush1.xpose.msra.mxu0 0.0
    %2398 = vmatprep.subr.mxu0 0.0
    %2399 = vmatpush1.xpose.msra.mxu0 0.0
    %2400 = vmatprep.subr.mxu0 0.0
    %2401 = vmatpush1.xpose.msra.mxu0 0.0
    %2402 = vmatprep.subr.mxu0 0.0
    %2403 = vmatpush1.xpose.msra.mxu0 0.0
    %2404 = vmatprep.subr.mxu0 0.0
    %2405 = vmatpush1.xpose.msra.mxu0 0.0
    %2406 = vmatprep.subr.mxu0 0.0
    %2407 = vmatpush1.xpose.msra.mxu0 0.0
    %2408 = vmatprep.subr.mxu0 0.0
    %2409 = vmatpush1.xpose.msra.mxu0 %v2378
    %2410 = vmatprep.subr.mxu0 0.0
    %2411 = vmatpush1.xpose.msra.mxu0 %v2376
    %2412 = vmatprep.subr.mxu0 0.0
    %2413 = vmatpush2.xpose.msra.mxu0 0.0
    %2414 = vmatprep.subr.mxu0 0.0
    %2415 = vmatpush2.xpose.msra.mxu0 0.0
    %2416 = vmatprep.subr.mxu0 0.0
    %2417 = vmatpush2.xpose.msra.mxu0 0.0
    %2418 = vmatprep.subr.mxu0 0.0
    %2419 = vmatpush2.xpose.msra.mxu0 0.0
    %2420 = vmatprep.subr.mxu0 0.0
    %2421 = vmatpush2.xpose.msra.mxu0 0.0
    %2422 = vmatprep.subr.mxu0 0.0
    %2423 = vmatpush2.xpose.msra.mxu0 0.0
    %2424 = vmatprep.subr.mxu0 0.0
    %2425 = vmatpush2.xpose.msra.mxu0 0.0
    %2426 = vmatprep.subr.mxu0 0.0
    %2427 = vmatpush2.xpose.msra.mxu0 0.0
    %2428 = vmatprep.subr.mxu0 0.0
    %2429 = vmatpush2.xpose.msra.mxu0 0.0
    %2430 = vmatprep.subr.mxu0 0.0
    %2431 = vmatpush2.xpose.msra.mxu0 0.0
    %2432 = vmatprep.subr.mxu0 0.0
    %2433 = vmatpush2.xpose.msra.mxu0 0.0
    %2434 = vmatprep.subr.mxu0 0.0
    %2435 = vmatpush2.xpose.msra.mxu0 0.0
    %2436 = vmatprep.subr.mxu0 0.0
    %2437 = vmatpush2.xpose.msra.mxu0 0.0
    %2438 = vmatprep.subr.mxu0 0.0
    %2439 = vmatpush2.xpose.msra.mxu0 0.0
    %2440 = vmatprep.subr.mxu0 0.0
    %2441 = vmatpush2.xpose.msra.mxu0 0.0
    %2442 = vmatprep.subr.mxu0 0.0
    %2443 = vmatpush2.xpose.msra.mxu0 0.0
    %2444 = vmatprep.mubr.f32.mxu0 0.0
    %2445 = vmatmul.mubr.f32.gmra.mxu0 %v2372
    %v2446 = vpop.f32.mrf.mxu0
    %v2447 = vadd.f32 0.0, %v2446
    %v2448 = vpop.f32.mrf.mxu0
    %2449 = vmatprep.mubr.f32.mxu0 0.0
    %2450 = vmatmul.mubr.f32.gmra.mxu0 %v2374
    %v2451 = vpop.f32.mrf.mxu0
    %v2452 = vadd.f32 0.0, %v2451
    %v2453 = vpop.f32.mrf.mxu0
    %2454 = vdwg.mxu0
    %v2455 = vmul.f32 %v2447, 0.35355338
    %v2456 = vmul.f32 %v2452, 0.35355338
    %v2457 = vadd.f32 %v2455, %v216
    %v2458 = vadd.f32 %v2456, %v217
    %v2459 = vmul.f32 %v2457, 1.442695
    %v2460 = vpow.pop %v2459
    %v2461 = vmul.f32 %v2458, 1.442695
    %v2462 = vpow.pop %v2461
    %v2463 = vsel %vm411, %v2460, 0.0
    %2464 = vadd.xlane.f32.xlu0 %v2463
    %v2465 = vpop.xlane.xlu0 %2464
    %v2466 = vsel %vm411, %v2462, 0.0
    %2467 = vadd.xlane.f32.xlu0 %v2466
    %v2468 = vpop.xlane.xlu0 %2467
    %v2469 = vrcp.pop %v2465
    %v2470 = vrcp.pop %v2468
    %v2471 = vmul.f32 %v2460, %v2469
    %v2472 = vmul.f32 %v2462, %v2470
    %2473 = vrot.lane.b32.xlu0 %v1799, 64
    %v2474 = vpop.permute.xlu0 %2473
    %2475 = vrot.lane.b32.xlu0 %v1804, 64
    %v2476 = vpop.permute.xlu0 %2475
    %v2480 = vsel %vm411, %v2471, 0
    %v2483 = vsel %vm411, %v2472, 0
    %2485 = vmatprep.subr.mxu0 0.0
    %2486 = vmatpush1.msra.mxu0 0.0
    %2487 = vmatprep.subr.mxu0 0.0
    %2488 = vmatpush1.msra.mxu0 0.0
    %2489 = vmatprep.subr.mxu0 0.0
    %2490 = vmatpush1.msra.mxu0 0.0
    %2491 = vmatprep.subr.mxu0 0.0
    %2492 = vmatpush1.msra.mxu0 0.0
    %2493 = vmatprep.subr.mxu0 0.0
    %2494 = vmatpush1.msra.mxu0 0.0
    %2495 = vmatprep.subr.mxu0 0.0
    %2496 = vmatpush1.msra.mxu0 0.0
    %2497 = vmatprep.subr.mxu0 0.0
    %2498 = vmatpush1.msra.mxu0 0.0
    %2499 = vmatprep.subr.mxu0 0.0
    %2500 = vmatpush1.msra.mxu0 0.0
    %2501 = vmatprep.subr.mxu0 0.0
    %2502 = vmatpush1.msra.mxu0 0.0
    %2503 = vmatprep.subr.mxu0 0.0
    %2504 = vmatpush1.msra.mxu0 0.0
    %2505 = vmatprep.subr.mxu0 0.0
    %2506 = vmatpush1.msra.mxu0 0.0
    %2507 = vmatprep.subr.mxu0 0.0
    %2508 = vmatpush1.msra.mxu0 0.0
    %2509 = vmatprep.subr.mxu0 0.0
    %2510 = vmatpush1.msra.mxu0 0.0
    %2511 = vmatprep.subr.mxu0 0.0
    %2512 = vmatpush1.msra.mxu0 0.0
    %2513 = vmatprep.subr.mxu0 0.0
    %2514 = vmatpush1.msra.mxu0 %v2476
    %2515 = vmatprep.subr.mxu0 0.0
    %2516 = vmatpush1.msra.mxu0 %v2474
    %2517 = vmatprep.subr.mxu0 0.0
    %2518 = vmatpush2.msra.mxu0 0.0
    %2519 = vmatprep.subr.mxu0 0.0
    %2520 = vmatpush2.msra.mxu0 0.0
    %2521 = vmatprep.subr.mxu0 0.0
    %2522 = vmatpush2.msra.mxu0 0.0
    %2523 = vmatprep.subr.mxu0 0.0
    %2524 = vmatpush2.msra.mxu0 0.0
    %2525 = vmatprep.subr.mxu0 0.0
    %2526 = vmatpush2.msra.mxu0 0.0
    %2527 = vmatprep.subr.mxu0 0.0
    %2528 = vmatpush2.msra.mxu0 0.0
    %2529 = vmatprep.subr.mxu0 0.0
    %2530 = vmatpush2.msra.mxu0 0.0
    %2531 = vmatprep.subr.mxu0 0.0
    %2532 = vmatpush2.msra.mxu0 0.0
    %2533 = vmatprep.subr.mxu0 0.0
    %2534 = vmatpush2.msra.mxu0 0.0
    %2535 = vmatprep.subr.mxu0 0.0
    %2536 = vmatpush2.msra.mxu0 0.0
    %2537 = vmatprep.subr.mxu0 0.0
    %2538 = vmatpush2.msra.mxu0 0.0
    %2539 = vmatprep.subr.mxu0 0.0
    %2540 = vmatpush2.msra.mxu0 0.0
    %2541 = vmatprep.subr.mxu0 0.0
    %2542 = vmatpush2.msra.mxu0 0.0
    %2543 = vmatprep.subr.mxu0 0.0
    %2544 = vmatpush2.msra.mxu0 0.0
    %2545 = vmatprep.subr.mxu0 0.0
    %2546 = vmatpush2.msra.mxu0 0.0
    %2547 = vmatprep.subr.mxu0 0.0
    %2548 = vmatpush2.msra.mxu0 0.0
    %2549 = vmatprep.mubr.f32.mxu0 0.0
    %2550 = vmatmul.mubr.f32.gmra.mxu0 %v2480
    %v2551 = vpop.f32.mrf.mxu0
    %v2552 = vadd.f32 0.0, %v2551
    %v2553 = vpop.f32.mrf.mxu0
    %2554 = vmatprep.mubr.f32.mxu0 0.0
    %2555 = vmatmul.mubr.f32.gmra.mxu0 %v2483
    %v2556 = vpop.f32.mrf.mxu0
    %v2557 = vadd.f32 0.0, %v2556
    %v2558 = vpop.f32.mrf.mxu0
    %2559 = vdwg.mxu0
    %v2561 = vsel %vm319, %v2552, 0
    %v2564 = vsel %vm319, %v2557, 0
    %2566 = vmatprep.subr.mxu0 0.0
    %2567 = vmatpush1.msra.mxu0 0.0
    %2568 = vmatprep.subr.mxu0 0.0
    %2569 = vmatpush1.msra.mxu0 0.0
    %2570 = vmatprep.subr.mxu0 0.0
    %2571 = vmatpush1.msra.mxu0 0.0
    %2572 = vmatprep.subr.mxu0 0.0
    %2573 = vmatpush1.msra.mxu0 0.0
    %2574 = vmatprep.subr.mxu0 0.0
    %2575 = vmatpush1.msra.mxu0 0.0
    %2576 = vmatprep.subr.mxu0 0.0
    %2577 = vmatpush1.msra.mxu0 0.0
    %2578 = vmatprep.subr.mxu0 0.0
    %2579 = vmatpush1.msra.mxu0 0.0
    %2580 = vmatprep.subr.mxu0 0.0
    %2581 = vmatpush1.msra.mxu0 0.0
    %2582 = vmatprep.subr.mxu0 0.0
    %2583 = vmatpush1.msra.mxu0 0.0
    %2584 = vmatprep.subr.mxu0 0.0
    %2585 = vmatpush1.msra.mxu0 0.0
    %2586 = vmatprep.subr.mxu0 0.0
    %2587 = vmatpush1.msra.mxu0 0.0
    %2588 = vmatprep.subr.mxu0 0.0
    %2589 = vmatpush1.msra.mxu0 0.0
    %2590 = vmatprep.subr.mxu0 0.0
    %2591 = vmatpush1.msra.mxu0 0.0
    %2592 = vmatprep.subr.mxu0 0.0
    %2593 = vmatpush1.msra.mxu0 0.0
    %2594 = vmatprep.subr.mxu0 0.0
    %2595 = vmatpush1.msra.mxu0 0.0
    %2596 = vmatprep.subr.mxu0 0.0
    %2597 = vmatpush1.msra.mxu0 %v1810
    %2598 = vmatprep.subr.mxu0 0.0
    %2599 = vmatpush2.msra.mxu0 0.0
    %2600 = vmatprep.subr.mxu0 0.0
    %2601 = vmatpush2.msra.mxu0 0.0
    %2602 = vmatprep.subr.mxu0 0.0
    %2603 = vmatpush2.msra.mxu0 0.0
    %2604 = vmatprep.subr.mxu0 0.0
    %2605 = vmatpush2.msra.mxu0 0.0
    %2606 = vmatprep.subr.mxu0 0.0
    %2607 = vmatpush2.msra.mxu0 0.0
    %2608 = vmatprep.subr.mxu0 0.0
    %2609 = vmatpush2.msra.mxu0 0.0
    %2610 = vmatprep.subr.mxu0 0.0
    %2611 = vmatpush2.msra.mxu0 0.0
    %2612 = vmatprep.subr.mxu0 0.0
    %2613 = vmatpush2.msra.mxu0 0.0
    %2614 = vmatprep.subr.mxu0 0.0
    %2615 = vmatpush2.msra.mxu0 0.0
    %2616 = vmatprep.subr.mxu0 0.0
    %2617 = vmatpush2.msra.mxu0 0.0
    %2618 = vmatprep.subr.mxu0 0.0
    %2619 = vmatpush2.msra.mxu0 0.0
    %2620 = vmatprep.subr.mxu0 0.0
    %2621 = vmatpush2.msra.mxu0 0.0
    %2622 = vmatprep.subr.mxu0 0.0
    %2623 = vmatpush2.msra.mxu0 0.0
    %2624 = vmatprep.subr.mxu0 0.0
    %2625 = vmatpush2.msra.mxu0 0.0
    %2626 = vmatprep.subr.mxu0 0.0
    %2627 = vmatpush2.msra.mxu0 0.0
    %2628 = vmatprep.subr.mxu0 0.0
    %2629 = vmatpush2.msra.mxu0 0.0
    %2630 = vmatprep.mubr.f32.mxu0 0.0
    %2631 = vmatmul.mubr.f32.gmra.mxu0 %v2561
    %v2632 = vpop.f32.mrf.mxu0
    %v2633 = vadd.f32 0.0, %v2632
    %v2634 = vpop.f32.mrf.mxu0
    %2635 = vmatprep.mubr.f32.mxu0 0.0
    %2636 = vmatmul.mubr.f32.gmra.mxu0 %v2564
    %v2637 = vpop.f32.mrf.mxu0
    %v2638 = vadd.f32 0.0, %v2637
    %v2639 = vpop.f32.mrf.mxu0
    %2640 = vdwg.mxu0
    %v2641 = vadd.f32 %v2356, %v2633
    %v2642 = vadd.f32 %v2361, %v2638
    %2643 = vrot.lane.b32.xlu0 %v1799, 56
    %v2644 = vpop.permute.xlu0 %2643
    %2645 = vrot.lane.b32.xlu0 %v1804, 56
    %v2646 = vpop.permute.xlu0 %2645
    %2647 = vrot.lane.b32.xlu0 %v1799, 48
    %v2648 = vpop.permute.xlu0 %2647
    %2649 = vrot.lane.b32.xlu0 %v1804, 48
    %v2650 = vpop.permute.xlu0 %2649
    %v2651 = vsel %vm319, %v2644, 0
    %v2653 = vsel %vm319, %v2646, 0
    %v2655 = vsel %vm319, %v2648, 0
    %v2657 = vsel %vm319, %v2650, 0
    %2659 = vmatprep.subr.mxu0 0.0
    %2660 = vmatpush1.xpose.msra.mxu0 0.0
    %2661 = vmatprep.subr.mxu0 0.0
    %2662 = vmatpush1.xpose.msra.mxu0 0.0
    %2663 = vmatprep.subr.mxu0 0.0
    %2664 = vmatpush1.xpose.msra.mxu0 0.0
    %2665 = vmatprep.subr.mxu0 0.0
    %2666 = vmatpush1.xpose.msra.mxu0 0.0
    %2667 = vmatprep.subr.mxu0 0.0
    %2668 = vmatpush1.xpose.msra.mxu0 0.0
    %2669 = vmatprep.subr.mxu0 0.0
    %2670 = vmatpush1.xpose.msra.mxu0 0.0
    %2671 = vmatprep.subr.mxu0 0.0
    %2672 = vmatpush1.xpose.msra.mxu0 0.0
    %2673 = vmatprep.subr.mxu0 0.0
    %2674 = vmatpush1.xpose.msra.mxu0 0.0
    %2675 = vmatprep.subr.mxu0 0.0
    %2676 = vmatpush1.xpose.msra.mxu0 0.0
    %2677 = vmatprep.subr.mxu0 0.0
    %2678 = vmatpush1.xpose.msra.mxu0 0.0
    %2679 = vmatprep.subr.mxu0 0.0
    %2680 = vmatpush1.xpose.msra.mxu0 0.0
    %2681 = vmatprep.subr.mxu0 0.0
    %2682 = vmatpush1.xpose.msra.mxu0 0.0
    %2683 = vmatprep.subr.mxu0 0.0
    %2684 = vmatpush1.xpose.msra.mxu0 0.0
    %2685 = vmatprep.subr.mxu0 0.0
    %2686 = vmatpush1.xpose.msra.mxu0 0.0
    %2687 = vmatprep.subr.mxu0 0.0
    %2688 = vmatpush1.xpose.msra.mxu0 %v2657
    %2689 = vmatprep.subr.mxu0 0.0
    %2690 = vmatpush1.xpose.msra.mxu0 %v2655
    %2691 = vmatprep.subr.mxu0 0.0
    %2692 = vmatpush2.xpose.msra.mxu0 0.0
    %2693 = vmatprep.subr.mxu0 0.0
    %2694 = vmatpush2.xpose.msra.mxu0 0.0
    %2695 = vmatprep.subr.mxu0 0.0
    %2696 = vmatpush2.xpose.msra.mxu0 0.0
    %2697 = vmatprep.subr.mxu0 0.0
    %2698 = vmatpush2.xpose.msra.mxu0 0.0
    %2699 = vmatprep.subr.mxu0 0.0
    %2700 = vmatpush2.xpose.msra.mxu0 0.0
    %2701 = vmatprep.subr.mxu0 0.0
    %2702 = vmatpush2.xpose.msra.mxu0 0.0
    %2703 = vmatprep.subr.mxu0 0.0
    %2704 = vmatpush2.xpose.msra.mxu0 0.0
    %2705 = vmatprep.subr.mxu0 0.0
    %2706 = vmatpush2.xpose.msra.mxu0 0.0
    %2707 = vmatprep.subr.mxu0 0.0
    %2708 = vmatpush2.xpose.msra.mxu0 0.0
    %2709 = vmatprep.subr.mxu0 0.0
    %2710 = vmatpush2.xpose.msra.mxu0 0.0
    %2711 = vmatprep.subr.mxu0 0.0
    %2712 = vmatpush2.xpose.msra.mxu0 0.0
    %2713 = vmatprep.subr.mxu0 0.0
    %2714 = vmatpush2.xpose.msra.mxu0 0.0
    %2715 = vmatprep.subr.mxu0 0.0
    %2716 = vmatpush2.xpose.msra.mxu0 0.0
    %2717 = vmatprep.subr.mxu0 0.0
    %2718 = vmatpush2.xpose.msra.mxu0 0.0
    %2719 = vmatprep.subr.mxu0 0.0
    %2720 = vmatpush2.xpose.msra.mxu0 0.0
    %2721 = vmatprep.subr.mxu0 0.0
    %2722 = vmatpush2.xpose.msra.mxu0 0.0
    %2723 = vmatprep.mubr.f32.mxu0 0.0
    %2724 = vmatmul.mubr.f32.gmra.mxu0 %v2651
    %v2725 = vpop.f32.mrf.mxu0
    %v2726 = vadd.f32 0.0, %v2725
    %v2727 = vpop.f32.mrf.mxu0
    %2728 = vmatprep.mubr.f32.mxu0 0.0
    %2729 = vmatmul.mubr.f32.gmra.mxu0 %v2653
    %v2730 = vpop.f32.mrf.mxu0
    %v2731 = vadd.f32 0.0, %v2730
    %v2732 = vpop.f32.mrf.mxu0
    %2733 = vdwg.mxu0
    %v2734 = vmul.f32 %v2726, 0.35355338
    %v2735 = vmul.f32 %v2731, 0.35355338
    %v2736 = vadd.f32 %v2734, %v216
    %v2737 = vadd.f32 %v2735, %v217
    %v2738 = vmul.f32 %v2736, 1.442695
    %v2739 = vpow.pop %v2738
    %v2740 = vmul.f32 %v2737, 1.442695
    %v2741 = vpow.pop %v2740
    %v2742 = vsel %vm411, %v2739, 0.0
    %2743 = vadd.xlane.f32.xlu0 %v2742
    %v2744 = vpop.xlane.xlu0 %2743
    %v2745 = vsel %vm411, %v2741, 0.0
    %2746 = vadd.xlane.f32.xlu0 %v2745
    %v2747 = vpop.xlane.xlu0 %2746
    %v2748 = vrcp.pop %v2744
    %v2749 = vrcp.pop %v2747
    %v2750 = vmul.f32 %v2739, %v2748
    %v2751 = vmul.f32 %v2741, %v2749
    %2752 = vrot.lane.b32.xlu0 %v1799, 40
    %v2753 = vpop.permute.xlu0 %2752
    %2754 = vrot.lane.b32.xlu0 %v1804, 40
    %v2755 = vpop.permute.xlu0 %2754
    %v2759 = vsel %vm411, %v2750, 0
    %v2762 = vsel %vm411, %v2751, 0
    %2764 = vmatprep.subr.mxu0 0.0
    %2765 = vmatpush1.msra.mxu0 0.0
    %2766 = vmatprep.subr.mxu0 0.0
    %2767 = vmatpush1.msra.mxu0 0.0
    %2768 = vmatprep.subr.mxu0 0.0
    %2769 = vmatpush1.msra.mxu0 0.0
    %2770 = vmatprep.subr.mxu0 0.0
    %2771 = vmatpush1.msra.mxu0 0.0
    %2772 = vmatprep.subr.mxu0 0.0
    %2773 = vmatpush1.msra.mxu0 0.0
    %2774 = vmatprep.subr.mxu0 0.0
    %2775 = vmatpush1.msra.mxu0 0.0
    %2776 = vmatprep.subr.mxu0 0.0
    %2777 = vmatpush1.msra.mxu0 0.0
    %2778 = vmatprep.subr.mxu0 0.0
    %2779 = vmatpush1.msra.mxu0 0.0
    %2780 = vmatprep.subr.mxu0 0.0
    %2781 = vmatpush1.msra.mxu0 0.0
    %2782 = vmatprep.subr.mxu0 0.0
    %2783 = vmatpush1.msra.mxu0 0.0
    %2784 = vmatprep.subr.mxu0 0.0
    %2785 = vmatpush1.msra.mxu0 0.0
    %2786 = vmatprep.subr.mxu0 0.0
    %2787 = vmatpush1.msra.mxu0 0.0
    %2788 = vmatprep.subr.mxu0 0.0
    %2789 = vmatpush1.msra.mxu0 0.0
    %2790 = vmatprep.subr.mxu0 0.0
    %2791 = vmatpush1.msra.mxu0 0.0
    %2792 = vmatprep.subr.mxu0 0.0
    %2793 = vmatpush1.msra.mxu0 %v2755
    %2794 = vmatprep.subr.mxu0 0.0
    %2795 = vmatpush1.msra.mxu0 %v2753
    %2796 = vmatprep.subr.mxu0 0.0
    %2797 = vmatpush2.msra.mxu0 0.0
    %2798 = vmatprep.subr.mxu0 0.0
    %2799 = vmatpush2.msra.mxu0 0.0
    %2800 = vmatprep.subr.mxu0 0.0
    %2801 = vmatpush2.msra.mxu0 0.0
    %2802 = vmatprep.subr.mxu0 0.0
    %2803 = vmatpush2.msra.mxu0 0.0
    %2804 = vmatprep.subr.mxu0 0.0
    %2805 = vmatpush2.msra.mxu0 0.0
    %2806 = vmatprep.subr.mxu0 0.0
    %2807 = vmatpush2.msra.mxu0 0.0
    %2808 = vmatprep.subr.mxu0 0.0
    %2809 = vmatpush2.msra.mxu0 0.0
    %2810 = vmatprep.subr.mxu0 0.0
    %2811 = vmatpush2.msra.mxu0 0.0
    %2812 = vmatprep.subr.mxu0 0.0
    %2813 = vmatpush2.msra.mxu0 0.0
    %2814 = vmatprep.subr.mxu0 0.0
    %2815 = vmatpush2.msra.mxu0 0.0
    %2816 = vmatprep.subr.mxu0 0.0
    %2817 = vmatpush2.msra.mxu0 0.0
    %2818 = vmatprep.subr.mxu0 0.0
    %2819 = vmatpush2.msra.mxu0 0.0
    %2820 = vmatprep.subr.mxu0 0.0
    %2821 = vmatpush2.msra.mxu0 0.0
    %2822 = vmatprep.subr.mxu0 0.0
    %2823 = vmatpush2.msra.mxu0 0.0
    %2824 = vmatprep.subr.mxu0 0.0
    %2825 = vmatpush2.msra.mxu0 0.0
    %2826 = vmatprep.subr.mxu0 0.0
    %2827 = vmatpush2.msra.mxu0 0.0
    %2828 = vmatprep.mubr.f32.mxu0 0.0
    %2829 = vmatmul.mubr.f32.gmra.mxu0 %v2759
    %v2830 = vpop.f32.mrf.mxu0
    %v2831 = vadd.f32 0.0, %v2830
    %v2832 = vpop.f32.mrf.mxu0
    %2833 = vmatprep.mubr.f32.mxu0 0.0
    %2834 = vmatmul.mubr.f32.gmra.mxu0 %v2762
    %v2835 = vpop.f32.mrf.mxu0
    %v2836 = vadd.f32 0.0, %v2835
    %v2837 = vpop.f32.mrf.mxu0
    %2838 = vdwg.mxu0
    %v2840 = vsel %vm319, %v2831, 0
    %v2843 = vsel %vm319, %v2836, 0
    %2845 = vmatprep.subr.mxu0 0.0
    %2846 = vmatpush1.msra.mxu0 0.0
    %2847 = vmatprep.subr.mxu0 0.0
    %2848 = vmatpush1.msra.mxu0 0.0
    %2849 = vmatprep.subr.mxu0 0.0
    %2850 = vmatpush1.msra.mxu0 0.0
    %2851 = vmatprep.subr.mxu0 0.0
    %2852 = vmatpush1.msra.mxu0 0.0
    %2853 = vmatprep.subr.mxu0 0.0
    %2854 = vmatpush1.msra.mxu0 0.0
    %2855 = vmatprep.subr.mxu0 0.0
    %2856 = vmatpush1.msra.mxu0 0.0
    %2857 = vmatprep.subr.mxu0 0.0
    %2858 = vmatpush1.msra.mxu0 0.0
    %2859 = vmatprep.subr.mxu0 0.0
    %2860 = vmatpush1.msra.mxu0 0.0
    %2861 = vmatprep.subr.mxu0 0.0
    %2862 = vmatpush1.msra.mxu0 0.0
    %2863 = vmatprep.subr.mxu0 0.0
    %2864 = vmatpush1.msra.mxu0 0.0
    %2865 = vmatprep.subr.mxu0 0.0
    %2866 = vmatpush1.msra.mxu0 0.0
    %2867 = vmatprep.subr.mxu0 0.0
    %2868 = vmatpush1.msra.mxu0 0.0
    %2869 = vmatprep.subr.mxu0 0.0
    %2870 = vmatpush1.msra.mxu0 0.0
    %2871 = vmatprep.subr.mxu0 0.0
    %2872 = vmatpush1.msra.mxu0 0.0
    %2873 = vmatprep.subr.mxu0 0.0
    %2874 = vmatpush1.msra.mxu0 0.0
    %2875 = vmatprep.subr.mxu0 0.0
    %2876 = vmatpush1.msra.mxu0 %v1811
    %2877 = vmatprep.subr.mxu0 0.0
    %2878 = vmatpush2.msra.mxu0 0.0
    %2879 = vmatprep.subr.mxu0 0.0
    %2880 = vmatpush2.msra.mxu0 0.0
    %2881 = vmatprep.subr.mxu0 0.0
    %2882 = vmatpush2.msra.mxu0 0.0
    %2883 = vmatprep.subr.mxu0 0.0
    %2884 = vmatpush2.msra.mxu0 0.0
    %2885 = vmatprep.subr.mxu0 0.0
    %2886 = vmatpush2.msra.mxu0 0.0
    %2887 = vmatprep.subr.mxu0 0.0
    %2888 = vmatpush2.msra.mxu0 0.0
    %2889 = vmatprep.subr.mxu0 0.0
    %2890 = vmatpush2.msra.mxu0 0.0
    %2891 = vmatprep.subr.mxu0 0.0
    %2892 = vmatpush2.msra.mxu0 0.0
    %2893 = vmatprep.subr.mxu0 0.0
    %2894 = vmatpush2.msra.mxu0 0.0
    %2895 = vmatprep.subr.mxu0 0.0
    %2896 = vmatpush2.msra.mxu0 0.0
    %2897 = vmatprep.subr.mxu0 0.0
    %2898 = vmatpush2.msra.mxu0 0.0
    %2899 = vmatprep.subr.mxu0 0.0
    %2900 = vmatpush2.msra.mxu0 0.0
    %2901 = vmatprep.subr.mxu0 0.0
    %2902 = vmatpush2.msra.mxu0 0.0
    %2903 = vmatprep.subr.mxu0 0.0
    %2904 = vmatpush2.msra.mxu0 0.0
    %2905 = vmatprep.subr.mxu0 0.0
    %2906 = vmatpush2.msra.mxu0 0.0
    %2907 = vmatprep.subr.mxu0 0.0
    %2908 = vmatpush2.msra.mxu0 0.0
    %2909 = vmatprep.mubr.f32.mxu0 0.0
    %2910 = vmatmul.mubr.f32.gmra.mxu0 %v2840
    %v2911 = vpop.f32.mrf.mxu0
    %v2912 = vadd.f32 0.0, %v2911
    %v2913 = vpop.f32.mrf.mxu0
    %2914 = vmatprep.mubr.f32.mxu0 0.0
    %2915 = vmatmul.mubr.f32.gmra.mxu0 %v2843
    %v2916 = vpop.f32.mrf.mxu0
    %v2917 = vadd.f32 0.0, %v2916
    %v2918 = vpop.f32.mrf.mxu0
    %2919 = vdwg.mxu0
    %v2920 = vadd.f32 %v2641, %v2912
    %v2921 = vadd.f32 %v2642, %v2917
    %v2922 = vld [vmem:[%s5 + $0xa] sm:$0x1]
    %v2923 = vlaneseq
    %v2924 = vshrl.u32 %v2923, 7
    %v2925 = vsub.s32 0, %v2924
    %v2926 = vrot.slane %v2922, %v2925
    %v2927 = vadd.f32 %v2920, %v2926
    %v2928 = vadd.f32 %v2921, %v2926
    %v2929 = vadd.f32 %v2927, %v1714
    %v2930 = vadd.f32 %v2928, %v1715
    %v2931 = vld [vmem:[%s5 + $0xb] sm:$0x1]
    %v2932 = vld [vmem:[%s5 + $0xc] sm:$0x1]
    %v2933 = vsel %vm176, %v2929, 0.0
    %2934 = vadd.xlane.f32.xlu0 %v2933
    %v2935 = vpop.xlane.xlu0 %2934
    %v2936 = vsel %vm176, %v2930, 0.0
    %2937 = vadd.xlane.f32.xlu0 %v2936
    %v2938 = vpop.xlane.xlu0 %2937
    %v2939 = vmul.f32 %v2935, %v183
    %v2940 = vmul.f32 %v2938, %v183
    %v2941 = vsub.f32 %v2929, %v2939
    %v2942 = vsub.f32 %v2930, %v2940
    %v2943 = vmul.f32 %v2941, %v2941
    %v2944 = vmul.f32 %v2942, %v2942
    %v2945 = vsel %vm176, %v2943, 0.0
    %2946 = vadd.xlane.f32.xlu0 %v2945
    %v2947 = vpop.xlane.xlu0 %2946
    %v2948 = vsel %vm176, %v2944, 0.0
    %2949 = vadd.xlane.f32.xlu0 %v2948
    %v2950 = vpop.xlane.xlu0 %2949
    %v2951 = vmul.f32 %v2947, %v183
    %v2952 = vmul.f32 %v2950, %v183
    %v2953 = vadd.f32 %v2951, 1e-12
    %v2954 = vadd.f32 %v2952, 1e-12
    %v2955 = vrsqrt.pop %v2953
    %v2956 = vrsqrt.pop %v2954
    %v2957 = vmul.f32 %v2941, %v2955
    %v2958 = vmul.f32 %v2942, %v2956
    %v2959 = vlaneseq
    %v2960 = vshrl.u32 %v2959, 7
    %v2961 = vsub.s32 0, %v2960
    %v2962 = vrot.slane %v2931, %v2961
    %v2963 = vmul.f32 %v2957, %v2962
    %v2964 = vmul.f32 %v2958, %v2962
    %v2965 = vlaneseq
    %v2966 = vshrl.u32 %v2965, 7
    %v2967 = vsub.s32 0, %v2966
    %v2968 = vrot.slane %v2932, %v2967
    %v2969 = vadd.f32 %v2963, %v2968
    %v2970 = vadd.f32 %v2964, %v2968
    %s2971 = scalar_lea.vmem [#allocation6], 160
    %v2972 = vld [vmem:[%s2971] sm:$0xff]
    %v2973 = vld [vmem:[%s2971 + $0x8] sm:$0xff]
    %v2974 = vld [vmem:[%s2971 + $0x10] sm:$0xff]
    %v2975 = vld [vmem:[%s2971 + $0x18] sm:$0xff]
    %v2976 = vld [vmem:[%s5 + $0xd] sm:$0x1]
    %v2977 = vlaneseq
    %v2978 = vshrl.u32 %v2977, 7
    %v2979 = vsub.s32 0, %v2978
    %v2980 = vrot.slane %v2976, %v2979
    %v2982 = vsel %vm176, %v2969, 0
    %v2985 = vsel %vm176, %v2970, 0
    %2987 = vmatprep.subr.mxu0 0.0
    %2988 = vmatpush1.msra.mxu0 0.0
    %2989 = vmatprep.subr.mxu0 0.0
    %2990 = vmatpush1.msra.mxu0 0.0
    %2991 = vmatprep.subr.mxu0 0.0
    %2992 = vmatpush1.msra.mxu0 0.0
    %2993 = vmatprep.subr.mxu0 0.0
    %2994 = vmatpush1.msra.mxu0 0.0
    %2995 = vmatprep.subr.mxu0 0.0
    %2996 = vmatpush1.msra.mxu0 0.0
    %2997 = vmatprep.subr.mxu0 0.0
    %2998 = vmatpush1.msra.mxu0 0.0
    %2999 = vmatprep.subr.mxu0 0.0
    %3000 = vmatpush1.msra.mxu0 0.0
    %3001 = vmatprep.subr.mxu0 0.0
    %3002 = vmatpush1.msra.mxu0 0.0
    %3003 = vmatprep.subr.mxu0 0.0
    %3004 = vmatpush1.msra.mxu0 0.0
    %3005 = vmatprep.subr.mxu0 0.0
    %3006 = vmatpush1.msra.mxu0 0.0
    %3007 = vmatprep.subr.mxu0 0.0
    %3008 = vmatpush1.msra.mxu0 0.0
    %3009 = vmatprep.subr.mxu0 0.0
    %3010 = vmatpush1.msra.mxu0 0.0
    %3011 = vmatprep.subr.mxu0 0.0
    %3012 = vmatpush1.msra.mxu0 %v2975
    %3013 = vmatprep.subr.mxu0 0.0
    %3014 = vmatpush1.msra.mxu0 %v2974
    %3015 = vmatprep.subr.mxu0 0.0
    %3016 = vmatpush1.msra.mxu0 %v2973
    %3017 = vmatprep.subr.mxu0 0.0
    %3018 = vmatpush1.msra.mxu0 %v2972
    %3019 = vmatprep.subr.mxu0 0.0
    %3020 = vmatpush2.msra.mxu0 0.0
    %3021 = vmatprep.subr.mxu0 0.0
    %3022 = vmatpush2.msra.mxu0 0.0
    %3023 = vmatprep.subr.mxu0 0.0
    %3024 = vmatpush2.msra.mxu0 0.0
    %3025 = vmatprep.subr.mxu0 0.0
    %3026 = vmatpush2.msra.mxu0 0.0
    %3027 = vmatprep.subr.mxu0 0.0
    %3028 = vmatpush2.msra.mxu0 0.0
    %3029 = vmatprep.subr.mxu0 0.0
    %3030 = vmatpush2.msra.mxu0 0.0
    %3031 = vmatprep.subr.mxu0 0.0
    %3032 = vmatpush2.msra.mxu0 0.0
    %3033 = vmatprep.subr.mxu0 0.0
    %3034 = vmatpush2.msra.mxu0 0.0
    %3035 = vmatprep.subr.mxu0 0.0
    %3036 = vmatpush2.msra.mxu0 0.0
    %3037 = vmatprep.subr.mxu0 0.0
    %3038 = vmatpush2.msra.mxu0 0.0
    %3039 = vmatprep.subr.mxu0 0.0
    %3040 = vmatpush2.msra.mxu0 0.0
    %3041 = vmatprep.subr.mxu0 0.0
    %3042 = vmatpush2.msra.mxu0 0.0
    %3043 = vmatprep.subr.mxu0 0.0
    %3044 = vmatpush2.msra.mxu0 0.0
    %3045 = vmatprep.subr.mxu0 0.0
    %3046 = vmatpush2.msra.mxu0 0.0
    %3047 = vmatprep.subr.mxu0 0.0
    %3048 = vmatpush2.msra.mxu0 0.0
    %3049 = vmatprep.subr.mxu0 0.0
    %3050 = vmatpush2.msra.mxu0 0.0
    %3051 = vmatprep.mubr.f32.mxu0 0.0
    %3052 = vmatmul.mubr.f32.gmra.mxu0 %v2982
    %v3053 = vpop.f32.mrf.mxu0
    %v3054 = vadd.f32 %v2980, %v3053
    %v3055 = vpop.f32.mrf.mxu0
    %3056 = vmatprep.mubr.f32.mxu0 0.0
    %3057 = vmatmul.mubr.f32.gmra.mxu0 %v2985
    %v3058 = vpop.f32.mrf.mxu0
    %v3059 = vadd.f32 %v2980, %v3058
    %v3060 = vpop.f32.mrf.mxu0
    %3061 = vdwg.mxu0
    %v3062 = vmul.f32 %v3054, 0.5
    %v3063 = vmul.f32 %v3059, 0.5
    %v3064 = vmul.f32 %v3054, 0.044715
    %v3065 = vmul.f32 %v3059, 0.044715
    %v3066 = vmul.f32 %v3064, %v3054
    %v3067 = vmul.f32 %v3065, %v3059
    %v3068 = vmul.f32 %v3066, %v3054
    %v3069 = vmul.f32 %v3067, %v3059
    %v3070 = vadd.f32 %v3054, %v3068
    %v3071 = vadd.f32 %v3059, %v3069
    %v3072 = vmul.f32 %v3070, 0.7978846
    %v3073 = vmul.f32 %v3071, 0.7978846
    %v3074 = vtanh.pop %v3072
    %v3075 = vtanh.pop %v3073
    %v3076 = vadd.f32 %v3074, 1.0
    %v3077 = vadd.f32 %v3075, 1.0
    %v3078 = vmul.f32 %v3062, %v3076
    %v3079 = vmul.f32 %v3063, %v3077
    %s3080 = scalar_lea.vmem [#allocation6], 192
    %v3081 = vld [vmem:[%s3080] sm:$0xff]
    %v3082 = vld [vmem:[%s3080 + $0x8] sm:$0xff]
    %v3083 = vld [vmem:[%s3080 + $0x10] sm:$0xff]
    %v3084 = vld [vmem:[%s3080 + $0x18] sm:$0xff]
    %v3085 = vld [vmem:[%s5 + $0xe] sm:$0x1]
    %v3086 = vlaneseq
    %v3087 = vshrl.u32 %v3086, 7
    %v3088 = vsub.s32 0, %v3087
    %v3089 = vrot.slane %v3085, %v3088
    %v3091 = vsel %vm176, %v3078, 0
    %v3094 = vsel %vm176, %v3079, 0
    %3096 = vmatprep.subr.mxu0 0.0
    %3097 = vmatpush1.msra.mxu0 0.0
    %3098 = vmatprep.subr.mxu0 0.0
    %3099 = vmatpush1.msra.mxu0 0.0
    %3100 = vmatprep.subr.mxu0 0.0
    %3101 = vmatpush1.msra.mxu0 0.0
    %3102 = vmatprep.subr.mxu0 0.0
    %3103 = vmatpush1.msra.mxu0 0.0
    %3104 = vmatprep.subr.mxu0 0.0
    %3105 = vmatpush1.msra.mxu0 0.0
    %3106 = vmatprep.subr.mxu0 0.0
    %3107 = vmatpush1.msra.mxu0 0.0
    %3108 = vmatprep.subr.mxu0 0.0
    %3109 = vmatpush1.msra.mxu0 0.0
    %3110 = vmatprep.subr.mxu0 0.0
    %3111 = vmatpush1.msra.mxu0 0.0
    %3112 = vmatprep.subr.mxu0 0.0
    %3113 = vmatpush1.msra.mxu0 0.0
    %3114 = vmatprep.subr.mxu0 0.0
    %3115 = vmatpush1.msra.mxu0 0.0
    %3116 = vmatprep.subr.mxu0 0.0
    %3117 = vmatpush1.msra.mxu0 0.0
    %3118 = vmatprep.subr.mxu0 0.0
    %3119 = vmatpush1.msra.mxu0 0.0
    %3120 = vmatprep.subr.mxu0 0.0
    %3121 = vmatpush1.msra.mxu0 %v3084
    %3122 = vmatprep.subr.mxu0 0.0
    %3123 = vmatpush1.msra.mxu0 %v3083
    %3124 = vmatprep.subr.mxu0 0.0
    %3125 = vmatpush1.msra.mxu0 %v3082
    %3126 = vmatprep.subr.mxu0 0.0
    %3127 = vmatpush1.msra.mxu0 %v3081
    %3128 = vmatprep.subr.mxu0 0.0
    %3129 = vmatpush2.msra.mxu0 0.0
    %3130 = vmatprep.subr.mxu0 0.0
    %3131 = vmatpush2.msra.mxu0 0.0
    %3132 = vmatprep.subr.mxu0 0.0
    %3133 = vmatpush2.msra.mxu0 0.0
    %3134 = vmatprep.subr.mxu0 0.0
    %3135 = vmatpush2.msra.mxu0 0.0
    %3136 = vmatprep.subr.mxu0 0.0
    %3137 = vmatpush2.msra.mxu0 0.0
    %3138 = vmatprep.subr.mxu0 0.0
    %3139 = vmatpush2.msra.mxu0 0.0
    %3140 = vmatprep.subr.mxu0 0.0
    %3141 = vmatpush2.msra.mxu0 0.0
    %3142 = vmatprep.subr.mxu0 0.0
    %3143 = vmatpush2.msra.mxu0 0.0
    %3144 = vmatprep.subr.mxu0 0.0
    %3145 = vmatpush2.msra.mxu0 0.0
    %3146 = vmatprep.subr.mxu0 0.0
    %3147 = vmatpush2.msra.mxu0 0.0
    %3148 = vmatprep.subr.mxu0 0.0
    %3149 = vmatpush2.msra.mxu0 0.0
    %3150 = vmatprep.subr.mxu0 0.0
    %3151 = vmatpush2.msra.mxu0 0.0
    %3152 = vmatprep.subr.mxu0 0.0
    %3153 = vmatpush2.msra.mxu0 0.0
    %3154 = vmatprep.subr.mxu0 0.0
    %3155 = vmatpush2.msra.mxu0 0.0
    %3156 = vmatprep.subr.mxu0 0.0
    %3157 = vmatpush2.msra.mxu0 0.0
    %3158 = vmatprep.subr.mxu0 0.0
    %3159 = vmatpush2.msra.mxu0 0.0
    %3160 = vmatprep.mubr.f32.mxu0 0.0
    %3161 = vmatmul.mubr.f32.gmra.mxu0 %v3091
    %v3162 = vpop.f32.mrf.mxu0
    %v3163 = vadd.f32 %v3089, %v3162
    %v3164 = vpop.f32.mrf.mxu0
    %3165 = vmatprep.mubr.f32.mxu0 0.0
    %3166 = vmatmul.mubr.f32.gmra.mxu0 %v3094
    %v3167 = vpop.f32.mrf.mxu0
    %v3168 = vadd.f32 %v3089, %v3167
    %v3169 = vpop.f32.mrf.mxu0
    %3170 = vdwg.mxu0
    %v3171 = vadd.f32 %v3163, %v2969
    %v3172 = vadd.f32 %v3168, %v2970
    %v3173 = vld [vmem:[%s5 + $0xf] sm:$0x1]
    %v3174 = vld [vmem:[%s5 + $0x10] sm:$0x1]
    %v3175 = vsel %vm176, %v3171, 0.0
    %3176 = vadd.xlane.f32.xlu0 %v3175
    %v3177 = vpop.xlane.xlu0 %3176
    %v3178 = vsel %vm176, %v3172, 0.0
    %3179 = vadd.xlane.f32.xlu0 %v3178
    %v3180 = vpop.xlane.xlu0 %3179
    %v3181 = vmul.f32 %v3177, %v183
    %v3182 = vmul.f32 %v3180, %v183
    %v3183 = vsub.f32 %v3171, %v3181
    %v3184 = vsub.f32 %v3172, %v3182
    %v3185 = vmul.f32 %v3183, %v3183
    %v3186 = vmul.f32 %v3184, %v3184
    %v3187 = vsel %vm176, %v3185, 0.0
    %3188 = vadd.xlane.f32.xlu0 %v3187
    %v3189 = vpop.xlane.xlu0 %3188
    %v3190 = vsel %vm176, %v3186, 0.0
    %3191 = vadd.xlane.f32.xlu0 %v3190
    %v3192 = vpop.xlane.xlu0 %3191
    %v3193 = vmul.f32 %v3189, %v183
    %v3194 = vmul.f32 %v3192, %v183
    %v3195 = vadd.f32 %v3193, 1e-12
    %v3196 = vadd.f32 %v3194, 1e-12
    %v3197 = vrsqrt.pop %v3195
    %v3198 = vrsqrt.pop %v3196
    %v3199 = vmul.f32 %v3183, %v3197
    %v3200 = vmul.f32 %v3184, %v3198
    %v3201 = vlaneseq
    %v3202 = vshrl.u32 %v3201, 7
    %v3203 = vsub.s32 0, %v3202
    %v3204 = vrot.slane %v3173, %v3203
    %v3205 = vmul.f32 %v3199, %v3204
    %v3206 = vmul.f32 %v3200, %v3204
    %v3207 = vlaneseq
    %v3208 = vshrl.u32 %v3207, 7
    %v3209 = vsub.s32 0, %v3208
    %v3210 = vrot.slane %v3174, %v3209
    %v3211 = vadd.f32 %v3205, %v3210
    %v3212 = vadd.f32 %v3206, %v3210
    %s3213 = scalar_lea.vmem [#allocation6], 224
    %v3214 = vld [vmem:[%s3213] sm:$0xff]
    %v3215 = vld [vmem:[%s3213 + $0x8] sm:$0xff]
    %v3216 = vld [vmem:[%s3213 + $0x10] sm:$0xff]
    %v3217 = vld [vmem:[%s3213 + $0x18] sm:$0xff]
    %v3218 = vld [vmem:[%s5 + $0x11] sm:$0x1]
    %v3219 = vlaneseq
    %v3220 = vshrl.u32 %v3219, 7
    %v3221 = vsub.s32 0, %v3220
    %v3222 = vrot.slane %v3218, %v3221
    %v3224 = vsel %vm176, %v3211, 0
    %v3227 = vsel %vm176, %v3212, 0
    %3229 = vmatprep.subr.mxu0 0.0
    %3230 = vmatpush1.msra.mxu0 0.0
    %3231 = vmatprep.subr.mxu0 0.0
    %3232 = vmatpush1.msra.mxu0 0.0
    %3233 = vmatprep.subr.mxu0 0.0
    %3234 = vmatpush1.msra.mxu0 0.0
    %3235 = vmatprep.subr.mxu0 0.0
    %3236 = vmatpush1.msra.mxu0 0.0
    %3237 = vmatprep.subr.mxu0 0.0
    %3238 = vmatpush1.msra.mxu0 0.0
    %3239 = vmatprep.subr.mxu0 0.0
    %3240 = vmatpush1.msra.mxu0 0.0
    %3241 = vmatprep.subr.mxu0 0.0
    %3242 = vmatpush1.msra.mxu0 0.0
    %3243 = vmatprep.subr.mxu0 0.0
    %3244 = vmatpush1.msra.mxu0 0.0
    %3245 = vmatprep.subr.mxu0 0.0
    %3246 = vmatpush1.msra.mxu0 0.0
    %3247 = vmatprep.subr.mxu0 0.0
    %3248 = vmatpush1.msra.mxu0 0.0
    %3249 = vmatprep.subr.mxu0 0.0
    %3250 = vmatpush1.msra.mxu0 0.0
    %3251 = vmatprep.subr.mxu0 0.0
    %3252 = vmatpush1.msra.mxu0 0.0
    %3253 = vmatprep.subr.mxu0 0.0
    %3254 = vmatpush1.msra.mxu0 %v3217
    %3255 = vmatprep.subr.mxu0 0.0
    %3256 = vmatpush1.msra.mxu0 %v3216
    %3257 = vmatprep.subr.mxu0 0.0
    %3258 = vmatpush1.msra.mxu0 %v3215
    %3259 = vmatprep.subr.mxu0 0.0
    %3260 = vmatpush1.msra.mxu0 %v3214
    %3261 = vmatprep.subr.mxu0 0.0
    %3262 = vmatpush2.msra.mxu0 0.0
    %3263 = vmatprep.subr.mxu0 0.0
    %3264 = vmatpush2.msra.mxu0 0.0
    %3265 = vmatprep.subr.mxu0 0.0
    %3266 = vmatpush2.msra.mxu0 0.0
    %3267 = vmatprep.subr.mxu0 0.0
    %3268 = vmatpush2.msra.mxu0 0.0
    %3269 = vmatprep.subr.mxu0 0.0
    %3270 = vmatpush2.msra.mxu0 0.0
    %3271 = vmatprep.subr.mxu0 0.0
    %3272 = vmatpush2.msra.mxu0 0.0
    %3273 = vmatprep.subr.mxu0 0.0
    %3274 = vmatpush2.msra.mxu0 0.0
    %3275 = vmatprep.subr.mxu0 0.0
    %3276 = vmatpush2.msra.mxu0 0.0
    %3277 = vmatprep.subr.mxu0 0.0
    %3278 = vmatpush2.msra.mxu0 0.0
    %3279 = vmatprep.subr.mxu0 0.0
    %3280 = vmatpush2.msra.mxu0 0.0
    %3281 = vmatprep.subr.mxu0 0.0
    %3282 = vmatpush2.msra.mxu0 0.0
    %3283 = vmatprep.subr.mxu0 0.0
    %3284 = vmatpush2.msra.mxu0 0.0
    %3285 = vmatprep.subr.mxu0 0.0
    %3286 = vmatpush2.msra.mxu0 0.0
    %3287 = vmatprep.subr.mxu0 0.0
    %3288 = vmatpush2.msra.mxu0 0.0
    %3289 = vmatprep.subr.mxu0 0.0
    %3290 = vmatpush2.msra.mxu0 0.0
    %3291 = vmatprep.subr.mxu0 0.0
    %3292 = vmatpush2.msra.mxu0 0.0
    %3293 = vmatprep.mubr.f32.mxu0 0.0
    %3294 = vmatmul.mubr.f32.gmra.mxu0 %v3224
    %v3295 = vpop.f32.mrf.mxu0
    %v3296 = vadd.f32 %v3222, %v3295
    %v3297 = vpop.f32.mrf.mxu0
    %3298 = vmatprep.mubr.f32.mxu0 0.0
    %3299 = vmatmul.mubr.f32.gmra.mxu0 %v3227
    %v3300 = vpop.f32.mrf.mxu0
    %v3301 = vadd.f32 %v3222, %v3300
    %v3302 = vpop.f32.mrf.mxu0
    %3303 = vdwg.mxu0
    %v3304 = vld [vmem:[%s5 + $0x12] sm:$0x1]
    %v3305 = vld [vmem:[%s5 + $0x13] sm:$0x1]
    %v3306 = vsel %vm176, %v3296, 0.0
    %3307 = vadd.xlane.f32.xlu0 %v3306
    %v3308 = vpop.xlane.xlu0 %3307
    %v3309 = vsel %vm176, %v3301, 0.0
    %3310 = vadd.xlane.f32.xlu0 %v3309
    %v3311 = vpop.xlane.xlu0 %3310
    %v3312 = vmul.f32 %v3308, %v183
    %v3313 = vmul.f32 %v3311, %v183
    %v3314 = vsub.f32 %v3296, %v3312
    %v3315 = vsub.f32 %v3301, %v3313
    %v3316 = vmul.f32 %v3314, %v3314
    %v3317 = vmul.f32 %v3315, %v3315
    %v3318 = vsel %vm176, %v3316, 0.0
    %3319 = vadd.xlane.f32.xlu0 %v3318
    %v3320 = vpop.xlane.xlu0 %3319
    %v3321 = vsel %vm176, %v3317, 0.0
    %3322 = vadd.xlane.f32.xlu0 %v3321
    %v3323 = vpop.xlane.xlu0 %3322
    %v3324 = vmul.f32 %v3320, %v183
    %v3325 = vmul.f32 %v3323, %v183
    %v3326 = vadd.f32 %v3324, 1e-05
    %v3327 = vadd.f32 %v3325, 1e-05
    %v3328 = vrsqrt.pop %v3326
    %v3329 = vrsqrt.pop %v3327
    %v3330 = vmul.f32 %v3314, %v3328
    %v3331 = vmul.f32 %v3315, %v3329
    %v3332 = vlaneseq
    %v3333 = vshrl.u32 %v3332, 7
    %v3334 = vsub.s32 0, %v3333
    %v3335 = vrot.slane %v3304, %v3334
    %v3336 = vmul.f32 %v3330, %v3335
    %v3337 = vmul.f32 %v3331, %v3335
    %v3338 = vlaneseq
    %v3339 = vshrl.u32 %v3338, 7
    %v3340 = vsub.s32 0, %v3339
    %v3341 = vrot.slane %v3305, %v3340
    %v3342 = vadd.f32 %v3336, %v3341
    %v3343 = vadd.f32 %v3337, %v3341
    %v3344 = vmax.f32 %v3342, 0.0
    %v3345 = vmax.f32 %v3343, 0.0
    %s3346 = scalar_lea.vmem [#allocation6], 256
    %v3347 = vld [vmem:[%s3346] sm:$0xff]
    %v3348 = vld [vmem:[%s3346 + $0x8] sm:$0xff]
    %v3349 = vld [vmem:[%s3346 + $0x10] sm:$0xff]
    %v3350 = vld [vmem:[%s3346 + $0x18] sm:$0xff]
    %v3351 = vld [vmem:[%s5 + $0x14] sm:$0x1]
    %v3352 = vlaneseq
    %v3353 = vshrl.u32 %v3352, 7
    %v3354 = vsub.s32 0, %v3353
    %v3355 = vrot.slane %v3351, %v3354
    %v3357 = vsel %vm176, %v3344, 0
    %v3360 = vsel %vm176, %v3345, 0
    %3362 = vmatprep.subr.mxu0 0.0
    %3363 = vmatpush1.msra.mxu0 0.0
    %3364 = vmatprep.subr.mxu0 0.0
    %3365 = vmatpush1.msra.mxu0 0.0
    %3366 = vmatprep.subr.mxu0 0.0
    %3367 = vmatpush1.msra.mxu0 0.0
    %3368 = vmatprep.subr.mxu0 0.0
    %3369 = vmatpush1.msra.mxu0 0.0
    %3370 = vmatprep.subr.mxu0 0.0
    %3371 = vmatpush1.msra.mxu0 0.0
    %3372 = vmatprep.subr.mxu0 0.0
    %3373 = vmatpush1.msra.mxu0 0.0
    %3374 = vmatprep.subr.mxu0 0.0
    %3375 = vmatpush1.msra.mxu0 0.0
    %3376 = vmatprep.subr.mxu0 0.0
    %3377 = vmatpush1.msra.mxu0 0.0
    %3378 = vmatprep.subr.mxu0 0.0
    %3379 = vmatpush1.msra.mxu0 0.0
    %3380 = vmatprep.subr.mxu0 0.0
    %3381 = vmatpush1.msra.mxu0 0.0
    %3382 = vmatprep.subr.mxu0 0.0
    %3383 = vmatpush1.msra.mxu0 0.0
    %3384 = vmatprep.subr.mxu0 0.0
    %3385 = vmatpush1.msra.mxu0 0.0
    %3386 = vmatprep.subr.mxu0 0.0
    %3387 = vmatpush1.msra.mxu0 %v3350
    %3388 = vmatprep.subr.mxu0 0.0
    %3389 = vmatpush1.msra.mxu0 %v3349
    %3390 = vmatprep.subr.mxu0 0.0
    %3391 = vmatpush1.msra.mxu0 %v3348
    %3392 = vmatprep.subr.mxu0 0.0
    %3393 = vmatpush1.msra.mxu0 %v3347
    %3394 = vmatprep.subr.mxu0 0.0
    %3395 = vmatpush2.msra.mxu0 0.0
    %3396 = vmatprep.subr.mxu0 0.0
    %3397 = vmatpush2.msra.mxu0 0.0
    %3398 = vmatprep.subr.mxu0 0.0
    %3399 = vmatpush2.msra.mxu0 0.0
    %3400 = vmatprep.subr.mxu0 0.0
    %3401 = vmatpush2.msra.mxu0 0.0
    %3402 = vmatprep.subr.mxu0 0.0
    %3403 = vmatpush2.msra.mxu0 0.0
    %3404 = vmatprep.subr.mxu0 0.0
    %3405 = vmatpush2.msra.mxu0 0.0
    %3406 = vmatprep.subr.mxu0 0.0
    %3407 = vmatpush2.msra.mxu0 0.0
    %3408 = vmatprep.subr.mxu0 0.0
    %3409 = vmatpush2.msra.mxu0 0.0
    %3410 = vmatprep.subr.mxu0 0.0
    %3411 = vmatpush2.msra.mxu0 0.0
    %3412 = vmatprep.subr.mxu0 0.0
    %3413 = vmatpush2.msra.mxu0 0.0
    %3414 = vmatprep.subr.mxu0 0.0
    %3415 = vmatpush2.msra.mxu0 0.0
    %3416 = vmatprep.subr.mxu0 0.0
    %3417 = vmatpush2.msra.mxu0 0.0
    %3418 = vmatprep.subr.mxu0 0.0
    %3419 = vmatpush2.msra.mxu0 0.0
    %3420 = vmatprep.subr.mxu0 0.0
    %3421 = vmatpush2.msra.mxu0 0.0
    %3422 = vmatprep.subr.mxu0 0.0
    %3423 = vmatpush2.msra.mxu0 0.0
    %3424 = vmatprep.subr.mxu0 0.0
    %3425 = vmatpush2.msra.mxu0 0.0
    %3426 = vmatprep.mubr.f32.mxu0 0.0
    %3427 = vmatmul.mubr.f32.gmra.mxu0 %v3357
    %v3428 = vpop.f32.mrf.mxu0
    %v3429 = vadd.f32 %v3355, %v3428
    %v3430 = vpop.f32.mrf.mxu0
    %3431 = vmatprep.mubr.f32.mxu0 0.0
    %3432 = vmatmul.mubr.f32.gmra.mxu0 %v3360
    %v3433 = vpop.f32.mrf.mxu0
    %v3434 = vadd.f32 %v3355, %v3433
    %v3435 = vpop.f32.mrf.mxu0
    %3436 = vdwg.mxu0
    %v3437 = vld [vmem:[%s5 + $0x15] sm:$0x1]
    %v3438 = vld [vmem:[%s5 + $0x16] sm:$0x1]
    %v3439 = vsel %vm176, %v3429, 0.0
    %3440 = vadd.xlane.f32.xlu0 %v3439
    %v3441 = vpop.xlane.xlu0 %3440
    %v3442 = vsel %vm176, %v3434, 0.0
    %3443 = vadd.xlane.f32.xlu0 %v3442
    %v3444 = vpop.xlane.xlu0 %3443
    %v3445 = vmul.f32 %v3441, %v183
    %v3446 = vmul.f32 %v3444, %v183
    %v3447 = vsub.f32 %v3429, %v3445
    %v3448 = vsub.f32 %v3434, %v3446
    %v3449 = vmul.f32 %v3447, %v3447
    %v3450 = vmul.f32 %v3448, %v3448
    %v3451 = vsel %vm176, %v3449, 0.0
    %3452 = vadd.xlane.f32.xlu0 %v3451
    %v3453 = vpop.xlane.xlu0 %3452
    %v3454 = vsel %vm176, %v3450, 0.0
    %3455 = vadd.xlane.f32.xlu0 %v3454
    %v3456 = vpop.xlane.xlu0 %3455
    %v3457 = vmul.f32 %v3453, %v183
    %v3458 = vmul.f32 %v3456, %v183
    %v3459 = vadd.f32 %v3457, 1e-05
    %v3460 = vadd.f32 %v3458, 1e-05
    %v3461 = vrsqrt.pop %v3459
    %v3462 = vrsqrt.pop %v3460
    %v3463 = vmul.f32 %v3447, %v3461
    %v3464 = vmul.f32 %v3448, %v3462
    %v3465 = vlaneseq
    %v3466 = vshrl.u32 %v3465, 7
    %v3467 = vsub.s32 0, %v3466
    %v3468 = vrot.slane %v3437, %v3467
    %v3469 = vmul.f32 %v3463, %v3468
    %v3470 = vmul.f32 %v3464, %v3468
    %v3471 = vlaneseq
    %v3472 = vshrl.u32 %v3471, 7
    %v3473 = vsub.s32 0, %v3472
    %v3474 = vrot.slane %v3438, %v3473
    %v3475 = vadd.f32 %v3469, %v3474
    %v3476 = vadd.f32 %v3470, %v3474
    %v3477 = vmax.f32 %v3475, 0.0
    %v3478 = vmax.f32 %v3476, 0.0
    %v3479 = vld [vmem:[%s6] sm:$0xff]
    %v3480 = vld [vmem:[%s6 + $0x8] sm:$0xff]
    %v3481 = vld [vmem:[%s6 + $0x10] sm:$0xff]
    %v3482 = vld [vmem:[%s6 + $0x18] sm:$0xff]
    %v3483 = vld [vmem:[#allocation7] sm:$0x1]
    %v3485 = vlaneseq
    %v3486 = vshrl.u32 %v3485, 7
    %v3487 = vsub.s32 0, %v3486
    %v3488 = vrot.slane %v3483, %v3487
    %v3491 = vsel %vm176, %v3477, 0
    %v3494 = vsel %vm176, %v3478, 0
    %3496 = vmatprep.subr.mxu0 0.0
    %3497 = vmatpush1.msra.mxu0 0.0
    %3498 = vmatprep.subr.mxu0 0.0
    %3499 = vmatpush1.msra.mxu0 0.0
    %3500 = vmatprep.subr.mxu0 0.0
    %3501 = vmatpush1.msra.mxu0 0.0
    %3502 = vmatprep.subr.mxu0 0.0
    %3503 = vmatpush1.msra.mxu0 0.0
    %3504 = vmatprep.subr.mxu0 0.0
    %3505 = vmatpush1.msra.mxu0 0.0
    %3506 = vmatprep.subr.mxu0 0.0
    %3507 = vmatpush1.msra.mxu0 0.0
    %3508 = vmatprep.subr.mxu0 0.0
    %3509 = vmatpush1.msra.mxu0 0.0
    %3510 = vmatprep.subr.mxu0 0.0
    %3511 = vmatpush1.msra.mxu0 0.0
    %3512 = vmatprep.subr.mxu0 0.0
    %3513 = vmatpush1.msra.mxu0 0.0
    %3514 = vmatprep.subr.mxu0 0.0
    %3515 = vmatpush1.msra.mxu0 0.0
    %3516 = vmatprep.subr.mxu0 0.0
    %3517 = vmatpush1.msra.mxu0 0.0
    %3518 = vmatprep.subr.mxu0 0.0
    %3519 = vmatpush1.msra.mxu0 0.0
    %3520 = vmatprep.subr.mxu0 0.0
    %3521 = vmatpush1.msra.mxu0 %v3482
    %3522 = vmatprep.subr.mxu0 0.0
    %3523 = vmatpush1.msra.mxu0 %v3481
    %3524 = vmatprep.subr.mxu0 0.0
    %3525 = vmatpush1.msra.mxu0 %v3480
    %3526 = vmatprep.subr.mxu0 0.0
    %3527 = vmatpush1.msra.mxu0 %v3479
    %3528 = vmatprep.subr.mxu0 0.0
    %3529 = vmatpush2.msra.mxu0 0.0
    %3530 = vmatprep.subr.mxu0 0.0
    %3531 = vmatpush2.msra.mxu0 0.0
    %3532 = vmatprep.subr.mxu0 0.0
    %3533 = vmatpush2.msra.mxu0 0.0
    %3534 = vmatprep.subr.mxu0 0.0
    %3535 = vmatpush2.msra.mxu0 0.0
    %3536 = vmatprep.subr.mxu0 0.0
    %3537 = vmatpush2.msra.mxu0 0.0
    %3538 = vmatprep.subr.mxu0 0.0
    %3539 = vmatpush2.msra.mxu0 0.0
    %3540 = vmatprep.subr.mxu0 0.0
    %3541 = vmatpush2.msra.mxu0 0.0
    %3542 = vmatprep.subr.mxu0 0.0
    %3543 = vmatpush2.msra.mxu0 0.0
    %3544 = vmatprep.subr.mxu0 0.0
    %3545 = vmatpush2.msra.mxu0 0.0
    %3546 = vmatprep.subr.mxu0 0.0
    %3547 = vmatpush2.msra.mxu0 0.0
    %3548 = vmatprep.subr.mxu0 0.0
    %3549 = vmatpush2.msra.mxu0 0.0
    %3550 = vmatprep.subr.mxu0 0.0
    %3551 = vmatpush2.msra.mxu0 0.0
    %3552 = vmatprep.subr.mxu0 0.0
    %3553 = vmatpush2.msra.mxu0 0.0
    %3554 = vmatprep.subr.mxu0 0.0
    %3555 = vmatpush2.msra.mxu0 0.0
    %3556 = vmatprep.subr.mxu0 0.0
    %3557 = vmatpush2.msra.mxu0 0.0
    %3558 = vmatprep.subr.mxu0 0.0
    %3559 = vmatpush2.msra.mxu0 0.0
    %3560 = vmatprep.mubr.f32.mxu0 0.0
    %3561 = vmatmul.mubr.f32.gmra.mxu0 %v3491
    %v3562 = vpop.f32.mrf.mxu0
    %v3563 = vadd.f32 %v3488, %v3562
    %v3564 = vpop.f32.mrf.mxu0
    %3565 = vmatprep.mubr.f32.mxu0 0.0
    %3566 = vmatmul.mubr.f32.gmra.mxu0 %v3494
    %v3567 = vpop.f32.mrf.mxu0
    %v3568 = vadd.f32 %v3488, %v3567
    %v3569 = vpop.f32.mrf.mxu0
    %3570 = vdwg.mxu0
    %3571 = vst [vmem:[%s8] sm:$0xff] %v3563
    %3572 = vst [vmem:[%s8 + $0x8] sm:$0xff] %v3568
    // Predicated region
    $region50: #{forward.1} parent=1 // pred_check
      _
    $region51: #{forward.1} parent=1 // pred_check_branch
      %3574 = sbr.rel (0) target = $region53
    $region52: #{forward.1} parent=1 // pred_region
      _
    $region53: #{forward.1} parent=1 // pred_fallthru
      _
    // Predicated region
    $region54: #{forward.1} parent=1 // pred_check
      _
    $region55: #{forward.1} parent=1 // pred_check_branch
      %3576 = sbr.rel (0) target = $region57
    $region56: #{forward.1} parent=1 // pred_region
      _
    $region57: #{forward.1} parent=1 // pred_fallthru
      _
    %3577 = vsyncpa [#allocation3], 1
    %3578 = vsyncpa [#allocation5], 1
    %3579 = vsyncpa [#allocation8], 1

</llo_original>
